<compile_context>
chip_gen: v6e
topology: v6e:2x2x1
jax: 0.10.0
libtpu: 0.0.40
codegen_flags: <defaults>
</compile_context>

<pallas_src>
import functools

import jax
import jax.numpy as jnp
from jax.experimental import pallas as pl
from jax.experimental.pallas import tpu as pltpu


def _relu_conv1x3_kernel(x_ref, w_ref, s_ref, o_ref, xb3_ref):
    # x_ref:   (1, Cin, P)  f32   NCHW-native activation tile (resident)
    # w_ref:   (CB, 3*Cin)  bf16  fused [left | center | right] tap weights
    # s_ref:   (2, P, P)    bf16  constant 0/1 column-shift matrices
    # o_ref:   (1, CB, P)   f32
    # xb3_ref: (3*Cin, P)   bf16  VMEM scratch: the K = 3*Cin matmul operand
    cin = x_ref.shape[1]
    f32 = jnp.float32

    xr = jnp.maximum(x_ref[0], 0.0)          # fused ReLU, f32 on the VPU
    xb = xr.astype(xb3_ref.dtype)            # bf16 feeds the MXU only

    # Column shift by +/-1 with the conv padding and H-row-edge zeros baked into
    # constant 0/1 matrices.  bf16 x {0,1} with f32 accumulation is exact, so
    # the round-trip back to bf16 is lossless.
    xb_l = jnp.dot(xb, s_ref[0], preferred_element_type=f32).astype(xb.dtype)
    xb_r = jnp.dot(xb, s_ref[1], preferred_element_type=f32).astype(xb.dtype)

    # Assemble the fused K = 3*Cin operand (contraction-aligned: 1152 = 9*128).
    xb3_ref[0:cin, :] = xb_l
    xb3_ref[cin:2 * cin, :] = xb
    xb3_ref[2 * cin:3 * cin, :] = xb_r

    # Single bf16 MXU matmul over all three taps, f32 accumulation.
    o_ref[0] = jnp.dot(w_ref[...], xb3_ref[...],
                       preferred_element_type=f32).astype(o_ref.dtype)


def prepare_conv1x3_params(w_oihw, H, W, dtype=jnp.bfloat16):
    """One-time parameter preprocessing (hoisted out of the per-call path).

    Returns:
      w_fused:    (Cout, 3*Cin) dtype, tap t in columns [t*Cin:(t+1)*Cin]
      shift_mats: (2, P, P)     dtype, [left, right] 0/1 column-shift matrices
    """
    Cout, Cin, KH, KW = w_oihw.shape
    assert (KH, KW) == (1, 3)
    # (Cout, Cin, 3) -> (Cout, 3, Cin) -> (Cout, 3*Cin)
    w_fused = jnp.transpose(w_oihw[:, :, 0, :], (0, 2, 1)) \
                 .reshape(Cout, 3 * Cin).astype(dtype)

    P = H * W
    p = jnp.arange(P, dtype=jnp.int32)
    col = p % W
    # s_left[q, p]  = 1  iff q == p-1 and p is not the first column of its row
    # s_right[q, p] = 1  iff q == p+1 and p is not the last  column of its row
    s_left = ((p[:, None] == p[None, :] - 1) &
              (col[None, :] != 0)).astype(dtype)
    s_right = ((p[:, None] == p[None, :] + 1) &
               (col[None, :] != W - 1)).astype(dtype)
    shift_mats = jnp.stack([s_left, s_right], axis=0)        # (2, P, P)
    return w_fused, shift_mats


@functools.partial(jax.jit, static_argnames=("cout_block",))
def relu_conv2d_1x3(x_nchw, w_fused, shift_mats, *, cout_block=None):
    """relu(x) -> Conv2d(Cin, Cout, (1,3), stride 1, pad (0,1), bias=False).

    x_nchw: (N, Cin, H, W) f32; w_fused/shift_mats from prepare_conv1x3_params.
    Returns (N, Cout, H, W) f32 (bf16 MXU inputs, f32 accumulation).
    """
    N, Cin, H, W = x_nchw.shape
    Cout = w_fused.shape[0]
    P = H * W
    CB = Cout if cout_block is None else cout_block          # default: 1 step
    assert Cout % CB == 0 and w_fused.shape[1] == 3 * Cin

    x_flat = x_nchw.reshape(N, Cin, P)                       # free reshape

    out = pl.pallas_call(
        _relu_conv1x3_kernel,
        out_shape=jax.ShapeDtypeStruct((N, Cout, P), x_nchw.dtype),
        grid=(N, Cout // CB),
        in_specs=[
            pl.BlockSpec((1, Cin, P), lambda n, j: (n, 0, 0)),    # x: resident
            pl.BlockSpec((CB, 3 * Cin), lambda n, j: (j, 0)),     # fused weights
            pl.BlockSpec((2, P, P), lambda n, j: (0, 0, 0)),      # shift mats: resident
        ],
        out_specs=pl.BlockSpec((1, CB, P), lambda n, j: (n, j, 0)),
        scratch_shapes=[pltpu.VMEM((3 * Cin, P), jnp.bfloat16)],
        compiler_params=pltpu.CompilerParams(
            dimension_semantics=("parallel", "parallel")),
    )(x_flat, w_fused, shift_mats)

    return out.reshape(N, Cout, H, W)                        # free reshape


if __name__ == "__main__":
    key = jax.random.PRNGKey(0)
    kx, kw = jax.random.split(key)

    # Shapes implied by the module: input (1, 384, 5, 5), weight (384, 384, 1, 3).
    N, Cin, H, W = 1, 384, 5, 5
    Cout = 384
    x = jax.random.normal(kx, (N, Cin, H, W), dtype=jnp.float32)
    fan_in = Cin * 1 * 3
    bound = (1.0 / fan_in) ** 0.5
    w = jax.random.uniform(kw, (Cout, Cin, 1, 3), dtype=jnp.float32,
                           minval=-bound, maxval=bound)

    # One-time weight prep (outside the per-call jit path).
    w_fused, shift_mats = prepare_conv1x3_params(w, H, W)
    w_fused = jax.block_until_ready(w_fused)
    shift_mats = jax.block_until_ready(shift_mats)

    y = jax.block_until_ready(relu_conv2d_1x3(x, w_fused, shift_mats))
    assert y.shape == (N, Cout, H, W)

    def conv(a, b):
        return jax.lax.conv_general_dilated(
            a, b, window_strides=(1, 1), padding=((0, 0), (1, 1)),
            dimension_numbers=("NCHW", "OIHW", "NCHW"))

    relu_x = jnp.maximum(x, 0.0)

    # Tight check: f32 conv on bf16-quantized operands — matches the kernel's
    # MXU math (bf16 inputs, f32 accumulation) up to accumulation order.
    y_ref_q = conv(relu_x.astype(jnp.bfloat16).astype(jnp.float32),
                   w.astype(jnp.bfloat16).astype(jnp.float32))
    assert jnp.allclose(y, y_ref_q, atol=1e-3, rtol=1e-3)

    # Loose check: full-f32 semantics of the original PyTorch module
    # (tolerance widened for the documented bf16 MXU-input contract).
    y_ref = conv(relu_x, w)
    assert jnp.allclose(y, y_ref, atol=3e-2, rtol=3e-2)

    print("KERNEL_OK")
</pallas_src>

<mosaic_0001>
module attributes {stable_mosaic.version = 11 : i64} {
  func.func @_relu_conv1x3_kernel(%arg0: i32, %arg1: i32, %arg2: memref<1x384x25xf32, #tpu.memory_space<vmem>>, %arg3: memref<384x1152xbf16, #tpu.memory_space<vmem>>, %arg4: memref<2x25x25xbf16, #tpu.memory_space<vmem>>, %arg5: memref<1x384x25xf32, #tpu.memory_space<vmem>>, %arg6: memref<1152x25xbf16, #tpu.memory_space<vmem>>) attributes {dimension_semantics = [#tpu.dimension_semantics<parallel>, #tpu.dimension_semantics<parallel>], iteration_bounds = array<i64: 1, 1>, scalar_prefetch = 0 : i64, scratch_operands = 1 : i64, tpu.core_type = #tpu.core_type<tc>, window_params = [{transform_indices = @transform_0, window_bounds = array<i64: 1, 384, 25>}, {transform_indices = @transform_1, window_bounds = array<i64: 384, 1152>}, {pipeline_mode = #tpu.pipeline_mode<synchronous>, transform_indices = @transform_2, window_bounds = array<i64: 2, 25, 25>}, {transform_indices = @transform_3, window_bounds = array<i64: 1, 384, 25>}]} {
    %c0 = arith.constant 0 : index
    %c0_0 = arith.constant 0 : index
    %c0_1 = arith.constant 0 : index
    %0 = vector.load %arg2[%c0, %c0_0, %c0_1] : memref<1x384x25xf32, #tpu.memory_space<vmem>>, vector<1x384x25xf32>
    %1 = vector.shape_cast %0 : vector<1x384x25xf32> to vector<384x25xf32>
    %cst = arith.constant 0.000000e+00 : f32
    %2 = vector.broadcast %cst : f32 to vector<384x25xf32>
    %3 = arith.maximumf %1, %2 : vector<384x25xf32>
    %4 = arith.truncf %3 : vector<384x25xf32> to vector<384x25xbf16>
    %c0_2 = arith.constant 0 : index
    %c0_3 = arith.constant 0 : index
    %c0_4 = arith.constant 0 : index
    %5 = vector.load %arg4[%c0_2, %c0_3, %c0_4] : memref<2x25x25xbf16, #tpu.memory_space<vmem>>, vector<1x25x25xbf16>
    %6 = vector.shape_cast %5 : vector<1x25x25xbf16> to vector<25x25xbf16>
    %cst_5 = arith.constant dense<0.000000e+00> : vector<384x25xf32>
    %7 = tpu.matmul %4, %6, %cst_5 {dimension_numbers = #tpu.dot_dimension_numbers<[1], [0], [0], [1], [0, 0, 1, 1], [], []>} : vector<384x25xbf16>, vector<25x25xbf16>, vector<384x25xf32> -> vector<384x25xf32>
    %8 = arith.truncf %7 : vector<384x25xf32> to vector<384x25xbf16>
    %c1 = arith.constant 1 : index
    %c0_6 = arith.constant 0 : index
    %c0_7 = arith.constant 0 : index
    %9 = vector.load %arg4[%c1, %c0_6, %c0_7] : memref<2x25x25xbf16, #tpu.memory_space<vmem>>, vector<1x25x25xbf16>
    %10 = vector.shape_cast %9 : vector<1x25x25xbf16> to vector<25x25xbf16>
    %cst_8 = arith.constant dense<0.000000e+00> : vector<384x25xf32>
    %11 = tpu.matmul %4, %10, %cst_8 {dimension_numbers = #tpu.dot_dimension_numbers<[1], [0], [0], [1], [0, 0, 1, 1], [], []>} : vector<384x25xbf16>, vector<25x25xbf16>, vector<384x25xf32> -> vector<384x25xf32>
    %12 = arith.truncf %11 : vector<384x25xf32> to vector<384x25xbf16>
    %c0_9 = arith.constant 0 : index
    %c0_10 = arith.constant 0 : index
    %13 = vector.load %arg6[%c0_9, %c0_10] : memref<1152x25xbf16, #tpu.memory_space<vmem>>, vector<384x25xbf16>
    tpu.vector_store %arg6[%c0_9, %c0_10], %8 {strides = array<i32>} : memref<1152x25xbf16, #tpu.memory_space<vmem>>, vector<384x25xbf16>,
    %c384 = arith.constant 384 : index
    %c0_11 = arith.constant 0 : index
    %14 = vector.load %arg6[%c384, %c0_11] : memref<1152x25xbf16, #tpu.memory_space<vmem>>, vector<384x25xbf16>
    tpu.vector_store %arg6[%c384, %c0_11], %4 {strides = array<i32>} : memref<1152x25xbf16, #tpu.memory_space<vmem>>, vector<384x25xbf16>,
    %c768 = arith.constant 768 : index
    %c0_12 = arith.constant 0 : index
    %15 = vector.load %arg6[%c768, %c0_12] : memref<1152x25xbf16, #tpu.memory_space<vmem>>, vector<384x25xbf16>
    tpu.vector_store %arg6[%c768, %c0_12], %12 {strides = array<i32>} : memref<1152x25xbf16, #tpu.memory_space<vmem>>, vector<384x25xbf16>,
    %c0_13 = arith.constant 0 : index
    %c0_14 = arith.constant 0 : index
    %16 = vector.load %arg3[%c0_13, %c0_14] : memref<384x1152xbf16, #tpu.memory_space<vmem>>, vector<384x1152xbf16>
    %c0_15 = arith.constant 0 : index
    %c0_16 = arith.constant 0 : index
    %17 = vector.load %arg6[%c0_15, %c0_16] : memref<1152x25xbf16, #tpu.memory_space<vmem>>, vector<1152x25xbf16>
    %cst_17 = arith.constant dense<0.000000e+00> : vector<384x25xf32>
    %18 = tpu.matmul %16, %17, %cst_17 {dimension_numbers = #tpu.dot_dimension_numbers<[1], [0], [0], [1], [0, 0, 1, 1], [], []>} : vector<384x1152xbf16>, vector<1152x25xbf16>, vector<384x25xf32> -> vector<384x25xf32>
    %c0_18 = arith.constant 0 : index
    %c0_19 = arith.constant 0 : index
    %c0_20 = arith.constant 0 : index
    %19 = vector.load %arg5[%c0_18, %c0_19, %c0_20] : memref<1x384x25xf32, #tpu.memory_space<vmem>>, vector<1x384x25xf32>
    %20 = vector.shape_cast %19 : vector<1x384x25xf32> to vector<384x25xf32>
    %21 = vector.shape_cast %18 : vector<384x25xf32> to vector<1x384x25xf32>
    tpu.vector_store %arg5[%c0_18, %c0_19, %c0_20], %21 {strides = array<i32>} : memref<1x384x25xf32, #tpu.memory_space<vmem>>, vector<1x384x25xf32>,
    return
  }
  func.func @transform_0(%arg0: i32, %arg1: i32) -> (i32, i32, i32) {
    %c0_i32 = arith.constant 0 : i32
    %c0_i32_0 = arith.constant 0 : i32
    %c0_i32_1 = arith.constant 0 : i32
    return %arg0, %c0_i32, %c0_i32_0 : i32, i32, i32
  }
  func.func @transform_1(%arg0: i32, %arg1: i32) -> (i32, i32) {
    %c0_i32 = arith.constant 0 : i32
    %c0_i32_0 = arith.constant 0 : i32
    return %arg1, %c0_i32 : i32, i32
  }
  func.func @transform_2(%arg0: i32, %arg1: i32) -> (i32, i32, i32) {
    %c0_i32 = arith.constant 0 : i32
    %c0_i32_0 = arith.constant 0 : i32
    %c0_i32_1 = arith.constant 0 : i32
    %c0_i32_2 = arith.constant 0 : i32
    return %c0_i32, %c0_i32_0, %c0_i32_1 : i32, i32, i32
  }
  func.func @transform_3(%arg0: i32, %arg1: i32) -> (i32, i32, i32) {
    %c0_i32 = arith.constant 0 : i32
    %c0_i32_0 = arith.constant 0 : i32
    return %arg0, %arg1, %c0_i32 : i32, i32, i32
  }
}

</mosaic_0001>

<llo_original>
// kernel: relu_conv2d_1x3.1
$region0: #{relu_conv2d_1x3.1}
  #allocation0 [shape = 'u32[]', space=smem, size = 0x4, offset = 0x4, fixed_abs, tag = 'smem constant byte address 0x4 - core index']
  #allocation1 [shape = 'u32[144,128]{1,0:T(1,128)}', space=vmem, size = 0x12000, scoped, tag = 'internal scratch']
  #allocation2 [shape = 'bf16[1152,25]{1,0:T(8,128)(2,1)}', space=vmem, size = 0x48000, scoped, tag = 'scratch operand']
  %s0 = inlined_call_operand.vmem [shape: f32[1,384,25], index: 0, kind: input, shape index: {}]
  %s1 = inlined_call_operand.hbm [shape: bf16[384,1152], index: 1, kind: input, shape index: {}]
  %s2 = inlined_call_operand.vmem [shape: bf16[2,25,25], index: 2, kind: input, shape index: {}]
  %s3 = inlined_call_operand.vmem [shape: f32[1,384,25], index: 3, kind: output, shape index: {}]
  %s4 = sld [smem:[#allocation0]]
  $region26: #{relu_conv2d_1x3.1} parent=0
    _
  %s6 = ssub.s32 1, %s4
  %s7 = scalar_select 0, %s6, %s4
  $region1: #{relu_conv2d_1x3.1} parent=0
    #allocation3 [shape = 'u8[884736]{0}', space=vmem, size = 0xd8000, scoped, tag = 'input window, operand 1, single buffered']
    #allocation4 [shape = 's32[1]{0}', space=sflag, size = 0x4, scoped, tag = 'scoped memory for relu_conv2d_1x3.1']
    %8 = vsyncpa [#allocation4], 0
    // Predicated region
    $region2: #{relu_conv2d_1x3.1} parent=1 // pred_check
      _
    $region3: #{relu_conv2d_1x3.1} parent=1 // pred_check_branch
      %10 = sbr.rel (0) target = $region5
    $region4: #{relu_conv2d_1x3.1} parent=1 // pred_region
      _
    $region5: #{relu_conv2d_1x3.1} parent=1 // pred_fallthru
      _
    // Predicated region
    $region6: #{relu_conv2d_1x3.1} parent=1 // pred_check
      _
    $region7: #{relu_conv2d_1x3.1} parent=1 // pred_check_branch
      %12 = sbr.rel (0) target = $region9
    $region8: #{relu_conv2d_1x3.1} parent=1 // pred_region
      %s14 = ssub.s32 27648, 27648
      %15 = vsyncadd [#allocation4], %s14
      %s16 = sshll.u32 [#allocation3], 4
      %s17 = int_to_ptr.vmem [resolvable:$true] %s16
      %22 = dma.hbm_to_vmem [thread:$0]  %s1, 27648, %s17, [#allocation4], 576, 576, 36
    $region9: #{relu_conv2d_1x3.1} parent=1 // pred_fallthru
      _
    // Predicated region
    $region10: #{relu_conv2d_1x3.1} parent=1 // pred_check
      _
    $region11: #{relu_conv2d_1x3.1} parent=1 // pred_check_branch
      %24 = sbr.rel (0) target = $region13
    $region12: #{relu_conv2d_1x3.1} parent=1 // pred_region
      _
    $region13: #{relu_conv2d_1x3.1} parent=1 // pred_fallthru
      _
    // Predicated region
    $region14: #{relu_conv2d_1x3.1} parent=1 // pred_check
      _
    $region15: #{relu_conv2d_1x3.1} parent=1 // pred_check_branch
      %26 = sbr.rel (0) target = $region17
    $region16: #{relu_conv2d_1x3.1} parent=1 // pred_region
      %27 = dma.done [#allocation4], 27648
    $region17: #{relu_conv2d_1x3.1} parent=1 // pred_fallthru
      _
    %v29 = vld [vmem:[%s0] sm:$0xff]
    %v30 = vld [vmem:[%s0 + $0x8] sm:$0xff]
    %v31 = vld [vmem:[%s0 + $0x10] sm:$0xff]
    %v32 = vld [vmem:[%s0 + $0x18] sm:$0xff]
    %v33 = vld [vmem:[%s0 + $0x20] sm:$0xff]
    %v34 = vld [vmem:[%s0 + $0x28] sm:$0xff]
    %v35 = vld [vmem:[%s0 + $0x30] sm:$0xff]
    %v36 = vld [vmem:[%s0 + $0x38] sm:$0xff]
    %v37 = vld [vmem:[%s0 + $0x40] sm:$0xff]
    %v38 = vld [vmem:[%s0 + $0x48] sm:$0xff]
    %v39 = vld [vmem:[%s0 + $0x50] sm:$0xff]
    %v40 = vld [vmem:[%s0 + $0x58] sm:$0xff]
    %v41 = vld [vmem:[%s0 + $0x60] sm:$0xff]
    %v42 = vld [vmem:[%s0 + $0x68] sm:$0xff]
    %v43 = vld [vmem:[%s0 + $0x70] sm:$0xff]
    %v44 = vld [vmem:[%s0 + $0x78] sm:$0xff]
    %v45 = vld [vmem:[%s0 + $0x80] sm:$0xff]
    %v46 = vld [vmem:[%s0 + $0x88] sm:$0xff]
    %v47 = vld [vmem:[%s0 + $0x90] sm:$0xff]
    %v48 = vld [vmem:[%s0 + $0x98] sm:$0xff]
    %v49 = vld [vmem:[%s0 + $0xa0] sm:$0xff]
    %v50 = vld [vmem:[%s0 + $0xa8] sm:$0xff]
    %v51 = vld [vmem:[%s0 + $0xb0] sm:$0xff]
    %v52 = vld [vmem:[%s0 + $0xb8] sm:$0xff]
    %v53 = vld [vmem:[%s0 + $0xc0] sm:$0xff]
    %v54 = vld [vmem:[%s0 + $0xc8] sm:$0xff]
    %v55 = vld [vmem:[%s0 + $0xd0] sm:$0xff]
    %v56 = vld [vmem:[%s0 + $0xd8] sm:$0xff]
    %v57 = vld [vmem:[%s0 + $0xe0] sm:$0xff]
    %v58 = vld [vmem:[%s0 + $0xe8] sm:$0xff]
    %v59 = vld [vmem:[%s0 + $0xf0] sm:$0xff]
    %v60 = vld [vmem:[%s0 + $0xf8] sm:$0xff]
    %v61 = vld [vmem:[%s0 + $0x100] sm:$0xff]
    %v62 = vld [vmem:[%s0 + $0x108] sm:$0xff]
    %v63 = vld [vmem:[%s0 + $0x110] sm:$0xff]
    %v64 = vld [vmem:[%s0 + $0x118] sm:$0xff]
    %v65 = vld [vmem:[%s0 + $0x120] sm:$0xff]
    %v66 = vld [vmem:[%s0 + $0x128] sm:$0xff]
    %v67 = vld [vmem:[%s0 + $0x130] sm:$0xff]
    %v68 = vld [vmem:[%s0 + $0x138] sm:$0xff]
    %v69 = vld [vmem:[%s0 + $0x140] sm:$0xff]
    %v70 = vld [vmem:[%s0 + $0x148] sm:$0xff]
    %v71 = vld [vmem:[%s0 + $0x150] sm:$0xff]
    %v72 = vld [vmem:[%s0 + $0x158] sm:$0xff]
    %v73 = vld [vmem:[%s0 + $0x160] sm:$0xff]
    %v74 = vld [vmem:[%s0 + $0x168] sm:$0xff]
    %v75 = vld [vmem:[%s0 + $0x170] sm:$0xff]
    %v76 = vld [vmem:[%s0 + $0x178] sm:$0xff]
    %v77 = vmax.f32 %v29, 0.0
    %v78 = vmax.f32 %v30, 0.0
    %v79 = vmax.f32 %v31, 0.0
    %v80 = vmax.f32 %v32, 0.0
    %v81 = vmax.f32 %v33, 0.0
    %v82 = vmax.f32 %v34, 0.0
    %v83 = vmax.f32 %v35, 0.0
    %v84 = vmax.f32 %v36, 0.0
    %v85 = vmax.f32 %v37, 0.0
    %v86 = vmax.f32 %v38, 0.0
    %v87 = vmax.f32 %v39, 0.0
    %v88 = vmax.f32 %v40, 0.0
    %v89 = vmax.f32 %v41, 0.0
    %v90 = vmax.f32 %v42, 0.0
    %v91 = vmax.f32 %v43, 0.0
    %v92 = vmax.f32 %v44, 0.0
    %v93 = vmax.f32 %v45, 0.0
    %v94 = vmax.f32 %v46, 0.0
    %v95 = vmax.f32 %v47, 0.0
    %v96 = vmax.f32 %v48, 0.0
    %v97 = vmax.f32 %v49, 0.0
    %v98 = vmax.f32 %v50, 0.0
    %v99 = vmax.f32 %v51, 0.0
    %v100 = vmax.f32 %v52, 0.0
    %v101 = vmax.f32 %v53, 0.0
    %v102 = vmax.f32 %v54, 0.0
    %v103 = vmax.f32 %v55, 0.0
    %v104 = vmax.f32 %v56, 0.0
    %v105 = vmax.f32 %v57, 0.0
    %v106 = vmax.f32 %v58, 0.0
    %v107 = vmax.f32 %v59, 0.0
    %v108 = vmax.f32 %v60, 0.0
    %v109 = vmax.f32 %v61, 0.0
    %v110 = vmax.f32 %v62, 0.0
    %v111 = vmax.f32 %v63, 0.0
    %v112 = vmax.f32 %v64, 0.0
    %v113 = vmax.f32 %v65, 0.0
    %v114 = vmax.f32 %v66, 0.0
    %v115 = vmax.f32 %v67, 0.0
    %v116 = vmax.f32 %v68, 0.0
    %v117 = vmax.f32 %v69, 0.0
    %v118 = vmax.f32 %v70, 0.0
    %v119 = vmax.f32 %v71, 0.0
    %v120 = vmax.f32 %v72, 0.0
    %v121 = vmax.f32 %v73, 0.0
    %v122 = vmax.f32 %v74, 0.0
    %v123 = vmax.f32 %v75, 0.0
    %v124 = vmax.f32 %v76, 0.0
    %v125 = vpack.c.bf16 %v78, %v77
    %v126 = vpack.c.bf16 %v80, %v79
    %v127 = vpack.c.bf16 %v82, %v81
    %v128 = vpack.c.bf16 %v84, %v83
    %v129 = vpack.c.bf16 %v86, %v85
    %v130 = vpack.c.bf16 %v88, %v87
    %v131 = vpack.c.bf16 %v90, %v89
    %v132 = vpack.c.bf16 %v92, %v91
    %v133 = vpack.c.bf16 %v94, %v93
    %v134 = vpack.c.bf16 %v96, %v95
    %v135 = vpack.c.bf16 %v98, %v97
    %v136 = vpack.c.bf16 %v100, %v99
    %v137 = vpack.c.bf16 %v102, %v101
    %v138 = vpack.c.bf16 %v104, %v103
    %v139 = vpack.c.bf16 %v106, %v105
    %v140 = vpack.c.bf16 %v108, %v107
    %v141 = vpack.c.bf16 %v110, %v109
    %v142 = vpack.c.bf16 %v112, %v111
    %v143 = vpack.c.bf16 %v114, %v113
    %v144 = vpack.c.bf16 %v116, %v115
    %v145 = vpack.c.bf16 %v118, %v117
    %v146 = vpack.c.bf16 %v120, %v119
    %v147 = vpack.c.bf16 %v122, %v121
    %v148 = vpack.c.bf16 %v124, %v123
    %v149 = vld [vmem:[%s2] sm:$0xf]
    %v150 = vld [vmem:[%s2 + $0x4] sm:$0xf]
    %v151 = vld [vmem:[%s2 + $0x8] sm:$0xf]
    %v152 = vld [vmem:[%s2 + $0xc] sm:$0x1]
    %v157 = vunpack.c.l.b16 %v149
    %v158 = vunpack.c.l.b16 %v150
    %v159 = vunpack.c.l.b16 %v151
    %v160 = vunpack.c.l.b16 %v152
    %v161 = vpack.c.b16 %v158, %v157
    %v162 = vpack.c.b16 %v160, %v159
    %vm164 = vcmask 203776
    %v166 = vsel %vm164, %v125, 0
    %v169 = vsel %vm164, %v126, 0
    %v172 = vsel %vm164, %v127, 0
    %v175 = vsel %vm164, %v128, 0
    %v178 = vsel %vm164, %v129, 0
    %v181 = vsel %vm164, %v130, 0
    %v184 = vsel %vm164, %v131, 0
    %v187 = vsel %vm164, %v132, 0
    %v190 = vsel %vm164, %v133, 0
    %v193 = vsel %vm164, %v134, 0
    %v196 = vsel %vm164, %v135, 0
    %v199 = vsel %vm164, %v136, 0
    %v202 = vsel %vm164, %v137, 0
    %v205 = vsel %vm164, %v138, 0
    %v208 = vsel %vm164, %v139, 0
    %v211 = vsel %vm164, %v140, 0
    %v214 = vsel %vm164, %v141, 0
    %v217 = vsel %vm164, %v142, 0
    %v220 = vsel %vm164, %v143, 0
    %v223 = vsel %vm164, %v144, 0
    %v226 = vsel %vm164, %v145, 0
    %v229 = vsel %vm164, %v146, 0
    %v232 = vsel %vm164, %v147, 0
    %v235 = vsel %vm164, %v148, 0
    %vm237 = vcmask 1043456
    %vm238 = vcmask 1044480
    %v239 = vsel %vm237, 4294967295, 65535
    %v240 = vsel %vm238, %v239, 0
    %v242 = vand.u32 %v162, %v240
    %244 = vmatprep.subr.bf16.mxu0 0
    %245 = vmatpush1.bf16.msra.mxu0 0
    %246 = vmatprep.subr.bf16.mxu0 0
    %247 = vmatpush1.bf16.msra.mxu0 0
    %248 = vmatprep.subr.bf16.mxu0 0
    %249 = vmatpush1.bf16.msra.mxu0 0
    %250 = vmatprep.subr.bf16.mxu0 0
    %251 = vmatpush1.bf16.msra.mxu0 0
    %252 = vmatprep.subr.bf16.mxu0 0
    %253 = vmatpush1.bf16.msra.mxu0 0
    %254 = vmatprep.subr.bf16.mxu0 0
    %255 = vmatpush1.bf16.msra.mxu0 0
    %256 = vmatprep.subr.bf16.mxu0 0
    %257 = vmatpush1.bf16.msra.mxu0 %v242
    %258 = vmatprep.subr.bf16.mxu0 0
    %259 = vmatpush1.bf16.msra.mxu0 %v161
    %260 = vmatprep.subr.bf16.mxu0 0
    %261 = vmatpush2.bf16.msra.mxu0 0
    %262 = vmatprep.subr.bf16.mxu0 0
    %263 = vmatpush2.bf16.msra.mxu0 0
    %264 = vmatprep.subr.bf16.mxu0 0
    %265 = vmatpush2.bf16.msra.mxu0 0
    %266 = vmatprep.subr.bf16.mxu0 0
    %267 = vmatpush2.bf16.msra.mxu0 0
    %268 = vmatprep.subr.bf16.mxu0 0
    %269 = vmatpush2.bf16.msra.mxu0 0
    %270 = vmatprep.subr.bf16.mxu0 0
    %271 = vmatpush2.bf16.msra.mxu0 0
    %272 = vmatprep.subr.bf16.mxu0 0
    %273 = vmatpush2.bf16.msra.mxu0 0
    %274 = vmatprep.subr.bf16.mxu0 0
    %275 = vmatpush2.bf16.msra.mxu0 0
    %276 = vmatprep.mubr.bf16.mxu0 0
    %277 = vmatmul.mubr.bf16.gmra.mxu0 %v166
    %v278 = vpop.f32.mrf.mxu0
    %v279 = vadd.f32 0.0, %v278
    %v280 = vpop.f32.mrf.mxu0
    %v281 = vpop.f32.mrf.mxu0
    %v282 = vadd.f32 0.0, %v281
    %v283 = vpop.f32.mrf.mxu0
    %284 = vmatprep.mubr.bf16.mxu0 0
    %285 = vmatmul.mubr.bf16.gmra.mxu0 %v169
    %v286 = vpop.f32.mrf.mxu0
    %v287 = vadd.f32 0.0, %v286
    %v288 = vpop.f32.mrf.mxu0
    %v289 = vpop.f32.mrf.mxu0
    %v290 = vadd.f32 0.0, %v289
    %v291 = vpop.f32.mrf.mxu0
    %292 = vmatprep.mubr.bf16.mxu0 0
    %293 = vmatmul.mubr.bf16.gmra.mxu0 %v172
    %v294 = vpop.f32.mrf.mxu0
    %v295 = vadd.f32 0.0, %v294
    %v296 = vpop.f32.mrf.mxu0
    %v297 = vpop.f32.mrf.mxu0
    %v298 = vadd.f32 0.0, %v297
    %v299 = vpop.f32.mrf.mxu0
    %300 = vmatprep.mubr.bf16.mxu0 0
    %301 = vmatmul.mubr.bf16.gmra.mxu0 %v175
    %v302 = vpop.f32.mrf.mxu0
    %v303 = vadd.f32 0.0, %v302
    %v304 = vpop.f32.mrf.mxu0
    %v305 = vpop.f32.mrf.mxu0
    %v306 = vadd.f32 0.0, %v305
    %v307 = vpop.f32.mrf.mxu0
    %308 = vmatprep.mubr.bf16.mxu0 0
    %309 = vmatmul.mubr.bf16.gmra.mxu0 %v178
    %v310 = vpop.f32.mrf.mxu0
    %v311 = vadd.f32 0.0, %v310
    %v312 = vpop.f32.mrf.mxu0
    %v313 = vpop.f32.mrf.mxu0
    %v314 = vadd.f32 0.0, %v313
    %v315 = vpop.f32.mrf.mxu0
    %316 = vmatprep.mubr.bf16.mxu0 0
    %317 = vmatmul.mubr.bf16.gmra.mxu0 %v181
    %v318 = vpop.f32.mrf.mxu0
    %v319 = vadd.f32 0.0, %v318
    %v320 = vpop.f32.mrf.mxu0
    %v321 = vpop.f32.mrf.mxu0
    %v322 = vadd.f32 0.0, %v321
    %v323 = vpop.f32.mrf.mxu0
    %324 = vmatprep.mubr.bf16.mxu0 0
    %325 = vmatmul.mubr.bf16.gmra.mxu0 %v184
    %v326 = vpop.f32.mrf.mxu0
    %v327 = vadd.f32 0.0, %v326
    %v328 = vpop.f32.mrf.mxu0
    %v329 = vpop.f32.mrf.mxu0
    %v330 = vadd.f32 0.0, %v329
    %v331 = vpop.f32.mrf.mxu0
    %332 = vmatprep.mubr.bf16.mxu0 0
    %333 = vmatmul.mubr.bf16.gmra.mxu0 %v187
    %v334 = vpop.f32.mrf.mxu0
    %v335 = vadd.f32 0.0, %v334
    %v336 = vpop.f32.mrf.mxu0
    %v337 = vpop.f32.mrf.mxu0
    %v338 = vadd.f32 0.0, %v337
    %v339 = vpop.f32.mrf.mxu0
    %340 = vmatprep.mubr.bf16.mxu0 0
    %341 = vmatmul.mubr.bf16.gmra.mxu0 %v190
    %v342 = vpop.f32.mrf.mxu0
    %v343 = vadd.f32 0.0, %v342
    %v344 = vpop.f32.mrf.mxu0
    %v345 = vpop.f32.mrf.mxu0
    %v346 = vadd.f32 0.0, %v345
    %v347 = vpop.f32.mrf.mxu0
    %348 = vmatprep.mubr.bf16.mxu0 0
    %349 = vmatmul.mubr.bf16.gmra.mxu0 %v193
    %v350 = vpop.f32.mrf.mxu0
    %v351 = vadd.f32 0.0, %v350
    %v352 = vpop.f32.mrf.mxu0
    %v353 = vpop.f32.mrf.mxu0
    %v354 = vadd.f32 0.0, %v353
    %v355 = vpop.f32.mrf.mxu0
    %356 = vmatprep.mubr.bf16.mxu0 0
    %357 = vmatmul.mubr.bf16.gmra.mxu0 %v196
    %v358 = vpop.f32.mrf.mxu0
    %v359 = vadd.f32 0.0, %v358
    %v360 = vpop.f32.mrf.mxu0
    %v361 = vpop.f32.mrf.mxu0
    %v362 = vadd.f32 0.0, %v361
    %v363 = vpop.f32.mrf.mxu0
    %364 = vmatprep.mubr.bf16.mxu0 0
    %365 = vmatmul.mubr.bf16.gmra.mxu0 %v199
    %v366 = vpop.f32.mrf.mxu0
    %v367 = vadd.f32 0.0, %v366
    %v368 = vpop.f32.mrf.mxu0
    %v369 = vpop.f32.mrf.mxu0
    %v370 = vadd.f32 0.0, %v369
    %v371 = vpop.f32.mrf.mxu0
    %372 = vmatprep.mubr.bf16.mxu0 0
    %373 = vmatmul.mubr.bf16.gmra.mxu0 %v202
    %v374 = vpop.f32.mrf.mxu0
    %v375 = vadd.f32 0.0, %v374
    %v376 = vpop.f32.mrf.mxu0
    %v377 = vpop.f32.mrf.mxu0
    %v378 = vadd.f32 0.0, %v377
    %v379 = vpop.f32.mrf.mxu0
    %380 = vmatprep.mubr.bf16.mxu0 0
    %381 = vmatmul.mubr.bf16.gmra.mxu0 %v205
    %v382 = vpop.f32.mrf.mxu0
    %v383 = vadd.f32 0.0, %v382
    %v384 = vpop.f32.mrf.mxu0
    %v385 = vpop.f32.mrf.mxu0
    %v386 = vadd.f32 0.0, %v385
    %v387 = vpop.f32.mrf.mxu0
    %388 = vmatprep.mubr.bf16.mxu0 0
    %389 = vmatmul.mubr.bf16.gmra.mxu0 %v208
    %v390 = vpop.f32.mrf.mxu0
    %v391 = vadd.f32 0.0, %v390
    %v392 = vpop.f32.mrf.mxu0
    %v393 = vpop.f32.mrf.mxu0
    %v394 = vadd.f32 0.0, %v393
    %v395 = vpop.f32.mrf.mxu0
    %396 = vmatprep.mubr.bf16.mxu0 0
    %397 = vmatmul.mubr.bf16.gmra.mxu0 %v211
    %v398 = vpop.f32.mrf.mxu0
    %v399 = vadd.f32 0.0, %v398
    %v400 = vpop.f32.mrf.mxu0
    %v401 = vpop.f32.mrf.mxu0
    %v402 = vadd.f32 0.0, %v401
    %v403 = vpop.f32.mrf.mxu0
    %404 = vmatprep.mubr.bf16.mxu0 0
    %405 = vmatmul.mubr.bf16.gmra.mxu0 %v214
    %v406 = vpop.f32.mrf.mxu0
    %v407 = vadd.f32 0.0, %v406
    %v408 = vpop.f32.mrf.mxu0
    %v409 = vpop.f32.mrf.mxu0
    %v410 = vadd.f32 0.0, %v409
    %v411 = vpop.f32.mrf.mxu0
    %412 = vmatprep.mubr.bf16.mxu0 0
    %413 = vmatmul.mubr.bf16.gmra.mxu0 %v217
    %v414 = vpop.f32.mrf.mxu0
    %v415 = vadd.f32 0.0, %v414
    %v416 = vpop.f32.mrf.mxu0
    %v417 = vpop.f32.mrf.mxu0
    %v418 = vadd.f32 0.0, %v417
    %v419 = vpop.f32.mrf.mxu0
    %420 = vmatprep.mubr.bf16.mxu0 0
    %421 = vmatmul.mubr.bf16.gmra.mxu0 %v220
    %v422 = vpop.f32.mrf.mxu0
    %v423 = vadd.f32 0.0, %v422
    %v424 = vpop.f32.mrf.mxu0
    %v425 = vpop.f32.mrf.mxu0
    %v426 = vadd.f32 0.0, %v425
    %v427 = vpop.f32.mrf.mxu0
    %428 = vmatprep.mubr.bf16.mxu0 0
    %429 = vmatmul.mubr.bf16.gmra.mxu0 %v223
    %v430 = vpop.f32.mrf.mxu0
    %v431 = vadd.f32 0.0, %v430
    %v432 = vpop.f32.mrf.mxu0
    %v433 = vpop.f32.mrf.mxu0
    %v434 = vadd.f32 0.0, %v433
    %v435 = vpop.f32.mrf.mxu0
    %436 = vmatprep.mubr.bf16.mxu0 0
    %437 = vmatmul.mubr.bf16.gmra.mxu0 %v226
    %v438 = vpop.f32.mrf.mxu0
    %v439 = vadd.f32 0.0, %v438
    %v440 = vpop.f32.mrf.mxu0
    %v441 = vpop.f32.mrf.mxu0
    %v442 = vadd.f32 0.0, %v441
    %v443 = vpop.f32.mrf.mxu0
    %444 = vmatprep.mubr.bf16.mxu0 0
    %445 = vmatmul.mubr.bf16.gmra.mxu0 %v229
    %v446 = vpop.f32.mrf.mxu0
    %v447 = vadd.f32 0.0, %v446
    %v448 = vpop.f32.mrf.mxu0
    %v449 = vpop.f32.mrf.mxu0
    %v450 = vadd.f32 0.0, %v449
    %v451 = vpop.f32.mrf.mxu0
    %452 = vmatprep.mubr.bf16.mxu0 0
    %453 = vmatmul.mubr.bf16.gmra.mxu0 %v232
    %v454 = vpop.f32.mrf.mxu0
    %v455 = vadd.f32 0.0, %v454
    %v456 = vpop.f32.mrf.mxu0
    %v457 = vpop.f32.mrf.mxu0
    %v458 = vadd.f32 0.0, %v457
    %v459 = vpop.f32.mrf.mxu0
    %460 = vmatprep.mubr.bf16.mxu0 0
    %461 = vmatmul.mubr.bf16.gmra.mxu0 %v235
    %v462 = vpop.f32.mrf.mxu0
    %v463 = vadd.f32 0.0, %v462
    %v464 = vpop.f32.mrf.mxu0
    %v465 = vpop.f32.mrf.mxu0
    %v466 = vadd.f32 0.0, %v465
    %v467 = vpop.f32.mrf.mxu0
    %468 = vdwg.mxu0
    %v469 = vpack.c.bf16 %v282, %v279
    %v470 = vpack.c.bf16 %v290, %v287
    %v471 = vpack.c.bf16 %v298, %v295
    %v472 = vpack.c.bf16 %v306, %v303
    %v473 = vpack.c.bf16 %v314, %v311
    %v474 = vpack.c.bf16 %v322, %v319
    %v475 = vpack.c.bf16 %v330, %v327
    %v476 = vpack.c.bf16 %v338, %v335
    %v477 = vpack.c.bf16 %v346, %v343
    %v478 = vpack.c.bf16 %v354, %v351
    %v479 = vpack.c.bf16 %v362, %v359
    %v480 = vpack.c.bf16 %v370, %v367
    %v481 = vpack.c.bf16 %v378, %v375
    %v482 = vpack.c.bf16 %v386, %v383
    %v483 = vpack.c.bf16 %v394, %v391
    %v484 = vpack.c.bf16 %v402, %v399
    %v485 = vpack.c.bf16 %v410, %v407
    %v486 = vpack.c.bf16 %v418, %v415
    %v487 = vpack.c.bf16 %v426, %v423
    %v488 = vpack.c.bf16 %v434, %v431
    %v489 = vpack.c.bf16 %v442, %v439
    %v490 = vpack.c.bf16 %v450, %v447
    %v491 = vpack.c.bf16 %v458, %v455
    %v492 = vpack.c.bf16 %v466, %v463
    %s493 = scalar_lea.vmem %s2, 16
    %v494 = vld [vmem:[%s493] sm:$0xf]
    %v495 = vld [vmem:[%s493 + $0x4] sm:$0xf]
    %v496 = vld [vmem:[%s493 + $0x8] sm:$0xf]
    %v497 = vld [vmem:[%s493 + $0xc] sm:$0x1]
    %v502 = vunpack.c.l.b16 %v494
    %v503 = vunpack.c.l.b16 %v495
    %v504 = vunpack.c.l.b16 %v496
    %v505 = vunpack.c.l.b16 %v497
    %v506 = vpack.c.b16 %v503, %v502
    %v507 = vpack.c.b16 %v505, %v504
    %v510 = vand.u32 %v507, %v240
    %512 = vmatprep.subr.bf16.mxu0 0
    %513 = vmatpush1.bf16.msra.mxu0 0
    %514 = vmatprep.subr.bf16.mxu0 0
    %515 = vmatpush1.bf16.msra.mxu0 0
    %516 = vmatprep.subr.bf16.mxu0 0
    %517 = vmatpush1.bf16.msra.mxu0 0
    %518 = vmatprep.subr.bf16.mxu0 0
    %519 = vmatpush1.bf16.msra.mxu0 0
    %520 = vmatprep.subr.bf16.mxu0 0
    %521 = vmatpush1.bf16.msra.mxu0 0
    %522 = vmatprep.subr.bf16.mxu0 0
    %523 = vmatpush1.bf16.msra.mxu0 0
    %524 = vmatprep.subr.bf16.mxu0 0
    %525 = vmatpush1.bf16.msra.mxu0 %v510
    %526 = vmatprep.subr.bf16.mxu0 0
    %527 = vmatpush1.bf16.msra.mxu0 %v506
    %528 = vmatprep.subr.bf16.mxu0 0
    %529 = vmatpush2.bf16.msra.mxu0 0
    %530 = vmatprep.subr.bf16.mxu0 0
    %531 = vmatpush2.bf16.msra.mxu0 0
    %532 = vmatprep.subr.bf16.mxu0 0
    %533 = vmatpush2.bf16.msra.mxu0 0
    %534 = vmatprep.subr.bf16.mxu0 0
    %535 = vmatpush2.bf16.msra.mxu0 0
    %536 = vmatprep.subr.bf16.mxu0 0
    %537 = vmatpush2.bf16.msra.mxu0 0
    %538 = vmatprep.subr.bf16.mxu0 0
    %539 = vmatpush2.bf16.msra.mxu0 0
    %540 = vmatprep.subr.bf16.mxu0 0
    %541 = vmatpush2.bf16.msra.mxu0 0
    %542 = vmatprep.subr.bf16.mxu0 0
    %543 = vmatpush2.bf16.msra.mxu0 0
    %544 = vmatprep.mubr.bf16.mxu0 0
    %545 = vmatmul.mubr.bf16.gmra.mxu0 %v166
    %v546 = vpop.f32.mrf.mxu0
    %v547 = vadd.f32 0.0, %v546
    %v548 = vpop.f32.mrf.mxu0
    %v549 = vpop.f32.mrf.mxu0
    %v550 = vadd.f32 0.0, %v549
    %v551 = vpop.f32.mrf.mxu0
    %552 = vmatprep.mubr.bf16.mxu0 0
    %553 = vmatmul.mubr.bf16.gmra.mxu0 %v169
    %v554 = vpop.f32.mrf.mxu0
    %v555 = vadd.f32 0.0, %v554
    %v556 = vpop.f32.mrf.mxu0
    %v557 = vpop.f32.mrf.mxu0
    %v558 = vadd.f32 0.0, %v557
    %v559 = vpop.f32.mrf.mxu0
    %560 = vmatprep.mubr.bf16.mxu0 0
    %561 = vmatmul.mubr.bf16.gmra.mxu0 %v172
    %v562 = vpop.f32.mrf.mxu0
    %v563 = vadd.f32 0.0, %v562
    %v564 = vpop.f32.mrf.mxu0
    %v565 = vpop.f32.mrf.mxu0
    %v566 = vadd.f32 0.0, %v565
    %v567 = vpop.f32.mrf.mxu0
    %568 = vmatprep.mubr.bf16.mxu0 0
    %569 = vmatmul.mubr.bf16.gmra.mxu0 %v175
    %v570 = vpop.f32.mrf.mxu0
    %v571 = vadd.f32 0.0, %v570
    %v572 = vpop.f32.mrf.mxu0
    %v573 = vpop.f32.mrf.mxu0
    %v574 = vadd.f32 0.0, %v573
    %v575 = vpop.f32.mrf.mxu0
    %576 = vmatprep.mubr.bf16.mxu0 0
    %577 = vmatmul.mubr.bf16.gmra.mxu0 %v178
    %v578 = vpop.f32.mrf.mxu0
    %v579 = vadd.f32 0.0, %v578
    %v580 = vpop.f32.mrf.mxu0
    %v581 = vpop.f32.mrf.mxu0
    %v582 = vadd.f32 0.0, %v581
    %v583 = vpop.f32.mrf.mxu0
    %584 = vmatprep.mubr.bf16.mxu0 0
    %585 = vmatmul.mubr.bf16.gmra.mxu0 %v181
    %v586 = vpop.f32.mrf.mxu0
    %v587 = vadd.f32 0.0, %v586
    %v588 = vpop.f32.mrf.mxu0
    %v589 = vpop.f32.mrf.mxu0
    %v590 = vadd.f32 0.0, %v589
    %v591 = vpop.f32.mrf.mxu0
    %592 = vmatprep.mubr.bf16.mxu0 0
    %593 = vmatmul.mubr.bf16.gmra.mxu0 %v184
    %v594 = vpop.f32.mrf.mxu0
    %v595 = vadd.f32 0.0, %v594
    %v596 = vpop.f32.mrf.mxu0
    %v597 = vpop.f32.mrf.mxu0
    %v598 = vadd.f32 0.0, %v597
    %v599 = vpop.f32.mrf.mxu0
    %600 = vmatprep.mubr.bf16.mxu0 0
    %601 = vmatmul.mubr.bf16.gmra.mxu0 %v187
    %v602 = vpop.f32.mrf.mxu0
    %v603 = vadd.f32 0.0, %v602
    %v604 = vpop.f32.mrf.mxu0
    %v605 = vpop.f32.mrf.mxu0
    %v606 = vadd.f32 0.0, %v605
    %v607 = vpop.f32.mrf.mxu0
    %608 = vmatprep.mubr.bf16.mxu0 0
    %609 = vmatmul.mubr.bf16.gmra.mxu0 %v190
    %v610 = vpop.f32.mrf.mxu0
    %v611 = vadd.f32 0.0, %v610
    %v612 = vpop.f32.mrf.mxu0
    %v613 = vpop.f32.mrf.mxu0
    %v614 = vadd.f32 0.0, %v613
    %v615 = vpop.f32.mrf.mxu0
    %616 = vmatprep.mubr.bf16.mxu0 0
    %617 = vmatmul.mubr.bf16.gmra.mxu0 %v193
    %v618 = vpop.f32.mrf.mxu0
    %v619 = vadd.f32 0.0, %v618
    %v620 = vpop.f32.mrf.mxu0
    %v621 = vpop.f32.mrf.mxu0
    %v622 = vadd.f32 0.0, %v621
    %v623 = vpop.f32.mrf.mxu0
    %624 = vmatprep.mubr.bf16.mxu0 0
    %625 = vmatmul.mubr.bf16.gmra.mxu0 %v196
    %v626 = vpop.f32.mrf.mxu0
    %v627 = vadd.f32 0.0, %v626
    %v628 = vpop.f32.mrf.mxu0
    %v629 = vpop.f32.mrf.mxu0
    %v630 = vadd.f32 0.0, %v629
    %v631 = vpop.f32.mrf.mxu0
    %632 = vmatprep.mubr.bf16.mxu0 0
    %633 = vmatmul.mubr.bf16.gmra.mxu0 %v199
    %v634 = vpop.f32.mrf.mxu0
    %v635 = vadd.f32 0.0, %v634
    %v636 = vpop.f32.mrf.mxu0
    %v637 = vpop.f32.mrf.mxu0
    %v638 = vadd.f32 0.0, %v637
    %v639 = vpop.f32.mrf.mxu0
    %640 = vmatprep.mubr.bf16.mxu0 0
    %641 = vmatmul.mubr.bf16.gmra.mxu0 %v202
    %v642 = vpop.f32.mrf.mxu0
    %v643 = vadd.f32 0.0, %v642
    %v644 = vpop.f32.mrf.mxu0
    %v645 = vpop.f32.mrf.mxu0
    %v646 = vadd.f32 0.0, %v645
    %v647 = vpop.f32.mrf.mxu0
    %648 = vmatprep.mubr.bf16.mxu0 0
    %649 = vmatmul.mubr.bf16.gmra.mxu0 %v205
    %v650 = vpop.f32.mrf.mxu0
    %v651 = vadd.f32 0.0, %v650
    %v652 = vpop.f32.mrf.mxu0
    %v653 = vpop.f32.mrf.mxu0
    %v654 = vadd.f32 0.0, %v653
    %v655 = vpop.f32.mrf.mxu0
    %656 = vmatprep.mubr.bf16.mxu0 0
    %657 = vmatmul.mubr.bf16.gmra.mxu0 %v208
    %v658 = vpop.f32.mrf.mxu0
    %v659 = vadd.f32 0.0, %v658
    %v660 = vpop.f32.mrf.mxu0
    %v661 = vpop.f32.mrf.mxu0
    %v662 = vadd.f32 0.0, %v661
    %v663 = vpop.f32.mrf.mxu0
    %664 = vmatprep.mubr.bf16.mxu0 0
    %665 = vmatmul.mubr.bf16.gmra.mxu0 %v211
    %v666 = vpop.f32.mrf.mxu0
    %v667 = vadd.f32 0.0, %v666
    %v668 = vpop.f32.mrf.mxu0
    %v669 = vpop.f32.mrf.mxu0
    %v670 = vadd.f32 0.0, %v669
    %v671 = vpop.f32.mrf.mxu0
    %672 = vmatprep.mubr.bf16.mxu0 0
    %673 = vmatmul.mubr.bf16.gmra.mxu0 %v214
    %v674 = vpop.f32.mrf.mxu0
    %v675 = vadd.f32 0.0, %v674
    %v676 = vpop.f32.mrf.mxu0
    %v677 = vpop.f32.mrf.mxu0
    %v678 = vadd.f32 0.0, %v677
    %v679 = vpop.f32.mrf.mxu0
    %680 = vmatprep.mubr.bf16.mxu0 0
    %681 = vmatmul.mubr.bf16.gmra.mxu0 %v217
    %v682 = vpop.f32.mrf.mxu0
    %v683 = vadd.f32 0.0, %v682
    %v684 = vpop.f32.mrf.mxu0
    %v685 = vpop.f32.mrf.mxu0
    %v686 = vadd.f32 0.0, %v685
    %v687 = vpop.f32.mrf.mxu0
    %688 = vmatprep.mubr.bf16.mxu0 0
    %689 = vmatmul.mubr.bf16.gmra.mxu0 %v220
    %v690 = vpop.f32.mrf.mxu0
    %v691 = vadd.f32 0.0, %v690
    %v692 = vpop.f32.mrf.mxu0
    %v693 = vpop.f32.mrf.mxu0
    %v694 = vadd.f32 0.0, %v693
    %v695 = vpop.f32.mrf.mxu0
    %696 = vmatprep.mubr.bf16.mxu0 0
    %697 = vmatmul.mubr.bf16.gmra.mxu0 %v223
    %v698 = vpop.f32.mrf.mxu0
    %v699 = vadd.f32 0.0, %v698
    %v700 = vpop.f32.mrf.mxu0
    %v701 = vpop.f32.mrf.mxu0
    %v702 = vadd.f32 0.0, %v701
    %v703 = vpop.f32.mrf.mxu0
    %704 = vmatprep.mubr.bf16.mxu0 0
    %705 = vmatmul.mubr.bf16.gmra.mxu0 %v226
    %v706 = vpop.f32.mrf.mxu0
    %v707 = vadd.f32 0.0, %v706
    %v708 = vpop.f32.mrf.mxu0
    %v709 = vpop.f32.mrf.mxu0
    %v710 = vadd.f32 0.0, %v709
    %v711 = vpop.f32.mrf.mxu0
    %712 = vmatprep.mubr.bf16.mxu0 0
    %713 = vmatmul.mubr.bf16.gmra.mxu0 %v229
    %v714 = vpop.f32.mrf.mxu0
    %v715 = vadd.f32 0.0, %v714
    %v716 = vpop.f32.mrf.mxu0
    %v717 = vpop.f32.mrf.mxu0
    %v718 = vadd.f32 0.0, %v717
    %v719 = vpop.f32.mrf.mxu0
    %720 = vmatprep.mubr.bf16.mxu0 0
    %721 = vmatmul.mubr.bf16.gmra.mxu0 %v232
    %v722 = vpop.f32.mrf.mxu0
    %v723 = vadd.f32 0.0, %v722
    %v724 = vpop.f32.mrf.mxu0
    %v725 = vpop.f32.mrf.mxu0
    %v726 = vadd.f32 0.0, %v725
    %v727 = vpop.f32.mrf.mxu0
    %728 = vmatprep.mubr.bf16.mxu0 0
    %729 = vmatmul.mubr.bf16.gmra.mxu0 %v235
    %v730 = vpop.f32.mrf.mxu0
    %v731 = vadd.f32 0.0, %v730
    %v732 = vpop.f32.mrf.mxu0
    %v733 = vpop.f32.mrf.mxu0
    %v734 = vadd.f32 0.0, %v733
    %v735 = vpop.f32.mrf.mxu0
    %736 = vdwg.mxu0
    %v737 = vpack.c.bf16 %v550, %v547
    %v738 = vpack.c.bf16 %v558, %v555
    %v739 = vpack.c.bf16 %v566, %v563
    %v740 = vpack.c.bf16 %v574, %v571
    %v741 = vpack.c.bf16 %v582, %v579
    %v742 = vpack.c.bf16 %v590, %v587
    %v743 = vpack.c.bf16 %v598, %v595
    %v744 = vpack.c.bf16 %v606, %v603
    %v745 = vpack.c.bf16 %v614, %v611
    %v746 = vpack.c.bf16 %v622, %v619
    %v747 = vpack.c.bf16 %v630, %v627
    %v748 = vpack.c.bf16 %v638, %v635
    %v749 = vpack.c.bf16 %v646, %v643
    %v750 = vpack.c.bf16 %v654, %v651
    %v751 = vpack.c.bf16 %v662, %v659
    %v752 = vpack.c.bf16 %v670, %v667
    %v753 = vpack.c.bf16 %v678, %v675
    %v754 = vpack.c.bf16 %v686, %v683
    %v755 = vpack.c.bf16 %v694, %v691
    %v756 = vpack.c.bf16 %v702, %v699
    %v757 = vpack.c.bf16 %v710, %v707
    %v758 = vpack.c.bf16 %v718, %v715
    %v759 = vpack.c.bf16 %v726, %v723
    %v760 = vpack.c.bf16 %v734, %v731
    %v785 = vunpack.c.l.b16 %v469
    %v786 = vunpack.c.h.b16 %v469
    %v787 = vunpack.c.l.b16 %v470
    %v788 = vunpack.c.h.b16 %v470
    %v789 = vunpack.c.l.b16 %v471
    %v790 = vunpack.c.h.b16 %v471
    %v791 = vunpack.c.l.b16 %v472
    %v792 = vunpack.c.h.b16 %v472
    %v793 = vunpack.c.l.b16 %v473
    %v794 = vunpack.c.h.b16 %v473
    %v795 = vunpack.c.l.b16 %v474
    %v796 = vunpack.c.h.b16 %v474
    %v797 = vunpack.c.l.b16 %v475
    %v798 = vunpack.c.h.b16 %v475
    %v799 = vunpack.c.l.b16 %v476
    %v800 = vunpack.c.h.b16 %v476
    %v801 = vunpack.c.l.b16 %v477
    %v802 = vunpack.c.h.b16 %v477
    %v803 = vunpack.c.l.b16 %v478
    %v804 = vunpack.c.h.b16 %v478
    %v805 = vunpack.c.l.b16 %v479
    %v806 = vunpack.c.h.b16 %v479
    %v807 = vunpack.c.l.b16 %v480
    %v808 = vunpack.c.h.b16 %v480
    %v809 = vunpack.c.l.b16 %v481
    %v810 = vunpack.c.h.b16 %v481
    %v811 = vunpack.c.l.b16 %v482
    %v812 = vunpack.c.h.b16 %v482
    %v813 = vunpack.c.l.b16 %v483
    %v814 = vunpack.c.h.b16 %v483
    %v815 = vunpack.c.l.b16 %v484
    %v816 = vunpack.c.h.b16 %v484
    %v817 = vunpack.c.l.b16 %v485
    %v818 = vunpack.c.h.b16 %v485
    %v819 = vunpack.c.l.b16 %v486
    %v820 = vunpack.c.h.b16 %v486
    %v821 = vunpack.c.l.b16 %v487
    %v822 = vunpack.c.h.b16 %v487
    %v823 = vunpack.c.l.b16 %v488
    %v824 = vunpack.c.h.b16 %v488
    %v825 = vunpack.c.l.b16 %v489
    %v826 = vunpack.c.h.b16 %v489
    %v827 = vunpack.c.l.b16 %v490
    %v828 = vunpack.c.h.b16 %v490
    %v829 = vunpack.c.l.b16 %v491
    %v830 = vunpack.c.h.b16 %v491
    %v831 = vunpack.c.l.b16 %v492
    %v832 = vunpack.c.h.b16 %v492
    %v833 = vpack.c.b16 %v785, %v785
    %v834 = vpack.c.b16 %v786, %v786
    %v835 = vpack.c.b16 %v787, %v787
    %v836 = vpack.c.b16 %v788, %v788
    %v837 = vpack.c.b16 %v789, %v789
    %v838 = vpack.c.b16 %v790, %v790
    %v839 = vpack.c.b16 %v791, %v791
    %v840 = vpack.c.b16 %v792, %v792
    %v841 = vpack.c.b16 %v793, %v793
    %v842 = vpack.c.b16 %v794, %v794
    %v843 = vpack.c.b16 %v795, %v795
    %v844 = vpack.c.b16 %v796, %v796
    %v845 = vpack.c.b16 %v797, %v797
    %v846 = vpack.c.b16 %v798, %v798
    %v847 = vpack.c.b16 %v799, %v799
    %v848 = vpack.c.b16 %v800, %v800
    %v849 = vpack.c.b16 %v801, %v801
    %v850 = vpack.c.b16 %v802, %v802
    %v851 = vpack.c.b16 %v803, %v803
    %v852 = vpack.c.b16 %v804, %v804
    %v853 = vpack.c.b16 %v805, %v805
    %v854 = vpack.c.b16 %v806, %v806
    %v855 = vpack.c.b16 %v807, %v807
    %v856 = vpack.c.b16 %v808, %v808
    %v857 = vpack.c.b16 %v809, %v809
    %v858 = vpack.c.b16 %v810, %v810
    %v859 = vpack.c.b16 %v811, %v811
    %v860 = vpack.c.b16 %v812, %v812
    %v861 = vpack.c.b16 %v813, %v813
    %v862 = vpack.c.b16 %v814, %v814
    %v863 = vpack.c.b16 %v815, %v815
    %v864 = vpack.c.b16 %v816, %v816
    %v865 = vpack.c.b16 %v817, %v817
    %v866 = vpack.c.b16 %v818, %v818
    %v867 = vpack.c.b16 %v819, %v819
    %v868 = vpack.c.b16 %v820, %v820
    %v869 = vpack.c.b16 %v821, %v821
    %v870 = vpack.c.b16 %v822, %v822
    %v871 = vpack.c.b16 %v823, %v823
    %v872 = vpack.c.b16 %v824, %v824
    %v873 = vpack.c.b16 %v825, %v825
    %v874 = vpack.c.b16 %v826, %v826
    %v875 = vpack.c.b16 %v827, %v827
    %v876 = vpack.c.b16 %v828, %v828
    %v877 = vpack.c.b16 %v829, %v829
    %v878 = vpack.c.b16 %v830, %v830
    %v879 = vpack.c.b16 %v831, %v831
    %v880 = vpack.c.b16 %v832, %v832
    %vm929 = vcmask 199680
    %930 = vst.msk [vmem:[#allocation2] sm:$0xf] %vm929, %v833
    %931 = vst.msk [vmem:[#allocation2 + $0x4] sm:$0xf] %vm929, %v834
    %932 = vst.msk [vmem:[#allocation2 + $0x8] sm:$0xf] %vm929, %v835
    %933 = vst.msk [vmem:[#allocation2 + $0xc] sm:$0xf] %vm929, %v836
    %934 = vst.msk [vmem:[#allocation2 + $0x10] sm:$0xf] %vm929, %v837
    %935 = vst.msk [vmem:[#allocation2 + $0x14] sm:$0xf] %vm929, %v838
    %936 = vst.msk [vmem:[#allocation2 + $0x18] sm:$0xf] %vm929, %v839
    %937 = vst.msk [vmem:[#allocation2 + $0x1c] sm:$0xf] %vm929, %v840
    %938 = vst.msk [vmem:[#allocation2 + $0x20] sm:$0xf] %vm929, %v841
    %939 = vst.msk [vmem:[#allocation2 + $0x24] sm:$0xf] %vm929, %v842
    %940 = vst.msk [vmem:[#allocation2 + $0x28] sm:$0xf] %vm929, %v843
    %941 = vst.msk [vmem:[#allocation2 + $0x2c] sm:$0xf] %vm929, %v844
    %942 = vst.msk [vmem:[#allocation2 + $0x30] sm:$0xf] %vm929, %v845
    %943 = vst.msk [vmem:[#allocation2 + $0x34] sm:$0xf] %vm929, %v846
    %944 = vst.msk [vmem:[#allocation2 + $0x38] sm:$0xf] %vm929, %v847
    %945 = vst.msk [vmem:[#allocation2 + $0x3c] sm:$0xf] %vm929, %v848
    %946 = vst.msk [vmem:[#allocation2 + $0x40] sm:$0xf] %vm929, %v849
    %947 = vst.msk [vmem:[#allocation2 + $0x44] sm:$0xf] %vm929, %v850
    %948 = vst.msk [vmem:[#allocation2 + $0x48] sm:$0xf] %vm929, %v851
    %949 = vst.msk [vmem:[#allocation2 + $0x4c] sm:$0xf] %vm929, %v852
    %950 = vst.msk [vmem:[#allocation2 + $0x50] sm:$0xf] %vm929, %v853
    %951 = vst.msk [vmem:[#allocation2 + $0x54] sm:$0xf] %vm929, %v854
    %952 = vst.msk [vmem:[#allocation2 + $0x58] sm:$0xf] %vm929, %v855
    %953 = vst.msk [vmem:[#allocation2 + $0x5c] sm:$0xf] %vm929, %v856
    %954 = vst.msk [vmem:[#allocation2 + $0x60] sm:$0xf] %vm929, %v857
    %955 = vst.msk [vmem:[#allocation2 + $0x64] sm:$0xf] %vm929, %v858
    %956 = vst.msk [vmem:[#allocation2 + $0x68] sm:$0xf] %vm929, %v859
    %957 = vst.msk [vmem:[#allocation2 + $0x6c] sm:$0xf] %vm929, %v860
    %958 = vst.msk [vmem:[#allocation2 + $0x70] sm:$0xf] %vm929, %v861
    %959 = vst.msk [vmem:[#allocation2 + $0x74] sm:$0xf] %vm929, %v862
    %960 = vst.msk [vmem:[#allocation2 + $0x78] sm:$0xf] %vm929, %v863
    %961 = vst.msk [vmem:[#allocation2 + $0x7c] sm:$0xf] %vm929, %v864
    %962 = vst.msk [vmem:[#allocation2 + $0x80] sm:$0xf] %vm929, %v865
    %963 = vst.msk [vmem:[#allocation2 + $0x84] sm:$0xf] %vm929, %v866
    %964 = vst.msk [vmem:[#allocation2 + $0x88] sm:$0xf] %vm929, %v867
    %965 = vst.msk [vmem:[#allocation2 + $0x8c] sm:$0xf] %vm929, %v868
    %966 = vst.msk [vmem:[#allocation2 + $0x90] sm:$0xf] %vm929, %v869
    %967 = vst.msk [vmem:[#allocation2 + $0x94] sm:$0xf] %vm929, %v870
    %968 = vst.msk [vmem:[#allocation2 + $0x98] sm:$0xf] %vm929, %v871
    %969 = vst.msk [vmem:[#allocation2 + $0x9c] sm:$0xf] %vm929, %v872
    %970 = vst.msk [vmem:[#allocation2 + $0xa0] sm:$0xf] %vm929, %v873
    %971 = vst.msk [vmem:[#allocation2 + $0xa4] sm:$0xf] %vm929, %v874
    %972 = vst.msk [vmem:[#allocation2 + $0xa8] sm:$0xf] %vm929, %v875
    %973 = vst.msk [vmem:[#allocation2 + $0xac] sm:$0xf] %vm929, %v876
    %974 = vst.msk [vmem:[#allocation2 + $0xb0] sm:$0xf] %vm929, %v877
    %975 = vst.msk [vmem:[#allocation2 + $0xb4] sm:$0xf] %vm929, %v878
    %976 = vst.msk [vmem:[#allocation2 + $0xb8] sm:$0xf] %vm929, %v879
    %977 = vst.msk [vmem:[#allocation2 + $0xbc] sm:$0xf] %vm929, %v880
    %v1002 = vunpack.c.l.b16 %v125
    %v1003 = vunpack.c.h.b16 %v125
    %v1004 = vunpack.c.l.b16 %v126
    %v1005 = vunpack.c.h.b16 %v126
    %v1006 = vunpack.c.l.b16 %v127
    %v1007 = vunpack.c.h.b16 %v127
    %v1008 = vunpack.c.l.b16 %v128
    %v1009 = vunpack.c.h.b16 %v128
    %v1010 = vunpack.c.l.b16 %v129
    %v1011 = vunpack.c.h.b16 %v129
    %v1012 = vunpack.c.l.b16 %v130
    %v1013 = vunpack.c.h.b16 %v130
    %v1014 = vunpack.c.l.b16 %v131
    %v1015 = vunpack.c.h.b16 %v131
    %v1016 = vunpack.c.l.b16 %v132
    %v1017 = vunpack.c.h.b16 %v132
    %v1018 = vunpack.c.l.b16 %v133
    %v1019 = vunpack.c.h.b16 %v133
    %v1020 = vunpack.c.l.b16 %v134
    %v1021 = vunpack.c.h.b16 %v134
    %v1022 = vunpack.c.l.b16 %v135
    %v1023 = vunpack.c.h.b16 %v135
    %v1024 = vunpack.c.l.b16 %v136
    %v1025 = vunpack.c.h.b16 %v136
    %v1026 = vunpack.c.l.b16 %v137
    %v1027 = vunpack.c.h.b16 %v137
    %v1028 = vunpack.c.l.b16 %v138
    %v1029 = vunpack.c.h.b16 %v138
    %v1030 = vunpack.c.l.b16 %v139
    %v1031 = vunpack.c.h.b16 %v139
    %v1032 = vunpack.c.l.b16 %v140
    %v1033 = vunpack.c.h.b16 %v140
    %v1034 = vunpack.c.l.b16 %v141
    %v1035 = vunpack.c.h.b16 %v141
    %v1036 = vunpack.c.l.b16 %v142
    %v1037 = vunpack.c.h.b16 %v142
    %v1038 = vunpack.c.l.b16 %v143
    %v1039 = vunpack.c.h.b16 %v143
    %v1040 = vunpack.c.l.b16 %v144
    %v1041 = vunpack.c.h.b16 %v144
    %v1042 = vunpack.c.l.b16 %v145
    %v1043 = vunpack.c.h.b16 %v145
    %v1044 = vunpack.c.l.b16 %v146
    %v1045 = vunpack.c.h.b16 %v146
    %v1046 = vunpack.c.l.b16 %v147
    %v1047 = vunpack.c.h.b16 %v147
    %v1048 = vunpack.c.l.b16 %v148
    %v1049 = vunpack.c.h.b16 %v148
    %v1050 = vpack.c.b16 %v1002, %v1002
    %v1051 = vpack.c.b16 %v1003, %v1003
    %v1052 = vpack.c.b16 %v1004, %v1004
    %v1053 = vpack.c.b16 %v1005, %v1005
    %v1054 = vpack.c.b16 %v1006, %v1006
    %v1055 = vpack.c.b16 %v1007, %v1007
    %v1056 = vpack.c.b16 %v1008, %v1008
    %v1057 = vpack.c.b16 %v1009, %v1009
    %v1058 = vpack.c.b16 %v1010, %v1010
    %v1059 = vpack.c.b16 %v1011, %v1011
    %v1060 = vpack.c.b16 %v1012, %v1012
    %v1061 = vpack.c.b16 %v1013, %v1013
    %v1062 = vpack.c.b16 %v1014, %v1014
    %v1063 = vpack.c.b16 %v1015, %v1015
    %v1064 = vpack.c.b16 %v1016, %v1016
    %v1065 = vpack.c.b16 %v1017, %v1017
    %v1066 = vpack.c.b16 %v1018, %v1018
    %v1067 = vpack.c.b16 %v1019, %v1019
    %v1068 = vpack.c.b16 %v1020, %v1020
    %v1069 = vpack.c.b16 %v1021, %v1021
    %v1070 = vpack.c.b16 %v1022, %v1022
    %v1071 = vpack.c.b16 %v1023, %v1023
    %v1072 = vpack.c.b16 %v1024, %v1024
    %v1073 = vpack.c.b16 %v1025, %v1025
    %v1074 = vpack.c.b16 %v1026, %v1026
    %v1075 = vpack.c.b16 %v1027, %v1027
    %v1076 = vpack.c.b16 %v1028, %v1028
    %v1077 = vpack.c.b16 %v1029, %v1029
    %v1078 = vpack.c.b16 %v1030, %v1030
    %v1079 = vpack.c.b16 %v1031, %v1031
    %v1080 = vpack.c.b16 %v1032, %v1032
    %v1081 = vpack.c.b16 %v1033, %v1033
    %v1082 = vpack.c.b16 %v1034, %v1034
    %v1083 = vpack.c.b16 %v1035, %v1035
    %v1084 = vpack.c.b16 %v1036, %v1036
    %v1085 = vpack.c.b16 %v1037, %v1037
    %v1086 = vpack.c.b16 %v1038, %v1038
    %v1087 = vpack.c.b16 %v1039, %v1039
    %v1088 = vpack.c.b16 %v1040, %v1040
    %v1089 = vpack.c.b16 %v1041, %v1041
    %v1090 = vpack.c.b16 %v1042, %v1042
    %v1091 = vpack.c.b16 %v1043, %v1043
    %v1092 = vpack.c.b16 %v1044, %v1044
    %v1093 = vpack.c.b16 %v1045, %v1045
    %v1094 = vpack.c.b16 %v1046, %v1046
    %v1095 = vpack.c.b16 %v1047, %v1047
    %v1096 = vpack.c.b16 %v1048, %v1048
    %v1097 = vpack.c.b16 %v1049, %v1049
    %1146 = vst.msk [vmem:[#allocation2 + $0xc0] sm:$0xf] %vm929, %v1050
    %1147 = vst.msk [vmem:[#allocation2 + $0xc4] sm:$0xf] %vm929, %v1051
    %1148 = vst.msk [vmem:[#allocation2 + $0xc8] sm:$0xf] %vm929, %v1052
    %1149 = vst.msk [vmem:[#allocation2 + $0xcc] sm:$0xf] %vm929, %v1053
    %1150 = vst.msk [vmem:[#allocation2 + $0xd0] sm:$0xf] %vm929, %v1054
    %1151 = vst.msk [vmem:[#allocation2 + $0xd4] sm:$0xf] %vm929, %v1055
    %1152 = vst.msk [vmem:[#allocation2 + $0xd8] sm:$0xf] %vm929, %v1056
    %1153 = vst.msk [vmem:[#allocation2 + $0xdc] sm:$0xf] %vm929, %v1057
    %1154 = vst.msk [vmem:[#allocation2 + $0xe0] sm:$0xf] %vm929, %v1058
    %1155 = vst.msk [vmem:[#allocation2 + $0xe4] sm:$0xf] %vm929, %v1059
    %1156 = vst.msk [vmem:[#allocation2 + $0xe8] sm:$0xf] %vm929, %v1060
    %1157 = vst.msk [vmem:[#allocation2 + $0xec] sm:$0xf] %vm929, %v1061
    %1158 = vst.msk [vmem:[#allocation2 + $0xf0] sm:$0xf] %vm929, %v1062
    %1159 = vst.msk [vmem:[#allocation2 + $0xf4] sm:$0xf] %vm929, %v1063
    %1160 = vst.msk [vmem:[#allocation2 + $0xf8] sm:$0xf] %vm929, %v1064
    %1161 = vst.msk [vmem:[#allocation2 + $0xfc] sm:$0xf] %vm929, %v1065
    %1162 = vst.msk [vmem:[#allocation2 + $0x100] sm:$0xf] %vm929, %v1066
    %1163 = vst.msk [vmem:[#allocation2 + $0x104] sm:$0xf] %vm929, %v1067
    %1164 = vst.msk [vmem:[#allocation2 + $0x108] sm:$0xf] %vm929, %v1068
    %1165 = vst.msk [vmem:[#allocation2 + $0x10c] sm:$0xf] %vm929, %v1069
    %1166 = vst.msk [vmem:[#allocation2 + $0x110] sm:$0xf] %vm929, %v1070
    %1167 = vst.msk [vmem:[#allocation2 + $0x114] sm:$0xf] %vm929, %v1071
    %1168 = vst.msk [vmem:[#allocation2 + $0x118] sm:$0xf] %vm929, %v1072
    %1169 = vst.msk [vmem:[#allocation2 + $0x11c] sm:$0xf] %vm929, %v1073
    %1170 = vst.msk [vmem:[#allocation2 + $0x120] sm:$0xf] %vm929, %v1074
    %1171 = vst.msk [vmem:[#allocation2 + $0x124] sm:$0xf] %vm929, %v1075
    %1172 = vst.msk [vmem:[#allocation2 + $0x128] sm:$0xf] %vm929, %v1076
    %1173 = vst.msk [vmem:[#allocation2 + $0x12c] sm:$0xf] %vm929, %v1077
    %1174 = vst.msk [vmem:[#allocation2 + $0x130] sm:$0xf] %vm929, %v1078
    %1175 = vst.msk [vmem:[#allocation2 + $0x134] sm:$0xf] %vm929, %v1079
    %1176 = vst.msk [vmem:[#allocation2 + $0x138] sm:$0xf] %vm929, %v1080
    %1177 = vst.msk [vmem:[#allocation2 + $0x13c] sm:$0xf] %vm929, %v1081
    %1178 = vst.msk [vmem:[#allocation2 + $0x140] sm:$0xf] %vm929, %v1082
    %1179 = vst.msk [vmem:[#allocation2 + $0x144] sm:$0xf] %vm929, %v1083
    %1180 = vst.msk [vmem:[#allocation2 + $0x148] sm:$0xf] %vm929, %v1084
    %1181 = vst.msk [vmem:[#allocation2 + $0x14c] sm:$0xf] %vm929, %v1085
    %1182 = vst.msk [vmem:[#allocation2 + $0x150] sm:$0xf] %vm929, %v1086
    %1183 = vst.msk [vmem:[#allocation2 + $0x154] sm:$0xf] %vm929, %v1087
    %1184 = vst.msk [vmem:[#allocation2 + $0x158] sm:$0xf] %vm929, %v1088
    %1185 = vst.msk [vmem:[#allocation2 + $0x15c] sm:$0xf] %vm929, %v1089
    %1186 = vst.msk [vmem:[#allocation2 + $0x160] sm:$0xf] %vm929, %v1090
    %1187 = vst.msk [vmem:[#allocation2 + $0x164] sm:$0xf] %vm929, %v1091
    %1188 = vst.msk [vmem:[#allocation2 + $0x168] sm:$0xf] %vm929, %v1092
    %1189 = vst.msk [vmem:[#allocation2 + $0x16c] sm:$0xf] %vm929, %v1093
    %1190 = vst.msk [vmem:[#allocation2 + $0x170] sm:$0xf] %vm929, %v1094
    %1191 = vst.msk [vmem:[#allocation2 + $0x174] sm:$0xf] %vm929, %v1095
    %1192 = vst.msk [vmem:[#allocation2 + $0x178] sm:$0xf] %vm929, %v1096
    %1193 = vst.msk [vmem:[#allocation2 + $0x17c] sm:$0xf] %vm929, %v1097
    %v1218 = vunpack.c.l.b16 %v737
    %v1219 = vunpack.c.h.b16 %v737
    %v1220 = vunpack.c.l.b16 %v738
    %v1221 = vunpack.c.h.b16 %v738
    %v1222 = vunpack.c.l.b16 %v739
    %v1223 = vunpack.c.h.b16 %v739
    %v1224 = vunpack.c.l.b16 %v740
    %v1225 = vunpack.c.h.b16 %v740
    %v1226 = vunpack.c.l.b16 %v741
    %v1227 = vunpack.c.h.b16 %v741
    %v1228 = vunpack.c.l.b16 %v742
    %v1229 = vunpack.c.h.b16 %v742
    %v1230 = vunpack.c.l.b16 %v743
    %v1231 = vunpack.c.h.b16 %v743
    %v1232 = vunpack.c.l.b16 %v744
    %v1233 = vunpack.c.h.b16 %v744
    %v1234 = vunpack.c.l.b16 %v745
    %v1235 = vunpack.c.h.b16 %v745
    %v1236 = vunpack.c.l.b16 %v746
    %v1237 = vunpack.c.h.b16 %v746
    %v1238 = vunpack.c.l.b16 %v747
    %v1239 = vunpack.c.h.b16 %v747
    %v1240 = vunpack.c.l.b16 %v748
    %v1241 = vunpack.c.h.b16 %v748
    %v1242 = vunpack.c.l.b16 %v749
    %v1243 = vunpack.c.h.b16 %v749
    %v1244 = vunpack.c.l.b16 %v750
    %v1245 = vunpack.c.h.b16 %v750
    %v1246 = vunpack.c.l.b16 %v751
    %v1247 = vunpack.c.h.b16 %v751
    %v1248 = vunpack.c.l.b16 %v752
    %v1249 = vunpack.c.h.b16 %v752
    %v1250 = vunpack.c.l.b16 %v753
    %v1251 = vunpack.c.h.b16 %v753
    %v1252 = vunpack.c.l.b16 %v754
    %v1253 = vunpack.c.h.b16 %v754
    %v1254 = vunpack.c.l.b16 %v755
    %v1255 = vunpack.c.h.b16 %v755
    %v1256 = vunpack.c.l.b16 %v756
    %v1257 = vunpack.c.h.b16 %v756
    %v1258 = vunpack.c.l.b16 %v757
    %v1259 = vunpack.c.h.b16 %v757
    %v1260 = vunpack.c.l.b16 %v758
    %v1261 = vunpack.c.h.b16 %v758
    %v1262 = vunpack.c.l.b16 %v759
    %v1263 = vunpack.c.h.b16 %v759
    %v1264 = vunpack.c.l.b16 %v760
    %v1265 = vunpack.c.h.b16 %v760
    %v1266 = vpack.c.b16 %v1218, %v1218
    %v1267 = vpack.c.b16 %v1219, %v1219
    %v1268 = vpack.c.b16 %v1220, %v1220
    %v1269 = vpack.c.b16 %v1221, %v1221
    %v1270 = vpack.c.b16 %v1222, %v1222
    %v1271 = vpack.c.b16 %v1223, %v1223
    %v1272 = vpack.c.b16 %v1224, %v1224
    %v1273 = vpack.c.b16 %v1225, %v1225
    %v1274 = vpack.c.b16 %v1226, %v1226
    %v1275 = vpack.c.b16 %v1227, %v1227
    %v1276 = vpack.c.b16 %v1228, %v1228
    %v1277 = vpack.c.b16 %v1229, %v1229
    %v1278 = vpack.c.b16 %v1230, %v1230
    %v1279 = vpack.c.b16 %v1231, %v1231
    %v1280 = vpack.c.b16 %v1232, %v1232
    %v1281 = vpack.c.b16 %v1233, %v1233
    %v1282 = vpack.c.b16 %v1234, %v1234
    %v1283 = vpack.c.b16 %v1235, %v1235
    %v1284 = vpack.c.b16 %v1236, %v1236
    %v1285 = vpack.c.b16 %v1237, %v1237
    %v1286 = vpack.c.b16 %v1238, %v1238
    %v1287 = vpack.c.b16 %v1239, %v1239
    %v1288 = vpack.c.b16 %v1240, %v1240
    %v1289 = vpack.c.b16 %v1241, %v1241
    %v1290 = vpack.c.b16 %v1242, %v1242
    %v1291 = vpack.c.b16 %v1243, %v1243
    %v1292 = vpack.c.b16 %v1244, %v1244
    %v1293 = vpack.c.b16 %v1245, %v1245
    %v1294 = vpack.c.b16 %v1246, %v1246
    %v1295 = vpack.c.b16 %v1247, %v1247
    %v1296 = vpack.c.b16 %v1248, %v1248
    %v1297 = vpack.c.b16 %v1249, %v1249
    %v1298 = vpack.c.b16 %v1250, %v1250
    %v1299 = vpack.c.b16 %v1251, %v1251
    %v1300 = vpack.c.b16 %v1252, %v1252
    %v1301 = vpack.c.b16 %v1253, %v1253
    %v1302 = vpack.c.b16 %v1254, %v1254
    %v1303 = vpack.c.b16 %v1255, %v1255
    %v1304 = vpack.c.b16 %v1256, %v1256
    %v1305 = vpack.c.b16 %v1257, %v1257
    %v1306 = vpack.c.b16 %v1258, %v1258
    %v1307 = vpack.c.b16 %v1259, %v1259
    %v1308 = vpack.c.b16 %v1260, %v1260
    %v1309 = vpack.c.b16 %v1261, %v1261
    %v1310 = vpack.c.b16 %v1262, %v1262
    %v1311 = vpack.c.b16 %v1263, %v1263
    %v1312 = vpack.c.b16 %v1264, %v1264
    %v1313 = vpack.c.b16 %v1265, %v1265
    %1362 = vst.msk [vmem:[#allocation2 + $0x180] sm:$0xf] %vm929, %v1266
    %1363 = vst.msk [vmem:[#allocation2 + $0x184] sm:$0xf] %vm929, %v1267
    %1364 = vst.msk [vmem:[#allocation2 + $0x188] sm:$0xf] %vm929, %v1268
    %1365 = vst.msk [vmem:[#allocation2 + $0x18c] sm:$0xf] %vm929, %v1269
    %1366 = vst.msk [vmem:[#allocation2 + $0x190] sm:$0xf] %vm929, %v1270
    %1367 = vst.msk [vmem:[#allocation2 + $0x194] sm:$0xf] %vm929, %v1271
    %1368 = vst.msk [vmem:[#allocation2 + $0x198] sm:$0xf] %vm929, %v1272
    %1369 = vst.msk [vmem:[#allocation2 + $0x19c] sm:$0xf] %vm929, %v1273
    %1370 = vst.msk [vmem:[#allocation2 + $0x1a0] sm:$0xf] %vm929, %v1274
    %1371 = vst.msk [vmem:[#allocation2 + $0x1a4] sm:$0xf] %vm929, %v1275
    %1372 = vst.msk [vmem:[#allocation2 + $0x1a8] sm:$0xf] %vm929, %v1276
    %1373 = vst.msk [vmem:[#allocation2 + $0x1ac] sm:$0xf] %vm929, %v1277
    %1374 = vst.msk [vmem:[#allocation2 + $0x1b0] sm:$0xf] %vm929, %v1278
    %1375 = vst.msk [vmem:[#allocation2 + $0x1b4] sm:$0xf] %vm929, %v1279
    %1376 = vst.msk [vmem:[#allocation2 + $0x1b8] sm:$0xf] %vm929, %v1280
    %1377 = vst.msk [vmem:[#allocation2 + $0x1bc] sm:$0xf] %vm929, %v1281
    %1378 = vst.msk [vmem:[#allocation2 + $0x1c0] sm:$0xf] %vm929, %v1282
    %1379 = vst.msk [vmem:[#allocation2 + $0x1c4] sm:$0xf] %vm929, %v1283
    %1380 = vst.msk [vmem:[#allocation2 + $0x1c8] sm:$0xf] %vm929, %v1284
    %1381 = vst.msk [vmem:[#allocation2 + $0x1cc] sm:$0xf] %vm929, %v1285
    %1382 = vst.msk [vmem:[#allocation2 + $0x1d0] sm:$0xf] %vm929, %v1286
    %1383 = vst.msk [vmem:[#allocation2 + $0x1d4] sm:$0xf] %vm929, %v1287
    %1384 = vst.msk [vmem:[#allocation2 + $0x1d8] sm:$0xf] %vm929, %v1288
    %1385 = vst.msk [vmem:[#allocation2 + $0x1dc] sm:$0xf] %vm929, %v1289
    %1386 = vst.msk [vmem:[#allocation2 + $0x1e0] sm:$0xf] %vm929, %v1290
    %1387 = vst.msk [vmem:[#allocation2 + $0x1e4] sm:$0xf] %vm929, %v1291
    %1388 = vst.msk [vmem:[#allocation2 + $0x1e8] sm:$0xf] %vm929, %v1292
    %1389 = vst.msk [vmem:[#allocation2 + $0x1ec] sm:$0xf] %vm929, %v1293
    %1390 = vst.msk [vmem:[#allocation2 + $0x1f0] sm:$0xf] %vm929, %v1294
    %1391 = vst.msk [vmem:[#allocation2 + $0x1f4] sm:$0xf] %vm929, %v1295
    %1392 = vst.msk [vmem:[#allocation2 + $0x1f8] sm:$0xf] %vm929, %v1296
    %1393 = vst.msk [vmem:[#allocation2 + $0x1fc] sm:$0xf] %vm929, %v1297
    %1394 = vst.msk [vmem:[#allocation2 + $0x200] sm:$0xf] %vm929, %v1298
    %1395 = vst.msk [vmem:[#allocation2 + $0x204] sm:$0xf] %vm929, %v1299
    %1396 = vst.msk [vmem:[#allocation2 + $0x208] sm:$0xf] %vm929, %v1300
    %1397 = vst.msk [vmem:[#allocation2 + $0x20c] sm:$0xf] %vm929, %v1301
    %1398 = vst.msk [vmem:[#allocation2 + $0x210] sm:$0xf] %vm929, %v1302
    %1399 = vst.msk [vmem:[#allocation2 + $0x214] sm:$0xf] %vm929, %v1303
    %1400 = vst.msk [vmem:[#allocation2 + $0x218] sm:$0xf] %vm929, %v1304
    %1401 = vst.msk [vmem:[#allocation2 + $0x21c] sm:$0xf] %vm929, %v1305
    %1402 = vst.msk [vmem:[#allocation2 + $0x220] sm:$0xf] %vm929, %v1306
    %1403 = vst.msk [vmem:[#allocation2 + $0x224] sm:$0xf] %vm929, %v1307
    %1404 = vst.msk [vmem:[#allocation2 + $0x228] sm:$0xf] %vm929, %v1308
    %1405 = vst.msk [vmem:[#allocation2 + $0x22c] sm:$0xf] %vm929, %v1309
    %1406 = vst.msk [vmem:[#allocation2 + $0x230] sm:$0xf] %vm929, %v1310
    %1407 = vst.msk [vmem:[#allocation2 + $0x234] sm:$0xf] %vm929, %v1311
    %1408 = vst.msk [vmem:[#allocation2 + $0x238] sm:$0xf] %vm929, %v1312
    %1409 = vst.msk [vmem:[#allocation2 + $0x23c] sm:$0xf] %vm929, %v1313
    %v1410 = vld [vmem:[#allocation3] sm:$0xff]
    %v1411 = vld [vmem:[#allocation3 + $0x8] sm:$0xff]
    %v1412 = vld [vmem:[#allocation3 + $0x10] sm:$0xff]
    %v1413 = vld [vmem:[#allocation3 + $0x18] sm:$0xff]
    %v1414 = vld [vmem:[#allocation3 + $0x20] sm:$0xf]
    %v1415 = vld [vmem:[#allocation3 + $0x24] sm:$0xff]
    %v1416 = vld [vmem:[#allocation3 + $0x2c] sm:$0xff]
    %v1417 = vld [vmem:[#allocation3 + $0x34] sm:$0xff]
    %v1418 = vld [vmem:[#allocation3 + $0x3c] sm:$0xff]
    %v1419 = vld [vmem:[#allocation3 + $0x44] sm:$0xf]
    %v1420 = vld [vmem:[#allocation3 + $0x48] sm:$0xff]
    %v1421 = vld [vmem:[#allocation3 + $0x50] sm:$0xff]
    %v1422 = vld [vmem:[#allocation3 + $0x58] sm:$0xff]
    %v1423 = vld [vmem:[#allocation3 + $0x60] sm:$0xff]
    %v1424 = vld [vmem:[#allocation3 + $0x68] sm:$0xf]
    %v1425 = vld [vmem:[#allocation3 + $0x6c] sm:$0xff]
    %v1426 = vld [vmem:[#allocation3 + $0x74] sm:$0xff]
    %v1427 = vld [vmem:[#allocation3 + $0x7c] sm:$0xff]
    %v1428 = vld [vmem:[#allocation3 + $0x84] sm:$0xff]
    %v1429 = vld [vmem:[#allocation3 + $0x8c] sm:$0xf]
    %v1430 = vld [vmem:[#allocation3 + $0x90] sm:$0xff]
    %v1431 = vld [vmem:[#allocation3 + $0x98] sm:$0xff]
    %v1432 = vld [vmem:[#allocation3 + $0xa0] sm:$0xff]
    %v1433 = vld [vmem:[#allocation3 + $0xa8] sm:$0xff]
    %v1434 = vld [vmem:[#allocation3 + $0xb0] sm:$0xf]
    %v1435 = vld [vmem:[#allocation3 + $0xb4] sm:$0xff]
    %v1436 = vld [vmem:[#allocation3 + $0xbc] sm:$0xff]
    %v1437 = vld [vmem:[#allocation3 + $0xc4] sm:$0xff]
    %v1438 = vld [vmem:[#allocation3 + $0xcc] sm:$0xff]
    %v1439 = vld [vmem:[#allocation3 + $0xd4] sm:$0xf]
    %v1440 = vld [vmem:[#allocation3 + $0xd8] sm:$0xff]
    %v1441 = vld [vmem:[#allocation3 + $0xe0] sm:$0xff]
    %v1442 = vld [vmem:[#allocation3 + $0xe8] sm:$0xff]
    %v1443 = vld [vmem:[#allocation3 + $0xf0] sm:$0xff]
    %v1444 = vld [vmem:[#allocation3 + $0xf8] sm:$0xf]
    %v1445 = vld [vmem:[#allocation3 + $0xfc] sm:$0xff]
    %v1446 = vld [vmem:[#allocation3 + $0x104] sm:$0xff]
    %v1447 = vld [vmem:[#allocation3 + $0x10c] sm:$0xff]
    %v1448 = vld [vmem:[#allocation3 + $0x114] sm:$0xff]
    %v1449 = vld [vmem:[#allocation3 + $0x11c] sm:$0xf]
    %v1450 = vld [vmem:[#allocation3 + $0x120] sm:$0xff]
    %v1451 = vld [vmem:[#allocation3 + $0x128] sm:$0xff]
    %v1452 = vld [vmem:[#allocation3 + $0x130] sm:$0xff]
    %v1453 = vld [vmem:[#allocation3 + $0x138] sm:$0xff]
    %v1454 = vld [vmem:[#allocation3 + $0x140] sm:$0xf]
    %v1455 = vld [vmem:[#allocation3 + $0x144] sm:$0xff]
    %v1456 = vld [vmem:[#allocation3 + $0x14c] sm:$0xff]
    %v1457 = vld [vmem:[#allocation3 + $0x154] sm:$0xff]
    %v1458 = vld [vmem:[#allocation3 + $0x15c] sm:$0xff]
    %v1459 = vld [vmem:[#allocation3 + $0x164] sm:$0xf]
    %v1460 = vld [vmem:[#allocation3 + $0x168] sm:$0xff]
    %v1461 = vld [vmem:[#allocation3 + $0x170] sm:$0xff]
    %v1462 = vld [vmem:[#allocation3 + $0x178] sm:$0xff]
    %v1463 = vld [vmem:[#allocation3 + $0x180] sm:$0xff]
    %v1464 = vld [vmem:[#allocation3 + $0x188] sm:$0xf]
    %v1465 = vld [vmem:[#allocation3 + $0x18c] sm:$0xff]
    %v1466 = vld [vmem:[#allocation3 + $0x194] sm:$0xff]
    %v1467 = vld [vmem:[#allocation3 + $0x19c] sm:$0xff]
    %v1468 = vld [vmem:[#allocation3 + $0x1a4] sm:$0xff]
    %v1469 = vld [vmem:[#allocation3 + $0x1ac] sm:$0xf]
    %v1470 = vld [vmem:[#allocation3 + $0x1b0] sm:$0xff]
    %v1471 = vld [vmem:[#allocation3 + $0x1b8] sm:$0xff]
    %v1472 = vld [vmem:[#allocation3 + $0x1c0] sm:$0xff]
    %v1473 = vld [vmem:[#allocation3 + $0x1c8] sm:$0xff]
    %v1474 = vld [vmem:[#allocation3 + $0x1d0] sm:$0xf]
    %v1475 = vld [vmem:[#allocation3 + $0x1d4] sm:$0xff]
    %v1476 = vld [vmem:[#allocation3 + $0x1dc] sm:$0xff]
    %v1477 = vld [vmem:[#allocation3 + $0x1e4] sm:$0xff]
    %v1478 = vld [vmem:[#allocation3 + $0x1ec] sm:$0xff]
    %v1479 = vld [vmem:[#allocation3 + $0x1f4] sm:$0xf]
    %v1480 = vld [vmem:[#allocation3 + $0x1f8] sm:$0xff]
    %v1481 = vld [vmem:[#allocation3 + $0x200] sm:$0xff]
    %v1482 = vld [vmem:[#allocation3 + $0x208] sm:$0xff]
    %v1483 = vld [vmem:[#allocation3 + $0x210] sm:$0xff]
    %v1484 = vld [vmem:[#allocation3 + $0x218] sm:$0xf]
    %v1485 = vld [vmem:[#allocation3 + $0x21c] sm:$0xff]
    %v1486 = vld [vmem:[#allocation3 + $0x224] sm:$0xff]
    %v1487 = vld [vmem:[#allocation3 + $0x22c] sm:$0xff]
    %v1488 = vld [vmem:[#allocation3 + $0x234] sm:$0xff]
    %v1489 = vld [vmem:[#allocation3 + $0x23c] sm:$0xf]
    %v1490 = vld [vmem:[#allocation3 + $0x240] sm:$0xff]
    %v1491 = vld [vmem:[#allocation3 + $0x248] sm:$0xff]
    %v1492 = vld [vmem:[#allocation3 + $0x250] sm:$0xff]
    %v1493 = vld [vmem:[#allocation3 + $0x258] sm:$0xff]
    %v1494 = vld [vmem:[#allocation3 + $0x260] sm:$0xf]
    %v1495 = vld [vmem:[#allocation3 + $0x264] sm:$0xff]
    %v1496 = vld [vmem:[#allocation3 + $0x26c] sm:$0xff]
    %v1497 = vld [vmem:[#allocation3 + $0x274] sm:$0xff]
    %v1498 = vld [vmem:[#allocation3 + $0x27c] sm:$0xff]
    %v1499 = vld [vmem:[#allocation3 + $0x284] sm:$0xf]
    %v1500 = vld [vmem:[#allocation3 + $0x288] sm:$0xff]
    %v1501 = vld [vmem:[#allocation3 + $0x290] sm:$0xff]
    %v1502 = vld [vmem:[#allocation3 + $0x298] sm:$0xff]
    %v1503 = vld [vmem:[#allocation3 + $0x2a0] sm:$0xff]
    %v1504 = vld [vmem:[#allocation3 + $0x2a8] sm:$0xf]
    %v1505 = vld [vmem:[#allocation3 + $0x2ac] sm:$0xff]
    %v1506 = vld [vmem:[#allocation3 + $0x2b4] sm:$0xff]
    %v1507 = vld [vmem:[#allocation3 + $0x2bc] sm:$0xff]
    %v1508 = vld [vmem:[#allocation3 + $0x2c4] sm:$0xff]
    %v1509 = vld [vmem:[#allocation3 + $0x2cc] sm:$0xf]
    %v1510 = vld [vmem:[#allocation3 + $0x2d0] sm:$0xff]
    %v1511 = vld [vmem:[#allocation3 + $0x2d8] sm:$0xff]
    %v1512 = vld [vmem:[#allocation3 + $0x2e0] sm:$0xff]
    %v1513 = vld [vmem:[#allocation3 + $0x2e8] sm:$0xff]
    %v1514 = vld [vmem:[#allocation3 + $0x2f0] sm:$0xf]
    %v1515 = vld [vmem:[#allocation3 + $0x2f4] sm:$0xff]
    %v1516 = vld [vmem:[#allocation3 + $0x2fc] sm:$0xff]
    %v1517 = vld [vmem:[#allocation3 + $0x304] sm:$0xff]
    %v1518 = vld [vmem:[#allocation3 + $0x30c] sm:$0xff]
    %v1519 = vld [vmem:[#allocation3 + $0x314] sm:$0xf]
    %v1520 = vld [vmem:[#allocation3 + $0x318] sm:$0xff]
    %v1521 = vld [vmem:[#allocation3 + $0x320] sm:$0xff]
    %v1522 = vld [vmem:[#allocation3 + $0x328] sm:$0xff]
    %v1523 = vld [vmem:[#allocation3 + $0x330] sm:$0xff]
    %v1524 = vld [vmem:[#allocation3 + $0x338] sm:$0xf]
    %v1525 = vld [vmem:[#allocation3 + $0x33c] sm:$0xff]
    %v1526 = vld [vmem:[#allocation3 + $0x344] sm:$0xff]
    %v1527 = vld [vmem:[#allocation3 + $0x34c] sm:$0xff]
    %v1528 = vld [vmem:[#allocation3 + $0x354] sm:$0xff]
    %v1529 = vld [vmem:[#allocation3 + $0x35c] sm:$0xf]
    %v1530 = vld [vmem:[#allocation3 + $0x360] sm:$0xff]
    %v1531 = vld [vmem:[#allocation3 + $0x368] sm:$0xff]
    %v1532 = vld [vmem:[#allocation3 + $0x370] sm:$0xff]
    %v1533 = vld [vmem:[#allocation3 + $0x378] sm:$0xff]
    %v1534 = vld [vmem:[#allocation3 + $0x380] sm:$0xf]
    %v1535 = vld [vmem:[#allocation3 + $0x384] sm:$0xff]
    %v1536 = vld [vmem:[#allocation3 + $0x38c] sm:$0xff]
    %v1537 = vld [vmem:[#allocation3 + $0x394] sm:$0xff]
    %v1538 = vld [vmem:[#allocation3 + $0x39c] sm:$0xff]
    %v1539 = vld [vmem:[#allocation3 + $0x3a4] sm:$0xf]
    %v1540 = vld [vmem:[#allocation3 + $0x3a8] sm:$0xff]
    %v1541 = vld [vmem:[#allocation3 + $0x3b0] sm:$0xff]
    %v1542 = vld [vmem:[#allocation3 + $0x3b8] sm:$0xff]
    %v1543 = vld [vmem:[#allocation3 + $0x3c0] sm:$0xff]
    %v1544 = vld [vmem:[#allocation3 + $0x3c8] sm:$0xf]
    %v1545 = vld [vmem:[#allocation3 + $0x3cc] sm:$0xff]
    %v1546 = vld [vmem:[#allocation3 + $0x3d4] sm:$0xff]
    %v1547 = vld [vmem:[#allocation3 + $0x3dc] sm:$0xff]
    %v1548 = vld [vmem:[#allocation3 + $0x3e4] sm:$0xff]
    %v1549 = vld [vmem:[#allocation3 + $0x3ec] sm:$0xf]
    %v1550 = vld [vmem:[#allocation3 + $0x3f0] sm:$0xff]
    %v1551 = vld [vmem:[#allocation3 + $0x3f8] sm:$0xff]
    %v1552 = vld [vmem:[#allocation3 + $0x400] sm:$0xff]
    %v1553 = vld [vmem:[#allocation3 + $0x408] sm:$0xff]
    %v1554 = vld [vmem:[#allocation3 + $0x410] sm:$0xf]
    %v1555 = vld [vmem:[#allocation3 + $0x414] sm:$0xff]
    %v1556 = vld [vmem:[#allocation3 + $0x41c] sm:$0xff]
    %v1557 = vld [vmem:[#allocation3 + $0x424] sm:$0xff]
    %v1558 = vld [vmem:[#allocation3 + $0x42c] sm:$0xff]
    %v1559 = vld [vmem:[#allocation3 + $0x434] sm:$0xf]
    %v1560 = vld [vmem:[#allocation3 + $0x438] sm:$0xff]
    %v1561 = vld [vmem:[#allocation3 + $0x440] sm:$0xff]
    %v1562 = vld [vmem:[#allocation3 + $0x448] sm:$0xff]
    %v1563 = vld [vmem:[#allocation3 + $0x450] sm:$0xff]
    %v1564 = vld [vmem:[#allocation3 + $0x458] sm:$0xf]
    %v1565 = vld [vmem:[#allocation3 + $0x45c] sm:$0xff]
    %v1566 = vld [vmem:[#allocation3 + $0x464] sm:$0xff]
    %v1567 = vld [vmem:[#allocation3 + $0x46c] sm:$0xff]
    %v1568 = vld [vmem:[#allocation3 + $0x474] sm:$0xff]
    %v1569 = vld [vmem:[#allocation3 + $0x47c] sm:$0xf]
    %v1570 = vld [vmem:[#allocation3 + $0x480] sm:$0xff]
    %v1571 = vld [vmem:[#allocation3 + $0x488] sm:$0xff]
    %v1572 = vld [vmem:[#allocation3 + $0x490] sm:$0xff]
    %v1573 = vld [vmem:[#allocation3 + $0x498] sm:$0xff]
    %v1574 = vld [vmem:[#allocation3 + $0x4a0] sm:$0xf]
    %v1575 = vld [vmem:[#allocation3 + $0x4a4] sm:$0xff]
    %v1576 = vld [vmem:[#allocation3 + $0x4ac] sm:$0xff]
    %v1577 = vld [vmem:[#allocation3 + $0x4b4] sm:$0xff]
    %v1578 = vld [vmem:[#allocation3 + $0x4bc] sm:$0xff]
    %v1579 = vld [vmem:[#allocation3 + $0x4c4] sm:$0xf]
    %v1580 = vld [vmem:[#allocation3 + $0x4c8] sm:$0xff]
    %v1581 = vld [vmem:[#allocation3 + $0x4d0] sm:$0xff]
    %v1582 = vld [vmem:[#allocation3 + $0x4d8] sm:$0xff]
    %v1583 = vld [vmem:[#allocation3 + $0x4e0] sm:$0xff]
    %v1584 = vld [vmem:[#allocation3 + $0x4e8] sm:$0xf]
    %v1585 = vld [vmem:[#allocation3 + $0x4ec] sm:$0xff]
    %v1586 = vld [vmem:[#allocation3 + $0x4f4] sm:$0xff]
    %v1587 = vld [vmem:[#allocation3 + $0x4fc] sm:$0xff]
    %v1588 = vld [vmem:[#allocation3 + $0x504] sm:$0xff]
    %v1589 = vld [vmem:[#allocation3 + $0x50c] sm:$0xf]
    %v1590 = vld [vmem:[#allocation3 + $0x510] sm:$0xff]
    %v1591 = vld [vmem:[#allocation3 + $0x518] sm:$0xff]
    %v1592 = vld [vmem:[#allocation3 + $0x520] sm:$0xff]
    %v1593 = vld [vmem:[#allocation3 + $0x528] sm:$0xff]
    %v1594 = vld [vmem:[#allocation3 + $0x530] sm:$0xf]
    %v1595 = vld [vmem:[#allocation3 + $0x534] sm:$0xff]
    %v1596 = vld [vmem:[#allocation3 + $0x53c] sm:$0xff]
    %v1597 = vld [vmem:[#allocation3 + $0x544] sm:$0xff]
    %v1598 = vld [vmem:[#allocation3 + $0x54c] sm:$0xff]
    %v1599 = vld [vmem:[#allocation3 + $0x554] sm:$0xf]
    %v1600 = vld [vmem:[#allocation3 + $0x558] sm:$0xff]
    %v1601 = vld [vmem:[#allocation3 + $0x560] sm:$0xff]
    %v1602 = vld [vmem:[#allocation3 + $0x568] sm:$0xff]
    %v1603 = vld [vmem:[#allocation3 + $0x570] sm:$0xff]
    %v1604 = vld [vmem:[#allocation3 + $0x578] sm:$0xf]
    %v1605 = vld [vmem:[#allocation3 + $0x57c] sm:$0xff]
    %v1606 = vld [vmem:[#allocation3 + $0x584] sm:$0xff]
    %v1607 = vld [vmem:[#allocation3 + $0x58c] sm:$0xff]
    %v1608 = vld [vmem:[#allocation3 + $0x594] sm:$0xff]
    %v1609 = vld [vmem:[#allocation3 + $0x59c] sm:$0xf]
    %v1610 = vld [vmem:[#allocation3 + $0x5a0] sm:$0xff]
    %v1611 = vld [vmem:[#allocation3 + $0x5a8] sm:$0xff]
    %v1612 = vld [vmem:[#allocation3 + $0x5b0] sm:$0xff]
    %v1613 = vld [vmem:[#allocation3 + $0x5b8] sm:$0xff]
    %v1614 = vld [vmem:[#allocation3 + $0x5c0] sm:$0xf]
    %v1615 = vld [vmem:[#allocation3 + $0x5c4] sm:$0xff]
    %v1616 = vld [vmem:[#allocation3 + $0x5cc] sm:$0xff]
    %v1617 = vld [vmem:[#allocation3 + $0x5d4] sm:$0xff]
    %v1618 = vld [vmem:[#allocation3 + $0x5dc] sm:$0xff]
    %v1619 = vld [vmem:[#allocation3 + $0x5e4] sm:$0xf]
    %v1620 = vld [vmem:[#allocation3 + $0x5e8] sm:$0xff]
    %v1621 = vld [vmem:[#allocation3 + $0x5f0] sm:$0xff]
    %v1622 = vld [vmem:[#allocation3 + $0x5f8] sm:$0xff]
    %v1623 = vld [vmem:[#allocation3 + $0x600] sm:$0xff]
    %v1624 = vld [vmem:[#allocation3 + $0x608] sm:$0xf]
    %v1625 = vld [vmem:[#allocation3 + $0x60c] sm:$0xff]
    %v1626 = vld [vmem:[#allocation3 + $0x614] sm:$0xff]
    %v1627 = vld [vmem:[#allocation3 + $0x61c] sm:$0xff]
    %v1628 = vld [vmem:[#allocation3 + $0x624] sm:$0xff]
    %v1629 = vld [vmem:[#allocation3 + $0x62c] sm:$0xf]
    %v1630 = vld [vmem:[#allocation3 + $0x630] sm:$0xff]
    %v1631 = vld [vmem:[#allocation3 + $0x638] sm:$0xff]
    %v1632 = vld [vmem:[#allocation3 + $0x640] sm:$0xff]
    %v1633 = vld [vmem:[#allocation3 + $0x648] sm:$0xff]
    %v1634 = vld [vmem:[#allocation3 + $0x650] sm:$0xf]
    %v1635 = vld [vmem:[#allocation3 + $0x654] sm:$0xff]
    %v1636 = vld [vmem:[#allocation3 + $0x65c] sm:$0xff]
    %v1637 = vld [vmem:[#allocation3 + $0x664] sm:$0xff]
    %v1638 = vld [vmem:[#allocation3 + $0x66c] sm:$0xff]
    %v1639 = vld [vmem:[#allocation3 + $0x674] sm:$0xf]
    %v1640 = vld [vmem:[#allocation3 + $0x678] sm:$0xff]
    %v1641 = vld [vmem:[#allocation3 + $0x680] sm:$0xff]
    %v1642 = vld [vmem:[#allocation3 + $0x688] sm:$0xff]
    %v1643 = vld [vmem:[#allocation3 + $0x690] sm:$0xff]
    %v1644 = vld [vmem:[#allocation3 + $0x698] sm:$0xf]
    %v1645 = vld [vmem:[#allocation3 + $0x69c] sm:$0xff]
    %v1646 = vld [vmem:[#allocation3 + $0x6a4] sm:$0xff]
    %v1647 = vld [vmem:[#allocation3 + $0x6ac] sm:$0xff]
    %v1648 = vld [vmem:[#allocation3 + $0x6b4] sm:$0xff]
    %v1649 = vld [vmem:[#allocation3 + $0x6bc] sm:$0xf]
    %v1650 = vld [vmem:[#allocation2] sm:$0xf]
    %v1651 = vld [vmem:[#allocation2 + $0x4] sm:$0xf]
    %v1652 = vld [vmem:[#allocation2 + $0x8] sm:$0xf]
    %v1653 = vld [vmem:[#allocation2 + $0xc] sm:$0xf]
    %v1654 = vld [vmem:[#allocation2 + $0x10] sm:$0xf]
    %v1655 = vld [vmem:[#allocation2 + $0x14] sm:$0xf]
    %v1656 = vld [vmem:[#allocation2 + $0x18] sm:$0xf]
    %v1657 = vld [vmem:[#allocation2 + $0x1c] sm:$0xf]
    %v1658 = vld [vmem:[#allocation2 + $0x20] sm:$0xf]
    %v1659 = vld [vmem:[#allocation2 + $0x24] sm:$0xf]
    %v1660 = vld [vmem:[#allocation2 + $0x28] sm:$0xf]
    %v1661 = vld [vmem:[#allocation2 + $0x2c] sm:$0xf]
    %v1662 = vld [vmem:[#allocation2 + $0x30] sm:$0xf]
    %v1663 = vld [vmem:[#allocation2 + $0x34] sm:$0xf]
    %v1664 = vld [vmem:[#allocation2 + $0x38] sm:$0xf]
    %v1665 = vld [vmem:[#allocation2 + $0x3c] sm:$0xf]
    %v1666 = vld [vmem:[#allocation2 + $0x40] sm:$0xf]
    %v1667 = vld [vmem:[#allocation2 + $0x44] sm:$0xf]
    %v1668 = vld [vmem:[#allocation2 + $0x48] sm:$0xf]
    %v1669 = vld [vmem:[#allocation2 + $0x4c] sm:$0xf]
    %v1670 = vld [vmem:[#allocation2 + $0x50] sm:$0xf]
    %v1671 = vld [vmem:[#allocation2 + $0x54] sm:$0xf]
    %v1672 = vld [vmem:[#allocation2 + $0x58] sm:$0xf]
    %v1673 = vld [vmem:[#allocation2 + $0x5c] sm:$0xf]
    %v1674 = vld [vmem:[#allocation2 + $0x60] sm:$0xf]
    %v1675 = vld [vmem:[#allocation2 + $0x64] sm:$0xf]
    %v1676 = vld [vmem:[#allocation2 + $0x68] sm:$0xf]
    %v1677 = vld [vmem:[#allocation2 + $0x6c] sm:$0xf]
    %v1678 = vld [vmem:[#allocation2 + $0x70] sm:$0xf]
    %v1679 = vld [vmem:[#allocation2 + $0x74] sm:$0xf]
    %v1680 = vld [vmem:[#allocation2 + $0x78] sm:$0xf]
    %v1681 = vld [vmem:[#allocation2 + $0x7c] sm:$0xf]
    %v1682 = vld [vmem:[#allocation2 + $0x80] sm:$0xf]
    %v1683 = vld [vmem:[#allocation2 + $0x84] sm:$0xf]
    %v1684 = vld [vmem:[#allocation2 + $0x88] sm:$0xf]
    %v1685 = vld [vmem:[#allocation2 + $0x8c] sm:$0xf]
    %v1686 = vld [vmem:[#allocation2 + $0x90] sm:$0xf]
    %v1687 = vld [vmem:[#allocation2 + $0x94] sm:$0xf]
    %v1688 = vld [vmem:[#allocation2 + $0x98] sm:$0xf]
    %v1689 = vld [vmem:[#allocation2 + $0x9c] sm:$0xf]
    %v1690 = vld [vmem:[#allocation2 + $0xa0] sm:$0xf]
    %v1691 = vld [vmem:[#allocation2 + $0xa4] sm:$0xf]
    %v1692 = vld [vmem:[#allocation2 + $0xa8] sm:$0xf]
    %v1693 = vld [vmem:[#allocation2 + $0xac] sm:$0xf]
    %v1694 = vld [vmem:[#allocation2 + $0xb0] sm:$0xf]
    %v1695 = vld [vmem:[#allocation2 + $0xb4] sm:$0xf]
    %v1696 = vld [vmem:[#allocation2 + $0xb8] sm:$0xf]
    %v1697 = vld [vmem:[#allocation2 + $0xbc] sm:$0xf]
    %v1698 = vld [vmem:[#allocation2 + $0xc0] sm:$0xf]
    %v1699 = vld [vmem:[#allocation2 + $0xc4] sm:$0xf]
    %v1700 = vld [vmem:[#allocation2 + $0xc8] sm:$0xf]
    %v1701 = vld [vmem:[#allocation2 + $0xcc] sm:$0xf]
    %v1702 = vld [vmem:[#allocation2 + $0xd0] sm:$0xf]
    %v1703 = vld [vmem:[#allocation2 + $0xd4] sm:$0xf]
    %v1704 = vld [vmem:[#allocation2 + $0xd8] sm:$0xf]
    %v1705 = vld [vmem:[#allocation2 + $0xdc] sm:$0xf]
    %v1706 = vld [vmem:[#allocation2 + $0xe0] sm:$0xf]
    %v1707 = vld [vmem:[#allocation2 + $0xe4] sm:$0xf]
    %v1708 = vld [vmem:[#allocation2 + $0xe8] sm:$0xf]
    %v1709 = vld [vmem:[#allocation2 + $0xec] sm:$0xf]
    %v1710 = vld [vmem:[#allocation2 + $0xf0] sm:$0xf]
    %v1711 = vld [vmem:[#allocation2 + $0xf4] sm:$0xf]
    %v1712 = vld [vmem:[#allocation2 + $0xf8] sm:$0xf]
    %v1713 = vld [vmem:[#allocation2 + $0xfc] sm:$0xf]
    %v1714 = vld [vmem:[#allocation2 + $0x100] sm:$0xf]
    %v1715 = vld [vmem:[#allocation2 + $0x104] sm:$0xf]
    %v1716 = vld [vmem:[#allocation2 + $0x108] sm:$0xf]
    %v1717 = vld [vmem:[#allocation2 + $0x10c] sm:$0xf]
    %v1718 = vld [vmem:[#allocation2 + $0x110] sm:$0xf]
    %v1719 = vld [vmem:[#allocation2 + $0x114] sm:$0xf]
    %v1720 = vld [vmem:[#allocation2 + $0x118] sm:$0xf]
    %v1721 = vld [vmem:[#allocation2 + $0x11c] sm:$0xf]
    %v1722 = vld [vmem:[#allocation2 + $0x120] sm:$0xf]
    %v1723 = vld [vmem:[#allocation2 + $0x124] sm:$0xf]
    %v1724 = vld [vmem:[#allocation2 + $0x128] sm:$0xf]
    %v1725 = vld [vmem:[#allocation2 + $0x12c] sm:$0xf]
    %v1726 = vld [vmem:[#allocation2 + $0x130] sm:$0xf]
    %v1727 = vld [vmem:[#allocation2 + $0x134] sm:$0xf]
    %v1728 = vld [vmem:[#allocation2 + $0x138] sm:$0xf]
    %v1729 = vld [vmem:[#allocation2 + $0x13c] sm:$0xf]
    %v1730 = vld [vmem:[#allocation2 + $0x140] sm:$0xf]
    %v1731 = vld [vmem:[#allocation2 + $0x144] sm:$0xf]
    %v1732 = vld [vmem:[#allocation2 + $0x148] sm:$0xf]
    %v1733 = vld [vmem:[#allocation2 + $0x14c] sm:$0xf]
    %v1734 = vld [vmem:[#allocation2 + $0x150] sm:$0xf]
    %v1735 = vld [vmem:[#allocation2 + $0x154] sm:$0xf]
    %v1736 = vld [vmem:[#allocation2 + $0x158] sm:$0xf]
    %v1737 = vld [vmem:[#allocation2 + $0x15c] sm:$0xf]
    %v1738 = vld [vmem:[#allocation2 + $0x160] sm:$0xf]
    %v1739 = vld [vmem:[#allocation2 + $0x164] sm:$0xf]
    %v1740 = vld [vmem:[#allocation2 + $0x168] sm:$0xf]
    %v1741 = vld [vmem:[#allocation2 + $0x16c] sm:$0xf]
    %v1742 = vld [vmem:[#allocation2 + $0x170] sm:$0xf]
    %v1743 = vld [vmem:[#allocation2 + $0x174] sm:$0xf]
    %v1744 = vld [vmem:[#allocation2 + $0x178] sm:$0xf]
    %v1745 = vld [vmem:[#allocation2 + $0x17c] sm:$0xf]
    %v1746 = vld [vmem:[#allocation2 + $0x180] sm:$0xf]
    %v1747 = vld [vmem:[#allocation2 + $0x184] sm:$0xf]
    %v1748 = vld [vmem:[#allocation2 + $0x188] sm:$0xf]
    %v1749 = vld [vmem:[#allocation2 + $0x18c] sm:$0xf]
    %v1750 = vld [vmem:[#allocation2 + $0x190] sm:$0xf]
    %v1751 = vld [vmem:[#allocation2 + $0x194] sm:$0xf]
    %v1752 = vld [vmem:[#allocation2 + $0x198] sm:$0xf]
    %v1753 = vld [vmem:[#allocation2 + $0x19c] sm:$0xf]
    %v1754 = vld [vmem:[#allocation2 + $0x1a0] sm:$0xf]
    %v1755 = vld [vmem:[#allocation2 + $0x1a4] sm:$0xf]
    %v1756 = vld [vmem:[#allocation2 + $0x1a8] sm:$0xf]
    %v1757 = vld [vmem:[#allocation2 + $0x1ac] sm:$0xf]
    %v1758 = vld [vmem:[#allocation2 + $0x1b0] sm:$0xf]
    %v1759 = vld [vmem:[#allocation2 + $0x1b4] sm:$0xf]
    %v1760 = vld [vmem:[#allocation2 + $0x1b8] sm:$0xf]
    %v1761 = vld [vmem:[#allocation2 + $0x1bc] sm:$0xf]
    %v1762 = vld [vmem:[#allocation2 + $0x1c0] sm:$0xf]
    %v1763 = vld [vmem:[#allocation2 + $0x1c4] sm:$0xf]
    %v1764 = vld [vmem:[#allocation2 + $0x1c8] sm:$0xf]
    %v1765 = vld [vmem:[#allocation2 + $0x1cc] sm:$0xf]
    %v1766 = vld [vmem:[#allocation2 + $0x1d0] sm:$0xf]
    %v1767 = vld [vmem:[#allocation2 + $0x1d4] sm:$0xf]
    %v1768 = vld [vmem:[#allocation2 + $0x1d8] sm:$0xf]
    %v1769 = vld [vmem:[#allocation2 + $0x1dc] sm:$0xf]
    %v1770 = vld [vmem:[#allocation2 + $0x1e0] sm:$0xf]
    %v1771 = vld [vmem:[#allocation2 + $0x1e4] sm:$0xf]
    %v1772 = vld [vmem:[#allocation2 + $0x1e8] sm:$0xf]
    %v1773 = vld [vmem:[#allocation2 + $0x1ec] sm:$0xf]
    %v1774 = vld [vmem:[#allocation2 + $0x1f0] sm:$0xf]
    %v1775 = vld [vmem:[#allocation2 + $0x1f4] sm:$0xf]
    %v1776 = vld [vmem:[#allocation2 + $0x1f8] sm:$0xf]
    %v1777 = vld [vmem:[#allocation2 + $0x1fc] sm:$0xf]
    %v1778 = vld [vmem:[#allocation2 + $0x200] sm:$0xf]
    %v1779 = vld [vmem:[#allocation2 + $0x204] sm:$0xf]
    %v1780 = vld [vmem:[#allocation2 + $0x208] sm:$0xf]
    %v1781 = vld [vmem:[#allocation2 + $0x20c] sm:$0xf]
    %v1782 = vld [vmem:[#allocation2 + $0x210] sm:$0xf]
    %v1783 = vld [vmem:[#allocation2 + $0x214] sm:$0xf]
    %v1784 = vld [vmem:[#allocation2 + $0x218] sm:$0xf]
    %v1785 = vld [vmem:[#allocation2 + $0x21c] sm:$0xf]
    %v1786 = vld [vmem:[#allocation2 + $0x220] sm:$0xf]
    %v1787 = vld [vmem:[#allocation2 + $0x224] sm:$0xf]
    %v1788 = vld [vmem:[#allocation2 + $0x228] sm:$0xf]
    %v1789 = vld [vmem:[#allocation2 + $0x22c] sm:$0xf]
    %v1790 = vld [vmem:[#allocation2 + $0x230] sm:$0xf]
    %v1791 = vld [vmem:[#allocation2 + $0x234] sm:$0xf]
    %v1792 = vld [vmem:[#allocation2 + $0x238] sm:$0xf]
    %v1793 = vld [vmem:[#allocation2 + $0x23c] sm:$0xf]
    %v2034 = vunpack.c.l.b16 %v1410
    %v2035 = vunpack.c.h.b16 %v1410
    %v2036 = vunpack.c.l.b16 %v1411
    %v2037 = vunpack.c.h.b16 %v1411
    %v2038 = vunpack.c.l.b16 %v1412
    %v2039 = vunpack.c.h.b16 %v1412
    %v2040 = vunpack.c.l.b16 %v1413
    %v2041 = vunpack.c.h.b16 %v1413
    %v2042 = vunpack.c.l.b16 %v1414
    %v2043 = vunpack.c.l.b16 %v1415
    %v2044 = vunpack.c.h.b16 %v1415
    %v2045 = vunpack.c.l.b16 %v1416
    %v2046 = vunpack.c.h.b16 %v1416
    %v2047 = vunpack.c.l.b16 %v1417
    %v2048 = vunpack.c.h.b16 %v1417
    %v2049 = vunpack.c.l.b16 %v1418
    %v2050 = vunpack.c.h.b16 %v1418
    %v2051 = vunpack.c.l.b16 %v1419
    %v2052 = vunpack.c.l.b16 %v1420
    %v2053 = vunpack.c.h.b16 %v1420
    %v2054 = vunpack.c.l.b16 %v1421
    %v2055 = vunpack.c.h.b16 %v1421
    %v2056 = vunpack.c.l.b16 %v1422
    %v2057 = vunpack.c.h.b16 %v1422
    %v2058 = vunpack.c.l.b16 %v1423
    %v2059 = vunpack.c.h.b16 %v1423
    %v2060 = vunpack.c.l.b16 %v1424
    %v2061 = vunpack.c.l.b16 %v1425
    %v2062 = vunpack.c.h.b16 %v1425
    %v2063 = vunpack.c.l.b16 %v1426
    %v2064 = vunpack.c.h.b16 %v1426
    %v2065 = vunpack.c.l.b16 %v1427
    %v2066 = vunpack.c.h.b16 %v1427
    %v2067 = vunpack.c.l.b16 %v1428
    %v2068 = vunpack.c.h.b16 %v1428
    %v2069 = vunpack.c.l.b16 %v1429
    %v2070 = vunpack.c.l.b16 %v1430
    %v2071 = vunpack.c.h.b16 %v1430
    %v2072 = vunpack.c.l.b16 %v1431
    %v2073 = vunpack.c.h.b16 %v1431
    %v2074 = vunpack.c.l.b16 %v1432
    %v2075 = vunpack.c.h.b16 %v1432
    %v2076 = vunpack.c.l.b16 %v1433
    %v2077 = vunpack.c.h.b16 %v1433
    %v2078 = vunpack.c.l.b16 %v1434
    %v2079 = vunpack.c.l.b16 %v1435
    %v2080 = vunpack.c.h.b16 %v1435
    %v2081 = vunpack.c.l.b16 %v1436
    %v2082 = vunpack.c.h.b16 %v1436
    %v2083 = vunpack.c.l.b16 %v1437
    %v2084 = vunpack.c.h.b16 %v1437
    %v2085 = vunpack.c.l.b16 %v1438
    %v2086 = vunpack.c.h.b16 %v1438
    %v2087 = vunpack.c.l.b16 %v1439
    %v2088 = vunpack.c.l.b16 %v1440
    %v2089 = vunpack.c.h.b16 %v1440
    %v2090 = vunpack.c.l.b16 %v1441
    %v2091 = vunpack.c.h.b16 %v1441
    %v2092 = vunpack.c.l.b16 %v1442
    %v2093 = vunpack.c.h.b16 %v1442
    %v2094 = vunpack.c.l.b16 %v1443
    %v2095 = vunpack.c.h.b16 %v1443
    %v2096 = vunpack.c.l.b16 %v1444
    %v2097 = vunpack.c.l.b16 %v1445
    %v2098 = vunpack.c.h.b16 %v1445
    %v2099 = vunpack.c.l.b16 %v1446
    %v2100 = vunpack.c.h.b16 %v1446
    %v2101 = vunpack.c.l.b16 %v1447
    %v2102 = vunpack.c.h.b16 %v1447
    %v2103 = vunpack.c.l.b16 %v1448
    %v2104 = vunpack.c.h.b16 %v1448
    %v2105 = vunpack.c.l.b16 %v1449
    %v2106 = vunpack.c.l.b16 %v1450
    %v2107 = vunpack.c.h.b16 %v1450
    %v2108 = vunpack.c.l.b16 %v1451
    %v2109 = vunpack.c.h.b16 %v1451
    %v2110 = vunpack.c.l.b16 %v1452
    %v2111 = vunpack.c.h.b16 %v1452
    %v2112 = vunpack.c.l.b16 %v1453
    %v2113 = vunpack.c.h.b16 %v1453
    %v2114 = vunpack.c.l.b16 %v1454
    %v2115 = vunpack.c.l.b16 %v1455
    %v2116 = vunpack.c.h.b16 %v1455
    %v2117 = vunpack.c.l.b16 %v1456
    %v2118 = vunpack.c.h.b16 %v1456
    %v2119 = vunpack.c.l.b16 %v1457
    %v2120 = vunpack.c.h.b16 %v1457
    %v2121 = vunpack.c.l.b16 %v1458
    %v2122 = vunpack.c.h.b16 %v1458
    %v2123 = vunpack.c.l.b16 %v1459
    %v2124 = vunpack.c.l.b16 %v1460
    %v2125 = vunpack.c.h.b16 %v1460
    %v2126 = vunpack.c.l.b16 %v1461
    %v2127 = vunpack.c.h.b16 %v1461
    %v2128 = vunpack.c.l.b16 %v1462
    %v2129 = vunpack.c.h.b16 %v1462
    %v2130 = vunpack.c.l.b16 %v1463
    %v2131 = vunpack.c.h.b16 %v1463
    %v2132 = vunpack.c.l.b16 %v1464
    %v2133 = vunpack.c.l.b16 %v1465
    %v2134 = vunpack.c.h.b16 %v1465
    %v2135 = vunpack.c.l.b16 %v1466
    %v2136 = vunpack.c.h.b16 %v1466
    %v2137 = vunpack.c.l.b16 %v1467
    %v2138 = vunpack.c.h.b16 %v1467
    %v2139 = vunpack.c.l.b16 %v1468
    %v2140 = vunpack.c.h.b16 %v1468
    %v2141 = vunpack.c.l.b16 %v1469
    %v2142 = vunpack.c.l.b16 %v1470
    %v2143 = vunpack.c.h.b16 %v1470
    %v2144 = vunpack.c.l.b16 %v1471
    %v2145 = vunpack.c.h.b16 %v1471
    %v2146 = vunpack.c.l.b16 %v1472
    %v2147 = vunpack.c.h.b16 %v1472
    %v2148 = vunpack.c.l.b16 %v1473
    %v2149 = vunpack.c.h.b16 %v1473
    %v2150 = vunpack.c.l.b16 %v1474
    %v2151 = vunpack.c.l.b16 %v1475
    %v2152 = vunpack.c.h.b16 %v1475
    %v2153 = vunpack.c.l.b16 %v1476
    %v2154 = vunpack.c.h.b16 %v1476
    %v2155 = vunpack.c.l.b16 %v1477
    %v2156 = vunpack.c.h.b16 %v1477
    %v2157 = vunpack.c.l.b16 %v1478
    %v2158 = vunpack.c.h.b16 %v1478
    %v2159 = vunpack.c.l.b16 %v1479
    %v2160 = vunpack.c.l.b16 %v1480
    %v2161 = vunpack.c.h.b16 %v1480
    %v2162 = vunpack.c.l.b16 %v1481
    %v2163 = vunpack.c.h.b16 %v1481
    %v2164 = vunpack.c.l.b16 %v1482
    %v2165 = vunpack.c.h.b16 %v1482
    %v2166 = vunpack.c.l.b16 %v1483
    %v2167 = vunpack.c.h.b16 %v1483
    %v2168 = vunpack.c.l.b16 %v1484
    %v2169 = vunpack.c.l.b16 %v1485
    %v2170 = vunpack.c.h.b16 %v1485
    %v2171 = vunpack.c.l.b16 %v1486
    %v2172 = vunpack.c.h.b16 %v1486
    %v2173 = vunpack.c.l.b16 %v1487
    %v2174 = vunpack.c.h.b16 %v1487
    %v2175 = vunpack.c.l.b16 %v1488
    %v2176 = vunpack.c.h.b16 %v1488
    %v2177 = vunpack.c.l.b16 %v1489
    %v2178 = vunpack.c.l.b16 %v1490
    %v2179 = vunpack.c.h.b16 %v1490
    %v2180 = vunpack.c.l.b16 %v1491
    %v2181 = vunpack.c.h.b16 %v1491
    %v2182 = vunpack.c.l.b16 %v1492
    %v2183 = vunpack.c.h.b16 %v1492
    %v2184 = vunpack.c.l.b16 %v1493
    %v2185 = vunpack.c.h.b16 %v1493
    %v2186 = vunpack.c.l.b16 %v1494
    %v2187 = vunpack.c.l.b16 %v1495
    %v2188 = vunpack.c.h.b16 %v1495
    %v2189 = vunpack.c.l.b16 %v1496
    %v2190 = vunpack.c.h.b16 %v1496
    %v2191 = vunpack.c.l.b16 %v1497
    %v2192 = vunpack.c.h.b16 %v1497
    %v2193 = vunpack.c.l.b16 %v1498
    %v2194 = vunpack.c.h.b16 %v1498
    %v2195 = vunpack.c.l.b16 %v1499
    %v2196 = vunpack.c.l.b16 %v1500
    %v2197 = vunpack.c.h.b16 %v1500
    %v2198 = vunpack.c.l.b16 %v1501
    %v2199 = vunpack.c.h.b16 %v1501
    %v2200 = vunpack.c.l.b16 %v1502
    %v2201 = vunpack.c.h.b16 %v1502
    %v2202 = vunpack.c.l.b16 %v1503
    %v2203 = vunpack.c.h.b16 %v1503
    %v2204 = vunpack.c.l.b16 %v1504
    %v2205 = vunpack.c.l.b16 %v1505
    %v2206 = vunpack.c.h.b16 %v1505
    %v2207 = vunpack.c.l.b16 %v1506
    %v2208 = vunpack.c.h.b16 %v1506
    %v2209 = vunpack.c.l.b16 %v1507
    %v2210 = vunpack.c.h.b16 %v1507
    %v2211 = vunpack.c.l.b16 %v1508
    %v2212 = vunpack.c.h.b16 %v1508
    %v2213 = vunpack.c.l.b16 %v1509
    %v2214 = vunpack.c.l.b16 %v1510
    %v2215 = vunpack.c.h.b16 %v1510
    %v2216 = vunpack.c.l.b16 %v1511
    %v2217 = vunpack.c.h.b16 %v1511
    %v2218 = vunpack.c.l.b16 %v1512
    %v2219 = vunpack.c.h.b16 %v1512
    %v2220 = vunpack.c.l.b16 %v1513
    %v2221 = vunpack.c.h.b16 %v1513
    %v2222 = vunpack.c.l.b16 %v1514
    %v2223 = vunpack.c.l.b16 %v1515
    %v2224 = vunpack.c.h.b16 %v1515
    %v2225 = vunpack.c.l.b16 %v1516
    %v2226 = vunpack.c.h.b16 %v1516
    %v2227 = vunpack.c.l.b16 %v1517
    %v2228 = vunpack.c.h.b16 %v1517
    %v2229 = vunpack.c.l.b16 %v1518
    %v2230 = vunpack.c.h.b16 %v1518
    %v2231 = vunpack.c.l.b16 %v1519
    %v2232 = vunpack.c.l.b16 %v1520
    %v2233 = vunpack.c.h.b16 %v1520
    %v2234 = vunpack.c.l.b16 %v1521
    %v2235 = vunpack.c.h.b16 %v1521
    %v2236 = vunpack.c.l.b16 %v1522
    %v2237 = vunpack.c.h.b16 %v1522
    %v2238 = vunpack.c.l.b16 %v1523
    %v2239 = vunpack.c.h.b16 %v1523
    %v2240 = vunpack.c.l.b16 %v1524
    %v2241 = vunpack.c.l.b16 %v1525
    %v2242 = vunpack.c.h.b16 %v1525
    %v2243 = vunpack.c.l.b16 %v1526
    %v2244 = vunpack.c.h.b16 %v1526
    %v2245 = vunpack.c.l.b16 %v1527
    %v2246 = vunpack.c.h.b16 %v1527
    %v2247 = vunpack.c.l.b16 %v1528
    %v2248 = vunpack.c.h.b16 %v1528
    %v2249 = vunpack.c.l.b16 %v1529
    %v2250 = vunpack.c.l.b16 %v1530
    %v2251 = vunpack.c.h.b16 %v1530
    %v2252 = vunpack.c.l.b16 %v1531
    %v2253 = vunpack.c.h.b16 %v1531
    %v2254 = vunpack.c.l.b16 %v1532
    %v2255 = vunpack.c.h.b16 %v1532
    %v2256 = vunpack.c.l.b16 %v1533
    %v2257 = vunpack.c.h.b16 %v1533
    %v2258 = vunpack.c.l.b16 %v1534
    %v2259 = vunpack.c.l.b16 %v1535
    %v2260 = vunpack.c.h.b16 %v1535
    %v2261 = vunpack.c.l.b16 %v1536
    %v2262 = vunpack.c.h.b16 %v1536
    %v2263 = vunpack.c.l.b16 %v1537
    %v2264 = vunpack.c.h.b16 %v1537
    %v2265 = vunpack.c.l.b16 %v1538
    %v2266 = vunpack.c.h.b16 %v1538
    %v2267 = vunpack.c.l.b16 %v1539
    %v2268 = vunpack.c.l.b16 %v1540
    %v2269 = vunpack.c.h.b16 %v1540
    %v2270 = vunpack.c.l.b16 %v1541
    %v2271 = vunpack.c.h.b16 %v1541
    %v2272 = vunpack.c.l.b16 %v1542
    %v2273 = vunpack.c.h.b16 %v1542
    %v2274 = vunpack.c.l.b16 %v1543
    %v2275 = vunpack.c.h.b16 %v1543
    %v2276 = vunpack.c.l.b16 %v1544
    %v2277 = vunpack.c.l.b16 %v1545
    %v2278 = vunpack.c.h.b16 %v1545
    %v2279 = vunpack.c.l.b16 %v1546
    %v2280 = vunpack.c.h.b16 %v1546
    %v2281 = vunpack.c.l.b16 %v1547
    %v2282 = vunpack.c.h.b16 %v1547
    %v2283 = vunpack.c.l.b16 %v1548
    %v2284 = vunpack.c.h.b16 %v1548
    %v2285 = vunpack.c.l.b16 %v1549
    %v2286 = vunpack.c.l.b16 %v1550
    %v2287 = vunpack.c.h.b16 %v1550
    %v2288 = vunpack.c.l.b16 %v1551
    %v2289 = vunpack.c.h.b16 %v1551
    %v2290 = vunpack.c.l.b16 %v1552
    %v2291 = vunpack.c.h.b16 %v1552
    %v2292 = vunpack.c.l.b16 %v1553
    %v2293 = vunpack.c.h.b16 %v1553
    %v2294 = vunpack.c.l.b16 %v1554
    %v2295 = vunpack.c.l.b16 %v1555
    %v2296 = vunpack.c.h.b16 %v1555
    %v2297 = vunpack.c.l.b16 %v1556
    %v2298 = vunpack.c.h.b16 %v1556
    %v2299 = vunpack.c.l.b16 %v1557
    %v2300 = vunpack.c.h.b16 %v1557
    %v2301 = vunpack.c.l.b16 %v1558
    %v2302 = vunpack.c.h.b16 %v1558
    %v2303 = vunpack.c.l.b16 %v1559
    %v2304 = vunpack.c.l.b16 %v1560
    %v2305 = vunpack.c.h.b16 %v1560
    %v2306 = vunpack.c.l.b16 %v1561
    %v2307 = vunpack.c.h.b16 %v1561
    %v2308 = vunpack.c.l.b16 %v1562
    %v2309 = vunpack.c.h.b16 %v1562
    %v2310 = vunpack.c.l.b16 %v1563
    %v2311 = vunpack.c.h.b16 %v1563
    %v2312 = vunpack.c.l.b16 %v1564
    %v2313 = vunpack.c.l.b16 %v1565
    %v2314 = vunpack.c.h.b16 %v1565
    %v2315 = vunpack.c.l.b16 %v1566
    %v2316 = vunpack.c.h.b16 %v1566
    %v2317 = vunpack.c.l.b16 %v1567
    %v2318 = vunpack.c.h.b16 %v1567
    %v2319 = vunpack.c.l.b16 %v1568
    %v2320 = vunpack.c.h.b16 %v1568
    %v2321 = vunpack.c.l.b16 %v1569
    %v2322 = vunpack.c.l.b16 %v1570
    %v2323 = vunpack.c.h.b16 %v1570
    %v2324 = vunpack.c.l.b16 %v1571
    %v2325 = vunpack.c.h.b16 %v1571
    %v2326 = vunpack.c.l.b16 %v1572
    %v2327 = vunpack.c.h.b16 %v1572
    %v2328 = vunpack.c.l.b16 %v1573
    %v2329 = vunpack.c.h.b16 %v1573
    %v2330 = vunpack.c.l.b16 %v1574
    %v2331 = vunpack.c.l.b16 %v1575
    %v2332 = vunpack.c.h.b16 %v1575
    %v2333 = vunpack.c.l.b16 %v1576
    %v2334 = vunpack.c.h.b16 %v1576
    %v2335 = vunpack.c.l.b16 %v1577
    %v2336 = vunpack.c.h.b16 %v1577
    %v2337 = vunpack.c.l.b16 %v1578
    %v2338 = vunpack.c.h.b16 %v1578
    %v2339 = vunpack.c.l.b16 %v1579
    %v2340 = vunpack.c.l.b16 %v1580
    %v2341 = vunpack.c.h.b16 %v1580
    %v2342 = vunpack.c.l.b16 %v1581
    %v2343 = vunpack.c.h.b16 %v1581
    %v2344 = vunpack.c.l.b16 %v1582
    %v2345 = vunpack.c.h.b16 %v1582
    %v2346 = vunpack.c.l.b16 %v1583
    %v2347 = vunpack.c.h.b16 %v1583
    %v2348 = vunpack.c.l.b16 %v1584
    %v2349 = vunpack.c.l.b16 %v1585
    %v2350 = vunpack.c.h.b16 %v1585
    %v2351 = vunpack.c.l.b16 %v1586
    %v2352 = vunpack.c.h.b16 %v1586
    %v2353 = vunpack.c.l.b16 %v1587
    %v2354 = vunpack.c.h.b16 %v1587
    %v2355 = vunpack.c.l.b16 %v1588
    %v2356 = vunpack.c.h.b16 %v1588
    %v2357 = vunpack.c.l.b16 %v1589
    %v2358 = vunpack.c.l.b16 %v1590
    %v2359 = vunpack.c.h.b16 %v1590
    %v2360 = vunpack.c.l.b16 %v1591
    %v2361 = vunpack.c.h.b16 %v1591
    %v2362 = vunpack.c.l.b16 %v1592
    %v2363 = vunpack.c.h.b16 %v1592
    %v2364 = vunpack.c.l.b16 %v1593
    %v2365 = vunpack.c.h.b16 %v1593
    %v2366 = vunpack.c.l.b16 %v1594
    %v2367 = vunpack.c.l.b16 %v1595
    %v2368 = vunpack.c.h.b16 %v1595
    %v2369 = vunpack.c.l.b16 %v1596
    %v2370 = vunpack.c.h.b16 %v1596
    %v2371 = vunpack.c.l.b16 %v1597
    %v2372 = vunpack.c.h.b16 %v1597
    %v2373 = vunpack.c.l.b16 %v1598
    %v2374 = vunpack.c.h.b16 %v1598
    %v2375 = vunpack.c.l.b16 %v1599
    %v2376 = vunpack.c.l.b16 %v1600
    %v2377 = vunpack.c.h.b16 %v1600
    %v2378 = vunpack.c.l.b16 %v1601
    %v2379 = vunpack.c.h.b16 %v1601
    %v2380 = vunpack.c.l.b16 %v1602
    %v2381 = vunpack.c.h.b16 %v1602
    %v2382 = vunpack.c.l.b16 %v1603
    %v2383 = vunpack.c.h.b16 %v1603
    %v2384 = vunpack.c.l.b16 %v1604
    %v2385 = vunpack.c.l.b16 %v1605
    %v2386 = vunpack.c.h.b16 %v1605
    %v2387 = vunpack.c.l.b16 %v1606
    %v2388 = vunpack.c.h.b16 %v1606
    %v2389 = vunpack.c.l.b16 %v1607
    %v2390 = vunpack.c.h.b16 %v1607
    %v2391 = vunpack.c.l.b16 %v1608
    %v2392 = vunpack.c.h.b16 %v1608
    %v2393 = vunpack.c.l.b16 %v1609
    %v2394 = vunpack.c.l.b16 %v1610
    %v2395 = vunpack.c.h.b16 %v1610
    %v2396 = vunpack.c.l.b16 %v1611
    %v2397 = vunpack.c.h.b16 %v1611
    %v2398 = vunpack.c.l.b16 %v1612
    %v2399 = vunpack.c.h.b16 %v1612
    %v2400 = vunpack.c.l.b16 %v1613
    %v2401 = vunpack.c.h.b16 %v1613
    %v2402 = vunpack.c.l.b16 %v1614
    %v2403 = vunpack.c.l.b16 %v1615
    %v2404 = vunpack.c.h.b16 %v1615
    %v2405 = vunpack.c.l.b16 %v1616
    %v2406 = vunpack.c.h.b16 %v1616
    %v2407 = vunpack.c.l.b16 %v1617
    %v2408 = vunpack.c.h.b16 %v1617
    %v2409 = vunpack.c.l.b16 %v1618
    %v2410 = vunpack.c.h.b16 %v1618
    %v2411 = vunpack.c.l.b16 %v1619
    %v2412 = vunpack.c.l.b16 %v1620
    %v2413 = vunpack.c.h.b16 %v1620
    %v2414 = vunpack.c.l.b16 %v1621
    %v2415 = vunpack.c.h.b16 %v1621
    %v2416 = vunpack.c.l.b16 %v1622
    %v2417 = vunpack.c.h.b16 %v1622
    %v2418 = vunpack.c.l.b16 %v1623
    %v2419 = vunpack.c.h.b16 %v1623
    %v2420 = vunpack.c.l.b16 %v1624
    %v2421 = vunpack.c.l.b16 %v1625
    %v2422 = vunpack.c.h.b16 %v1625
    %v2423 = vunpack.c.l.b16 %v1626
    %v2424 = vunpack.c.h.b16 %v1626
    %v2425 = vunpack.c.l.b16 %v1627
    %v2426 = vunpack.c.h.b16 %v1627
    %v2427 = vunpack.c.l.b16 %v1628
    %v2428 = vunpack.c.h.b16 %v1628
    %v2429 = vunpack.c.l.b16 %v1629
    %v2430 = vunpack.c.l.b16 %v1630
    %v2431 = vunpack.c.h.b16 %v1630
    %v2432 = vunpack.c.l.b16 %v1631
    %v2433 = vunpack.c.h.b16 %v1631
    %v2434 = vunpack.c.l.b16 %v1632
    %v2435 = vunpack.c.h.b16 %v1632
    %v2436 = vunpack.c.l.b16 %v1633
    %v2437 = vunpack.c.h.b16 %v1633
    %v2438 = vunpack.c.l.b16 %v1634
    %v2439 = vunpack.c.l.b16 %v1635
    %v2440 = vunpack.c.h.b16 %v1635
    %v2441 = vunpack.c.l.b16 %v1636
    %v2442 = vunpack.c.h.b16 %v1636
    %v2443 = vunpack.c.l.b16 %v1637
    %v2444 = vunpack.c.h.b16 %v1637
    %v2445 = vunpack.c.l.b16 %v1638
    %v2446 = vunpack.c.h.b16 %v1638
    %v2447 = vunpack.c.l.b16 %v1639
    %v2448 = vunpack.c.l.b16 %v1640
    %v2449 = vunpack.c.h.b16 %v1640
    %v2450 = vunpack.c.l.b16 %v1641
    %v2451 = vunpack.c.h.b16 %v1641
    %v2452 = vunpack.c.l.b16 %v1642
    %v2453 = vunpack.c.h.b16 %v1642
    %v2454 = vunpack.c.l.b16 %v1643
    %v2455 = vunpack.c.h.b16 %v1643
    %v2456 = vunpack.c.l.b16 %v1644
    %v2457 = vunpack.c.l.b16 %v1645
    %v2458 = vunpack.c.h.b16 %v1645
    %v2459 = vunpack.c.l.b16 %v1646
    %v2460 = vunpack.c.h.b16 %v1646
    %v2461 = vunpack.c.l.b16 %v1647
    %v2462 = vunpack.c.h.b16 %v1647
    %v2463 = vunpack.c.l.b16 %v1648
    %v2464 = vunpack.c.h.b16 %v1648
    %v2465 = vunpack.c.l.b16 %v1649
    %v2466 = vpack.c.b16 %v2043, %v2034
    %v2467 = vpack.c.b16 %v2044, %v2035
    %v2468 = vpack.c.b16 %v2045, %v2036
    %v2469 = vpack.c.b16 %v2046, %v2037
    %v2470 = vpack.c.b16 %v2047, %v2038
    %v2471 = vpack.c.b16 %v2048, %v2039
    %v2472 = vpack.c.b16 %v2049, %v2040
    %v2473 = vpack.c.b16 %v2050, %v2041
    %v2474 = vpack.c.b16 %v2051, %v2042
    %v2475 = vpack.c.b16 %v2061, %v2052
    %v2476 = vpack.c.b16 %v2062, %v2053
    %v2477 = vpack.c.b16 %v2063, %v2054
    %v2478 = vpack.c.b16 %v2064, %v2055
    %v2479 = vpack.c.b16 %v2065, %v2056
    %v2480 = vpack.c.b16 %v2066, %v2057
    %v2481 = vpack.c.b16 %v2067, %v2058
    %v2482 = vpack.c.b16 %v2068, %v2059
    %v2483 = vpack.c.b16 %v2069, %v2060
    %v2484 = vpack.c.b16 %v2079, %v2070
    %v2485 = vpack.c.b16 %v2080, %v2071
    %v2486 = vpack.c.b16 %v2081, %v2072
    %v2487 = vpack.c.b16 %v2082, %v2073
    %v2488 = vpack.c.b16 %v2083, %v2074
    %v2489 = vpack.c.b16 %v2084, %v2075
    %v2490 = vpack.c.b16 %v2085, %v2076
    %v2491 = vpack.c.b16 %v2086, %v2077
    %v2492 = vpack.c.b16 %v2087, %v2078
    %v2493 = vpack.c.b16 %v2097, %v2088
    %v2494 = vpack.c.b16 %v2098, %v2089
    %v2495 = vpack.c.b16 %v2099, %v2090
    %v2496 = vpack.c.b16 %v2100, %v2091
    %v2497 = vpack.c.b16 %v2101, %v2092
    %v2498 = vpack.c.b16 %v2102, %v2093
    %v2499 = vpack.c.b16 %v2103, %v2094
    %v2500 = vpack.c.b16 %v2104, %v2095
    %v2501 = vpack.c.b16 %v2105, %v2096
    %v2502 = vpack.c.b16 %v2115, %v2106
    %v2503 = vpack.c.b16 %v2116, %v2107
    %v2504 = vpack.c.b16 %v2117, %v2108
    %v2505 = vpack.c.b16 %v2118, %v2109
    %v2506 = vpack.c.b16 %v2119, %v2110
    %v2507 = vpack.c.b16 %v2120, %v2111
    %v2508 = vpack.c.b16 %v2121, %v2112
    %v2509 = vpack.c.b16 %v2122, %v2113
    %v2510 = vpack.c.b16 %v2123, %v2114
    %v2511 = vpack.c.b16 %v2133, %v2124
    %v2512 = vpack.c.b16 %v2134, %v2125
    %v2513 = vpack.c.b16 %v2135, %v2126
    %v2514 = vpack.c.b16 %v2136, %v2127
    %v2515 = vpack.c.b16 %v2137, %v2128
    %v2516 = vpack.c.b16 %v2138, %v2129
    %v2517 = vpack.c.b16 %v2139, %v2130
    %v2518 = vpack.c.b16 %v2140, %v2131
    %v2519 = vpack.c.b16 %v2141, %v2132
    %v2520 = vpack.c.b16 %v2151, %v2142
    %v2521 = vpack.c.b16 %v2152, %v2143
    %v2522 = vpack.c.b16 %v2153, %v2144
    %v2523 = vpack.c.b16 %v2154, %v2145
    %v2524 = vpack.c.b16 %v2155, %v2146
    %v2525 = vpack.c.b16 %v2156, %v2147
    %v2526 = vpack.c.b16 %v2157, %v2148
    %v2527 = vpack.c.b16 %v2158, %v2149
    %v2528 = vpack.c.b16 %v2159, %v2150
    %v2529 = vpack.c.b16 %v2169, %v2160
    %v2530 = vpack.c.b16 %v2170, %v2161
    %v2531 = vpack.c.b16 %v2171, %v2162
    %v2532 = vpack.c.b16 %v2172, %v2163
    %v2533 = vpack.c.b16 %v2173, %v2164
    %v2534 = vpack.c.b16 %v2174, %v2165
    %v2535 = vpack.c.b16 %v2175, %v2166
    %v2536 = vpack.c.b16 %v2176, %v2167
    %v2537 = vpack.c.b16 %v2177, %v2168
    %v2538 = vpack.c.b16 %v2187, %v2178
    %v2539 = vpack.c.b16 %v2188, %v2179
    %v2540 = vpack.c.b16 %v2189, %v2180
    %v2541 = vpack.c.b16 %v2190, %v2181
    %v2542 = vpack.c.b16 %v2191, %v2182
    %v2543 = vpack.c.b16 %v2192, %v2183
    %v2544 = vpack.c.b16 %v2193, %v2184
    %v2545 = vpack.c.b16 %v2194, %v2185
    %v2546 = vpack.c.b16 %v2195, %v2186
    %v2547 = vpack.c.b16 %v2205, %v2196
    %v2548 = vpack.c.b16 %v2206, %v2197
    %v2549 = vpack.c.b16 %v2207, %v2198
    %v2550 = vpack.c.b16 %v2208, %v2199
    %v2551 = vpack.c.b16 %v2209, %v2200
    %v2552 = vpack.c.b16 %v2210, %v2201
    %v2553 = vpack.c.b16 %v2211, %v2202
    %v2554 = vpack.c.b16 %v2212, %v2203
    %v2555 = vpack.c.b16 %v2213, %v2204
    %v2556 = vpack.c.b16 %v2223, %v2214
    %v2557 = vpack.c.b16 %v2224, %v2215
    %v2558 = vpack.c.b16 %v2225, %v2216
    %v2559 = vpack.c.b16 %v2226, %v2217
    %v2560 = vpack.c.b16 %v2227, %v2218
    %v2561 = vpack.c.b16 %v2228, %v2219
    %v2562 = vpack.c.b16 %v2229, %v2220
    %v2563 = vpack.c.b16 %v2230, %v2221
    %v2564 = vpack.c.b16 %v2231, %v2222
    %v2565 = vpack.c.b16 %v2241, %v2232
    %v2566 = vpack.c.b16 %v2242, %v2233
    %v2567 = vpack.c.b16 %v2243, %v2234
    %v2568 = vpack.c.b16 %v2244, %v2235
    %v2569 = vpack.c.b16 %v2245, %v2236
    %v2570 = vpack.c.b16 %v2246, %v2237
    %v2571 = vpack.c.b16 %v2247, %v2238
    %v2572 = vpack.c.b16 %v2248, %v2239
    %v2573 = vpack.c.b16 %v2249, %v2240
    %v2574 = vpack.c.b16 %v2259, %v2250
    %v2575 = vpack.c.b16 %v2260, %v2251
    %v2576 = vpack.c.b16 %v2261, %v2252
    %v2577 = vpack.c.b16 %v2262, %v2253
    %v2578 = vpack.c.b16 %v2263, %v2254
    %v2579 = vpack.c.b16 %v2264, %v2255
    %v2580 = vpack.c.b16 %v2265, %v2256
    %v2581 = vpack.c.b16 %v2266, %v2257
    %v2582 = vpack.c.b16 %v2267, %v2258
    %v2583 = vpack.c.b16 %v2277, %v2268
    %v2584 = vpack.c.b16 %v2278, %v2269
    %v2585 = vpack.c.b16 %v2279, %v2270
    %v2586 = vpack.c.b16 %v2280, %v2271
    %v2587 = vpack.c.b16 %v2281, %v2272
    %v2588 = vpack.c.b16 %v2282, %v2273
    %v2589 = vpack.c.b16 %v2283, %v2274
    %v2590 = vpack.c.b16 %v2284, %v2275
    %v2591 = vpack.c.b16 %v2285, %v2276
    %v2592 = vpack.c.b16 %v2295, %v2286
    %v2593 = vpack.c.b16 %v2296, %v2287
    %v2594 = vpack.c.b16 %v2297, %v2288
    %v2595 = vpack.c.b16 %v2298, %v2289
    %v2596 = vpack.c.b16 %v2299, %v2290
    %v2597 = vpack.c.b16 %v2300, %v2291
    %v2598 = vpack.c.b16 %v2301, %v2292
    %v2599 = vpack.c.b16 %v2302, %v2293
    %v2600 = vpack.c.b16 %v2303, %v2294
    %v2601 = vpack.c.b16 %v2313, %v2304
    %v2602 = vpack.c.b16 %v2314, %v2305
    %v2603 = vpack.c.b16 %v2315, %v2306
    %v2604 = vpack.c.b16 %v2316, %v2307
    %v2605 = vpack.c.b16 %v2317, %v2308
    %v2606 = vpack.c.b16 %v2318, %v2309
    %v2607 = vpack.c.b16 %v2319, %v2310
    %v2608 = vpack.c.b16 %v2320, %v2311
    %v2609 = vpack.c.b16 %v2321, %v2312
    %v2610 = vpack.c.b16 %v2331, %v2322
    %v2611 = vpack.c.b16 %v2332, %v2323
    %v2612 = vpack.c.b16 %v2333, %v2324
    %v2613 = vpack.c.b16 %v2334, %v2325
    %v2614 = vpack.c.b16 %v2335, %v2326
    %v2615 = vpack.c.b16 %v2336, %v2327
    %v2616 = vpack.c.b16 %v2337, %v2328
    %v2617 = vpack.c.b16 %v2338, %v2329
    %v2618 = vpack.c.b16 %v2339, %v2330
    %v2619 = vpack.c.b16 %v2349, %v2340
    %v2620 = vpack.c.b16 %v2350, %v2341
    %v2621 = vpack.c.b16 %v2351, %v2342
    %v2622 = vpack.c.b16 %v2352, %v2343
    %v2623 = vpack.c.b16 %v2353, %v2344
    %v2624 = vpack.c.b16 %v2354, %v2345
    %v2625 = vpack.c.b16 %v2355, %v2346
    %v2626 = vpack.c.b16 %v2356, %v2347
    %v2627 = vpack.c.b16 %v2357, %v2348
    %v2628 = vpack.c.b16 %v2367, %v2358
    %v2629 = vpack.c.b16 %v2368, %v2359
    %v2630 = vpack.c.b16 %v2369, %v2360
    %v2631 = vpack.c.b16 %v2370, %v2361
    %v2632 = vpack.c.b16 %v2371, %v2362
    %v2633 = vpack.c.b16 %v2372, %v2363
    %v2634 = vpack.c.b16 %v2373, %v2364
    %v2635 = vpack.c.b16 %v2374, %v2365
    %v2636 = vpack.c.b16 %v2375, %v2366
    %v2637 = vpack.c.b16 %v2385, %v2376
    %v2638 = vpack.c.b16 %v2386, %v2377
    %v2639 = vpack.c.b16 %v2387, %v2378
    %v2640 = vpack.c.b16 %v2388, %v2379
    %v2641 = vpack.c.b16 %v2389, %v2380
    %v2642 = vpack.c.b16 %v2390, %v2381
    %v2643 = vpack.c.b16 %v2391, %v2382
    %v2644 = vpack.c.b16 %v2392, %v2383
    %v2645 = vpack.c.b16 %v2393, %v2384
    %v2646 = vpack.c.b16 %v2403, %v2394
    %v2647 = vpack.c.b16 %v2404, %v2395
    %v2648 = vpack.c.b16 %v2405, %v2396
    %v2649 = vpack.c.b16 %v2406, %v2397
    %v2650 = vpack.c.b16 %v2407, %v2398
    %v2651 = vpack.c.b16 %v2408, %v2399
    %v2652 = vpack.c.b16 %v2409, %v2400
    %v2653 = vpack.c.b16 %v2410, %v2401
    %v2654 = vpack.c.b16 %v2411, %v2402
    %v2655 = vpack.c.b16 %v2421, %v2412
    %v2656 = vpack.c.b16 %v2422, %v2413
    %v2657 = vpack.c.b16 %v2423, %v2414
    %v2658 = vpack.c.b16 %v2424, %v2415
    %v2659 = vpack.c.b16 %v2425, %v2416
    %v2660 = vpack.c.b16 %v2426, %v2417
    %v2661 = vpack.c.b16 %v2427, %v2418
    %v2662 = vpack.c.b16 %v2428, %v2419
    %v2663 = vpack.c.b16 %v2429, %v2420
    %v2664 = vpack.c.b16 %v2439, %v2430
    %v2665 = vpack.c.b16 %v2440, %v2431
    %v2666 = vpack.c.b16 %v2441, %v2432
    %v2667 = vpack.c.b16 %v2442, %v2433
    %v2668 = vpack.c.b16 %v2443, %v2434
    %v2669 = vpack.c.b16 %v2444, %v2435
    %v2670 = vpack.c.b16 %v2445, %v2436
    %v2671 = vpack.c.b16 %v2446, %v2437
    %v2672 = vpack.c.b16 %v2447, %v2438
    %v2673 = vpack.c.b16 %v2457, %v2448
    %v2674 = vpack.c.b16 %v2458, %v2449
    %v2675 = vpack.c.b16 %v2459, %v2450
    %v2676 = vpack.c.b16 %v2460, %v2451
    %v2677 = vpack.c.b16 %v2461, %v2452
    %v2678 = vpack.c.b16 %v2462, %v2453
    %v2679 = vpack.c.b16 %v2463, %v2454
    %v2680 = vpack.c.b16 %v2464, %v2455
    %v2681 = vpack.c.b16 %v2465, %v2456
    %v3042 = vunpack.c.l.b16 %v1650
    %v3043 = vunpack.c.l.b16 %v1651
    %v3044 = vunpack.c.l.b16 %v1652
    %v3045 = vunpack.c.l.b16 %v1653
    %v3046 = vunpack.c.l.b16 %v1654
    %v3047 = vunpack.c.l.b16 %v1655
    %v3048 = vunpack.c.l.b16 %v1656
    %v3049 = vunpack.c.l.b16 %v1657
    %v3050 = vunpack.c.l.b16 %v1658
    %v3051 = vunpack.c.l.b16 %v1659
    %v3052 = vunpack.c.l.b16 %v1660
    %v3053 = vunpack.c.l.b16 %v1661
    %v3054 = vunpack.c.l.b16 %v1662
    %v3055 = vunpack.c.l.b16 %v1663
    %v3056 = vunpack.c.l.b16 %v1664
    %v3057 = vunpack.c.l.b16 %v1665
    %v3058 = vunpack.c.l.b16 %v1666
    %v3059 = vunpack.c.l.b16 %v1667
    %v3060 = vunpack.c.l.b16 %v1668
    %v3061 = vunpack.c.l.b16 %v1669
    %v3062 = vunpack.c.l.b16 %v1670
    %v3063 = vunpack.c.l.b16 %v1671
    %v3064 = vunpack.c.l.b16 %v1672
    %v3065 = vunpack.c.l.b16 %v1673
    %v3066 = vunpack.c.l.b16 %v1674
    %v3067 = vunpack.c.l.b16 %v1675
    %v3068 = vunpack.c.l.b16 %v1676
    %v3069 = vunpack.c.l.b16 %v1677
    %v3070 = vunpack.c.l.b16 %v1678
    %v3071 = vunpack.c.l.b16 %v1679
    %v3072 = vunpack.c.l.b16 %v1680
    %v3073 = vunpack.c.l.b16 %v1681
    %v3074 = vunpack.c.l.b16 %v1682
    %v3075 = vunpack.c.l.b16 %v1683
    %v3076 = vunpack.c.l.b16 %v1684
    %v3077 = vunpack.c.l.b16 %v1685
    %v3078 = vunpack.c.l.b16 %v1686
    %v3079 = vunpack.c.l.b16 %v1687
    %v3080 = vunpack.c.l.b16 %v1688
    %v3081 = vunpack.c.l.b16 %v1689
    %v3082 = vunpack.c.l.b16 %v1690
    %v3083 = vunpack.c.l.b16 %v1691
    %v3084 = vunpack.c.l.b16 %v1692
    %v3085 = vunpack.c.l.b16 %v1693
    %v3086 = vunpack.c.l.b16 %v1694
    %v3087 = vunpack.c.l.b16 %v1695
    %v3088 = vunpack.c.l.b16 %v1696
    %v3089 = vunpack.c.l.b16 %v1697
    %v3090 = vunpack.c.l.b16 %v1698
    %v3091 = vunpack.c.l.b16 %v1699
    %v3092 = vunpack.c.l.b16 %v1700
    %v3093 = vunpack.c.l.b16 %v1701
    %v3094 = vunpack.c.l.b16 %v1702
    %v3095 = vunpack.c.l.b16 %v1703
    %v3096 = vunpack.c.l.b16 %v1704
    %v3097 = vunpack.c.l.b16 %v1705
    %v3098 = vunpack.c.l.b16 %v1706
    %v3099 = vunpack.c.l.b16 %v1707
    %v3100 = vunpack.c.l.b16 %v1708
    %v3101 = vunpack.c.l.b16 %v1709
    %v3102 = vunpack.c.l.b16 %v1710
    %v3103 = vunpack.c.l.b16 %v1711
    %v3104 = vunpack.c.l.b16 %v1712
    %v3105 = vunpack.c.l.b16 %v1713
    %v3106 = vunpack.c.l.b16 %v1714
    %v3107 = vunpack.c.l.b16 %v1715
    %v3108 = vunpack.c.l.b16 %v1716
    %v3109 = vunpack.c.l.b16 %v1717
    %v3110 = vunpack.c.l.b16 %v1718
    %v3111 = vunpack.c.l.b16 %v1719
    %v3112 = vunpack.c.l.b16 %v1720
    %v3113 = vunpack.c.l.b16 %v1721
    %v3114 = vunpack.c.l.b16 %v1722
    %v3115 = vunpack.c.l.b16 %v1723
    %v3116 = vunpack.c.l.b16 %v1724
    %v3117 = vunpack.c.l.b16 %v1725
    %v3118 = vunpack.c.l.b16 %v1726
    %v3119 = vunpack.c.l.b16 %v1727
    %v3120 = vunpack.c.l.b16 %v1728
    %v3121 = vunpack.c.l.b16 %v1729
    %v3122 = vunpack.c.l.b16 %v1730
    %v3123 = vunpack.c.l.b16 %v1731
    %v3124 = vunpack.c.l.b16 %v1732
    %v3125 = vunpack.c.l.b16 %v1733
    %v3126 = vunpack.c.l.b16 %v1734
    %v3127 = vunpack.c.l.b16 %v1735
    %v3128 = vunpack.c.l.b16 %v1736
    %v3129 = vunpack.c.l.b16 %v1737
    %v3130 = vunpack.c.l.b16 %v1738
    %v3131 = vunpack.c.l.b16 %v1739
    %v3132 = vunpack.c.l.b16 %v1740
    %v3133 = vunpack.c.l.b16 %v1741
    %v3134 = vunpack.c.l.b16 %v1742
    %v3135 = vunpack.c.l.b16 %v1743
    %v3136 = vunpack.c.l.b16 %v1744
    %v3137 = vunpack.c.l.b16 %v1745
    %v3138 = vunpack.c.l.b16 %v1746
    %v3139 = vunpack.c.l.b16 %v1747
    %v3140 = vunpack.c.l.b16 %v1748
    %v3141 = vunpack.c.l.b16 %v1749
    %v3142 = vunpack.c.l.b16 %v1750
    %v3143 = vunpack.c.l.b16 %v1751
    %v3144 = vunpack.c.l.b16 %v1752
    %v3145 = vunpack.c.l.b16 %v1753
    %v3146 = vunpack.c.l.b16 %v1754
    %v3147 = vunpack.c.l.b16 %v1755
    %v3148 = vunpack.c.l.b16 %v1756
    %v3149 = vunpack.c.l.b16 %v1757
    %v3150 = vunpack.c.l.b16 %v1758
    %v3151 = vunpack.c.l.b16 %v1759
    %v3152 = vunpack.c.l.b16 %v1760
    %v3153 = vunpack.c.l.b16 %v1761
    %v3154 = vunpack.c.l.b16 %v1762
    %v3155 = vunpack.c.l.b16 %v1763
    %v3156 = vunpack.c.l.b16 %v1764
    %v3157 = vunpack.c.l.b16 %v1765
    %v3158 = vunpack.c.l.b16 %v1766
    %v3159 = vunpack.c.l.b16 %v1767
    %v3160 = vunpack.c.l.b16 %v1768
    %v3161 = vunpack.c.l.b16 %v1769
    %v3162 = vunpack.c.l.b16 %v1770
    %v3163 = vunpack.c.l.b16 %v1771
    %v3164 = vunpack.c.l.b16 %v1772
    %v3165 = vunpack.c.l.b16 %v1773
    %v3166 = vunpack.c.l.b16 %v1774
    %v3167 = vunpack.c.l.b16 %v1775
    %v3168 = vunpack.c.l.b16 %v1776
    %v3169 = vunpack.c.l.b16 %v1777
    %v3170 = vunpack.c.l.b16 %v1778
    %v3171 = vunpack.c.l.b16 %v1779
    %v3172 = vunpack.c.l.b16 %v1780
    %v3173 = vunpack.c.l.b16 %v1781
    %v3174 = vunpack.c.l.b16 %v1782
    %v3175 = vunpack.c.l.b16 %v1783
    %v3176 = vunpack.c.l.b16 %v1784
    %v3177 = vunpack.c.l.b16 %v1785
    %v3178 = vunpack.c.l.b16 %v1786
    %v3179 = vunpack.c.l.b16 %v1787
    %v3180 = vunpack.c.l.b16 %v1788
    %v3181 = vunpack.c.l.b16 %v1789
    %v3182 = vunpack.c.l.b16 %v1790
    %v3183 = vunpack.c.l.b16 %v1791
    %v3184 = vunpack.c.l.b16 %v1792
    %v3185 = vunpack.c.l.b16 %v1793
    %v3186 = vpack.c.b16 %v3043, %v3042
    %v3187 = vpack.c.b16 %v3045, %v3044
    %v3188 = vpack.c.b16 %v3047, %v3046
    %v3189 = vpack.c.b16 %v3049, %v3048
    %v3190 = vpack.c.b16 %v3051, %v3050
    %v3191 = vpack.c.b16 %v3053, %v3052
    %v3192 = vpack.c.b16 %v3055, %v3054
    %v3193 = vpack.c.b16 %v3057, %v3056
    %v3194 = vpack.c.b16 %v3059, %v3058
    %v3195 = vpack.c.b16 %v3061, %v3060
    %v3196 = vpack.c.b16 %v3063, %v3062
    %v3197 = vpack.c.b16 %v3065, %v3064
    %v3198 = vpack.c.b16 %v3067, %v3066
    %v3199 = vpack.c.b16 %v3069, %v3068
    %v3200 = vpack.c.b16 %v3071, %v3070
    %v3201 = vpack.c.b16 %v3073, %v3072
    %v3202 = vpack.c.b16 %v3075, %v3074
    %v3203 = vpack.c.b16 %v3077, %v3076
    %v3204 = vpack.c.b16 %v3079, %v3078
    %v3205 = vpack.c.b16 %v3081, %v3080
    %v3206 = vpack.c.b16 %v3083, %v3082
    %v3207 = vpack.c.b16 %v3085, %v3084
    %v3208 = vpack.c.b16 %v3087, %v3086
    %v3209 = vpack.c.b16 %v3089, %v3088
    %v3210 = vpack.c.b16 %v3091, %v3090
    %v3211 = vpack.c.b16 %v3093, %v3092
    %v3212 = vpack.c.b16 %v3095, %v3094
    %v3213 = vpack.c.b16 %v3097, %v3096
    %v3214 = vpack.c.b16 %v3099, %v3098
    %v3215 = vpack.c.b16 %v3101, %v3100
    %v3216 = vpack.c.b16 %v3103, %v3102
    %v3217 = vpack.c.b16 %v3105, %v3104
    %v3218 = vpack.c.b16 %v3107, %v3106
    %v3219 = vpack.c.b16 %v3109, %v3108
    %v3220 = vpack.c.b16 %v3111, %v3110
    %v3221 = vpack.c.b16 %v3113, %v3112
    %v3222 = vpack.c.b16 %v3115, %v3114
    %v3223 = vpack.c.b16 %v3117, %v3116
    %v3224 = vpack.c.b16 %v3119, %v3118
    %v3225 = vpack.c.b16 %v3121, %v3120
    %v3226 = vpack.c.b16 %v3123, %v3122
    %v3227 = vpack.c.b16 %v3125, %v3124
    %v3228 = vpack.c.b16 %v3127, %v3126
    %v3229 = vpack.c.b16 %v3129, %v3128
    %v3230 = vpack.c.b16 %v3131, %v3130
    %v3231 = vpack.c.b16 %v3133, %v3132
    %v3232 = vpack.c.b16 %v3135, %v3134
    %v3233 = vpack.c.b16 %v3137, %v3136
    %v3234 = vpack.c.b16 %v3139, %v3138
    %v3235 = vpack.c.b16 %v3141, %v3140
    %v3236 = vpack.c.b16 %v3143, %v3142
    %v3237 = vpack.c.b16 %v3145, %v3144
    %v3238 = vpack.c.b16 %v3147, %v3146
    %v3239 = vpack.c.b16 %v3149, %v3148
    %v3240 = vpack.c.b16 %v3151, %v3150
    %v3241 = vpack.c.b16 %v3153, %v3152
    %v3242 = vpack.c.b16 %v3155, %v3154
    %v3243 = vpack.c.b16 %v3157, %v3156
    %v3244 = vpack.c.b16 %v3159, %v3158
    %v3245 = vpack.c.b16 %v3161, %v3160
    %v3246 = vpack.c.b16 %v3163, %v3162
    %v3247 = vpack.c.b16 %v3165, %v3164
    %v3248 = vpack.c.b16 %v3167, %v3166
    %v3249 = vpack.c.b16 %v3169, %v3168
    %v3250 = vpack.c.b16 %v3171, %v3170
    %v3251 = vpack.c.b16 %v3173, %v3172
    %v3252 = vpack.c.b16 %v3175, %v3174
    %v3253 = vpack.c.b16 %v3177, %v3176
    %v3254 = vpack.c.b16 %v3179, %v3178
    %v3255 = vpack.c.b16 %v3181, %v3180
    %v3256 = vpack.c.b16 %v3183, %v3182
    %v3257 = vpack.c.b16 %v3185, %v3184
    %3330 = vmatprep.subr.bf16.mxu0 0
    %3331 = vmatpush1.bf16.msra.mxu0 %v3193
    %3332 = vmatprep.subr.bf16.mxu0 0
    %3333 = vmatpush1.bf16.msra.mxu0 %v3192
    %3334 = vmatprep.subr.bf16.mxu0 0
    %3335 = vmatpush1.bf16.msra.mxu0 %v3191
    %3336 = vmatprep.subr.bf16.mxu0 0
    %3337 = vmatpush1.bf16.msra.mxu0 %v3190
    %3338 = vmatprep.subr.bf16.mxu0 0
    %3339 = vmatpush1.bf16.msra.mxu0 %v3189
    %3340 = vmatprep.subr.bf16.mxu0 0
    %3341 = vmatpush1.bf16.msra.mxu0 %v3188
    %3342 = vmatprep.subr.bf16.mxu0 0
    %3343 = vmatpush1.bf16.msra.mxu0 %v3187
    %3344 = vmatprep.subr.bf16.mxu0 0
    %3345 = vmatpush1.bf16.msra.mxu0 %v3186
    %3346 = vmatprep.subr.bf16.mxu0 0
    %3347 = vmatpush2.bf16.msra.mxu0 %v3201
    %3348 = vmatprep.subr.bf16.mxu0 0
    %3349 = vmatpush2.bf16.msra.mxu0 %v3200
    %3350 = vmatprep.subr.bf16.mxu0 0
    %3351 = vmatpush2.bf16.msra.mxu0 %v3199
    %3352 = vmatprep.subr.bf16.mxu0 0
    %3353 = vmatpush2.bf16.msra.mxu0 %v3198
    %3354 = vmatprep.subr.bf16.mxu0 0
    %3355 = vmatpush2.bf16.msra.mxu0 %v3197
    %3356 = vmatprep.subr.bf16.mxu0 0
    %3357 = vmatpush2.bf16.msra.mxu0 %v3196
    %3358 = vmatprep.subr.bf16.mxu0 0
    %3359 = vmatpush2.bf16.msra.mxu0 %v3195
    %3360 = vmatprep.subr.bf16.mxu0 0
    %3361 = vmatpush2.bf16.msra.mxu0 %v3194
    %3362 = vmatprep.mubr.bf16.mxu0 %v2467
    %3363 = vmatmul.mubr.bf16.gmra.mxu0 %v2466
    %v3364 = vpop.f32.mrf.mxu0
    %v3365 = vadd.f32 0.0, %v3364
    %v3366 = vpop.f32.mrf.mxu0
    %v3367 = vpop.f32.mrf.mxu0
    %v3368 = vadd.f32 0.0, %v3367
    %v3369 = vpop.f32.mrf.mxu0
    %3370 = vmatprep.mubr.bf16.mxu0 %v2476
    %3371 = vmatmul.mubr.bf16.gmra.mxu0 %v2475
    %v3372 = vpop.f32.mrf.mxu0
    %v3373 = vadd.f32 0.0, %v3372
    %v3374 = vpop.f32.mrf.mxu0
    %v3375 = vpop.f32.mrf.mxu0
    %v3376 = vadd.f32 0.0, %v3375
    %v3377 = vpop.f32.mrf.mxu0
    %3378 = vmatprep.mubr.bf16.mxu0 %v2485
    %3379 = vmatmul.mubr.bf16.gmra.mxu0 %v2484
    %v3380 = vpop.f32.mrf.mxu0
    %v3381 = vadd.f32 0.0, %v3380
    %v3382 = vpop.f32.mrf.mxu0
    %v3383 = vpop.f32.mrf.mxu0
    %v3384 = vadd.f32 0.0, %v3383
    %v3385 = vpop.f32.mrf.mxu0
    %3386 = vmatprep.mubr.bf16.mxu0 %v2494
    %3387 = vmatmul.mubr.bf16.gmra.mxu0 %v2493
    %v3388 = vpop.f32.mrf.mxu0
    %v3389 = vadd.f32 0.0, %v3388
    %v3390 = vpop.f32.mrf.mxu0
    %v3391 = vpop.f32.mrf.mxu0
    %v3392 = vadd.f32 0.0, %v3391
    %v3393 = vpop.f32.mrf.mxu0
    %3394 = vmatprep.mubr.bf16.mxu0 %v2503
    %3395 = vmatmul.mubr.bf16.gmra.mxu0 %v2502
    %v3396 = vpop.f32.mrf.mxu0
    %v3397 = vadd.f32 0.0, %v3396
    %v3398 = vpop.f32.mrf.mxu0
    %v3399 = vpop.f32.mrf.mxu0
    %v3400 = vadd.f32 0.0, %v3399
    %v3401 = vpop.f32.mrf.mxu0
    %3402 = vmatprep.mubr.bf16.mxu0 %v2512
    %3403 = vmatmul.mubr.bf16.gmra.mxu0 %v2511
    %v3404 = vpop.f32.mrf.mxu0
    %v3405 = vadd.f32 0.0, %v3404
    %v3406 = vpop.f32.mrf.mxu0
    %v3407 = vpop.f32.mrf.mxu0
    %v3408 = vadd.f32 0.0, %v3407
    %v3409 = vpop.f32.mrf.mxu0
    %3410 = vmatprep.mubr.bf16.mxu0 %v2521
    %3411 = vmatmul.mubr.bf16.gmra.mxu0 %v2520
    %v3412 = vpop.f32.mrf.mxu0
    %v3413 = vadd.f32 0.0, %v3412
    %v3414 = vpop.f32.mrf.mxu0
    %v3415 = vpop.f32.mrf.mxu0
    %v3416 = vadd.f32 0.0, %v3415
    %v3417 = vpop.f32.mrf.mxu0
    %3418 = vmatprep.mubr.bf16.mxu0 %v2530
    %3419 = vmatmul.mubr.bf16.gmra.mxu0 %v2529
    %v3420 = vpop.f32.mrf.mxu0
    %v3421 = vadd.f32 0.0, %v3420
    %v3422 = vpop.f32.mrf.mxu0
    %v3423 = vpop.f32.mrf.mxu0
    %v3424 = vadd.f32 0.0, %v3423
    %v3425 = vpop.f32.mrf.mxu0
    %3426 = vmatprep.mubr.bf16.mxu0 %v2539
    %3427 = vmatmul.mubr.bf16.gmra.mxu0 %v2538
    %v3428 = vpop.f32.mrf.mxu0
    %v3429 = vadd.f32 0.0, %v3428
    %v3430 = vpop.f32.mrf.mxu0
    %v3431 = vpop.f32.mrf.mxu0
    %v3432 = vadd.f32 0.0, %v3431
    %v3433 = vpop.f32.mrf.mxu0
    %3434 = vmatprep.mubr.bf16.mxu0 %v2548
    %3435 = vmatmul.mubr.bf16.gmra.mxu0 %v2547
    %v3436 = vpop.f32.mrf.mxu0
    %v3437 = vadd.f32 0.0, %v3436
    %v3438 = vpop.f32.mrf.mxu0
    %v3439 = vpop.f32.mrf.mxu0
    %v3440 = vadd.f32 0.0, %v3439
    %v3441 = vpop.f32.mrf.mxu0
    %3442 = vmatprep.mubr.bf16.mxu0 %v2557
    %3443 = vmatmul.mubr.bf16.gmra.mxu0 %v2556
    %v3444 = vpop.f32.mrf.mxu0
    %v3445 = vadd.f32 0.0, %v3444
    %v3446 = vpop.f32.mrf.mxu0
    %v3447 = vpop.f32.mrf.mxu0
    %v3448 = vadd.f32 0.0, %v3447
    %v3449 = vpop.f32.mrf.mxu0
    %3450 = vmatprep.mubr.bf16.mxu0 %v2566
    %3451 = vmatmul.mubr.bf16.gmra.mxu0 %v2565
    %v3452 = vpop.f32.mrf.mxu0
    %v3453 = vadd.f32 0.0, %v3452
    %v3454 = vpop.f32.mrf.mxu0
    %v3455 = vpop.f32.mrf.mxu0
    %v3456 = vadd.f32 0.0, %v3455
    %v3457 = vpop.f32.mrf.mxu0
    %3458 = vmatprep.mubr.bf16.mxu0 %v2575
    %3459 = vmatmul.mubr.bf16.gmra.mxu0 %v2574
    %v3460 = vpop.f32.mrf.mxu0
    %v3461 = vadd.f32 0.0, %v3460
    %v3462 = vpop.f32.mrf.mxu0
    %v3463 = vpop.f32.mrf.mxu0
    %v3464 = vadd.f32 0.0, %v3463
    %v3465 = vpop.f32.mrf.mxu0
    %3466 = vmatprep.mubr.bf16.mxu0 %v2584
    %3467 = vmatmul.mubr.bf16.gmra.mxu0 %v2583
    %v3468 = vpop.f32.mrf.mxu0
    %v3469 = vadd.f32 0.0, %v3468
    %v3470 = vpop.f32.mrf.mxu0
    %v3471 = vpop.f32.mrf.mxu0
    %v3472 = vadd.f32 0.0, %v3471
    %v3473 = vpop.f32.mrf.mxu0
    %3474 = vmatprep.mubr.bf16.mxu0 %v2593
    %3475 = vmatmul.mubr.bf16.gmra.mxu0 %v2592
    %v3476 = vpop.f32.mrf.mxu0
    %v3477 = vadd.f32 0.0, %v3476
    %v3478 = vpop.f32.mrf.mxu0
    %v3479 = vpop.f32.mrf.mxu0
    %v3480 = vadd.f32 0.0, %v3479
    %v3481 = vpop.f32.mrf.mxu0
    %3482 = vmatprep.mubr.bf16.mxu0 %v2602
    %3483 = vmatmul.mubr.bf16.gmra.mxu0 %v2601
    %v3484 = vpop.f32.mrf.mxu0
    %v3485 = vadd.f32 0.0, %v3484
    %v3486 = vpop.f32.mrf.mxu0
    %v3487 = vpop.f32.mrf.mxu0
    %v3488 = vadd.f32 0.0, %v3487
    %v3489 = vpop.f32.mrf.mxu0
    %3490 = vmatprep.mubr.bf16.mxu0 %v2611
    %3491 = vmatmul.mubr.bf16.gmra.mxu0 %v2610
    %v3492 = vpop.f32.mrf.mxu0
    %v3493 = vadd.f32 0.0, %v3492
    %v3494 = vpop.f32.mrf.mxu0
    %v3495 = vpop.f32.mrf.mxu0
    %v3496 = vadd.f32 0.0, %v3495
    %v3497 = vpop.f32.mrf.mxu0
    %3498 = vmatprep.mubr.bf16.mxu0 %v2620
    %3499 = vmatmul.mubr.bf16.gmra.mxu0 %v2619
    %v3500 = vpop.f32.mrf.mxu0
    %v3501 = vadd.f32 0.0, %v3500
    %v3502 = vpop.f32.mrf.mxu0
    %v3503 = vpop.f32.mrf.mxu0
    %v3504 = vadd.f32 0.0, %v3503
    %v3505 = vpop.f32.mrf.mxu0
    %3506 = vmatprep.mubr.bf16.mxu0 %v2629
    %3507 = vmatmul.mubr.bf16.gmra.mxu0 %v2628
    %v3508 = vpop.f32.mrf.mxu0
    %v3509 = vadd.f32 0.0, %v3508
    %v3510 = vpop.f32.mrf.mxu0
    %v3511 = vpop.f32.mrf.mxu0
    %v3512 = vadd.f32 0.0, %v3511
    %v3513 = vpop.f32.mrf.mxu0
    %3514 = vmatprep.mubr.bf16.mxu0 %v2638
    %3515 = vmatmul.mubr.bf16.gmra.mxu0 %v2637
    %v3516 = vpop.f32.mrf.mxu0
    %v3517 = vadd.f32 0.0, %v3516
    %v3518 = vpop.f32.mrf.mxu0
    %v3519 = vpop.f32.mrf.mxu0
    %v3520 = vadd.f32 0.0, %v3519
    %v3521 = vpop.f32.mrf.mxu0
    %3522 = vmatprep.mubr.bf16.mxu0 %v2647
    %3523 = vmatmul.mubr.bf16.gmra.mxu0 %v2646
    %v3524 = vpop.f32.mrf.mxu0
    %v3525 = vadd.f32 0.0, %v3524
    %v3526 = vpop.f32.mrf.mxu0
    %v3527 = vpop.f32.mrf.mxu0
    %v3528 = vadd.f32 0.0, %v3527
    %v3529 = vpop.f32.mrf.mxu0
    %3530 = vmatprep.mubr.bf16.mxu0 %v2656
    %3531 = vmatmul.mubr.bf16.gmra.mxu0 %v2655
    %v3532 = vpop.f32.mrf.mxu0
    %v3533 = vadd.f32 0.0, %v3532
    %v3534 = vpop.f32.mrf.mxu0
    %v3535 = vpop.f32.mrf.mxu0
    %v3536 = vadd.f32 0.0, %v3535
    %v3537 = vpop.f32.mrf.mxu0
    %3538 = vmatprep.mubr.bf16.mxu0 %v2665
    %3539 = vmatmul.mubr.bf16.gmra.mxu0 %v2664
    %v3540 = vpop.f32.mrf.mxu0
    %v3541 = vadd.f32 0.0, %v3540
    %v3542 = vpop.f32.mrf.mxu0
    %v3543 = vpop.f32.mrf.mxu0
    %v3544 = vadd.f32 0.0, %v3543
    %v3545 = vpop.f32.mrf.mxu0
    %3546 = vmatprep.mubr.bf16.mxu0 %v2674
    %3547 = vmatmul.mubr.bf16.gmra.mxu0 %v2673
    %v3548 = vpop.f32.mrf.mxu0
    %v3549 = vadd.f32 0.0, %v3548
    %v3550 = vpop.f32.mrf.mxu0
    %v3551 = vpop.f32.mrf.mxu0
    %v3552 = vadd.f32 0.0, %v3551
    %v3553 = vpop.f32.mrf.mxu0
    %3554 = vdwg.mxu0
    %3555 = vmatprep.subr.bf16.mxu0 0
    %3556 = vmatpush1.bf16.msra.mxu0 %v3209
    %3557 = vmatprep.subr.bf16.mxu0 0
    %3558 = vmatpush1.bf16.msra.mxu0 %v3208
    %3559 = vmatprep.subr.bf16.mxu0 0
    %3560 = vmatpush1.bf16.msra.mxu0 %v3207
    %3561 = vmatprep.subr.bf16.mxu0 0
    %3562 = vmatpush1.bf16.msra.mxu0 %v3206
    %3563 = vmatprep.subr.bf16.mxu0 0
    %3564 = vmatpush1.bf16.msra.mxu0 %v3205
    %3565 = vmatprep.subr.bf16.mxu0 0
    %3566 = vmatpush1.bf16.msra.mxu0 %v3204
    %3567 = vmatprep.subr.bf16.mxu0 0
    %3568 = vmatpush1.bf16.msra.mxu0 %v3203
    %3569 = vmatprep.subr.bf16.mxu0 0
    %3570 = vmatpush1.bf16.msra.mxu0 %v3202
    %3571 = vmatprep.subr.bf16.mxu0 0
    %3572 = vmatpush2.bf16.msra.mxu0 %v3217
    %3573 = vmatprep.subr.bf16.mxu0 0
    %3574 = vmatpush2.bf16.msra.mxu0 %v3216
    %3575 = vmatprep.subr.bf16.mxu0 0
    %3576 = vmatpush2.bf16.msra.mxu0 %v3215
    %3577 = vmatprep.subr.bf16.mxu0 0
    %3578 = vmatpush2.bf16.msra.mxu0 %v3214
    %3579 = vmatprep.subr.bf16.mxu0 0
    %3580 = vmatpush2.bf16.msra.mxu0 %v3213
    %3581 = vmatprep.subr.bf16.mxu0 0
    %3582 = vmatpush2.bf16.msra.mxu0 %v3212
    %3583 = vmatprep.subr.bf16.mxu0 0
    %3584 = vmatpush2.bf16.msra.mxu0 %v3211
    %3585 = vmatprep.subr.bf16.mxu0 0
    %3586 = vmatpush2.bf16.msra.mxu0 %v3210
    %3587 = vmatprep.mubr.bf16.mxu0 %v2469
    %3588 = vmatmul.mubr.bf16.gmra.mxu0 %v2468
    %v3589 = vpop.f32.mrf.mxu0
    %v3590 = vadd.f32 %v3365, %v3589
    %v3591 = vpop.f32.mrf.mxu0
    %v3592 = vpop.f32.mrf.mxu0
    %v3593 = vadd.f32 %v3368, %v3592
    %v3594 = vpop.f32.mrf.mxu0
    %3595 = vmatprep.mubr.bf16.mxu0 %v2478
    %3596 = vmatmul.mubr.bf16.gmra.mxu0 %v2477
    %v3597 = vpop.f32.mrf.mxu0
    %v3598 = vadd.f32 %v3373, %v3597
    %v3599 = vpop.f32.mrf.mxu0
    %v3600 = vpop.f32.mrf.mxu0
    %v3601 = vadd.f32 %v3376, %v3600
    %v3602 = vpop.f32.mrf.mxu0
    %3603 = vmatprep.mubr.bf16.mxu0 %v2487
    %3604 = vmatmul.mubr.bf16.gmra.mxu0 %v2486
    %v3605 = vpop.f32.mrf.mxu0
    %v3606 = vadd.f32 %v3381, %v3605
    %v3607 = vpop.f32.mrf.mxu0
    %v3608 = vpop.f32.mrf.mxu0
    %v3609 = vadd.f32 %v3384, %v3608
    %v3610 = vpop.f32.mrf.mxu0
    %3611 = vmatprep.mubr.bf16.mxu0 %v2496
    %3612 = vmatmul.mubr.bf16.gmra.mxu0 %v2495
    %v3613 = vpop.f32.mrf.mxu0
    %v3614 = vadd.f32 %v3389, %v3613
    %v3615 = vpop.f32.mrf.mxu0
    %v3616 = vpop.f32.mrf.mxu0
    %v3617 = vadd.f32 %v3392, %v3616
    %v3618 = vpop.f32.mrf.mxu0
    %3619 = vmatprep.mubr.bf16.mxu0 %v2505
    %3620 = vmatmul.mubr.bf16.gmra.mxu0 %v2504
    %v3621 = vpop.f32.mrf.mxu0
    %v3622 = vadd.f32 %v3397, %v3621
    %v3623 = vpop.f32.mrf.mxu0
    %v3624 = vpop.f32.mrf.mxu0
    %v3625 = vadd.f32 %v3400, %v3624
    %v3626 = vpop.f32.mrf.mxu0
    %3627 = vmatprep.mubr.bf16.mxu0 %v2514
    %3628 = vmatmul.mubr.bf16.gmra.mxu0 %v2513
    %v3629 = vpop.f32.mrf.mxu0
    %v3630 = vadd.f32 %v3405, %v3629
    %v3631 = vpop.f32.mrf.mxu0
    %v3632 = vpop.f32.mrf.mxu0
    %v3633 = vadd.f32 %v3408, %v3632
    %v3634 = vpop.f32.mrf.mxu0
    %3635 = vmatprep.mubr.bf16.mxu0 %v2523
    %3636 = vmatmul.mubr.bf16.gmra.mxu0 %v2522
    %v3637 = vpop.f32.mrf.mxu0
    %v3638 = vadd.f32 %v3413, %v3637
    %v3639 = vpop.f32.mrf.mxu0
    %v3640 = vpop.f32.mrf.mxu0
    %v3641 = vadd.f32 %v3416, %v3640
    %v3642 = vpop.f32.mrf.mxu0
    %3643 = vmatprep.mubr.bf16.mxu0 %v2532
    %3644 = vmatmul.mubr.bf16.gmra.mxu0 %v2531
    %v3645 = vpop.f32.mrf.mxu0
    %v3646 = vadd.f32 %v3421, %v3645
    %v3647 = vpop.f32.mrf.mxu0
    %v3648 = vpop.f32.mrf.mxu0
    %v3649 = vadd.f32 %v3424, %v3648
    %v3650 = vpop.f32.mrf.mxu0
    %3651 = vmatprep.mubr.bf16.mxu0 %v2541
    %3652 = vmatmul.mubr.bf16.gmra.mxu0 %v2540
    %v3653 = vpop.f32.mrf.mxu0
    %v3654 = vadd.f32 %v3429, %v3653
    %v3655 = vpop.f32.mrf.mxu0
    %v3656 = vpop.f32.mrf.mxu0
    %v3657 = vadd.f32 %v3432, %v3656
    %v3658 = vpop.f32.mrf.mxu0
    %3659 = vmatprep.mubr.bf16.mxu0 %v2550
    %3660 = vmatmul.mubr.bf16.gmra.mxu0 %v2549
    %v3661 = vpop.f32.mrf.mxu0
    %v3662 = vadd.f32 %v3437, %v3661
    %v3663 = vpop.f32.mrf.mxu0
    %v3664 = vpop.f32.mrf.mxu0
    %v3665 = vadd.f32 %v3440, %v3664
    %v3666 = vpop.f32.mrf.mxu0
    %3667 = vmatprep.mubr.bf16.mxu0 %v2559
    %3668 = vmatmul.mubr.bf16.gmra.mxu0 %v2558
    %v3669 = vpop.f32.mrf.mxu0
    %v3670 = vadd.f32 %v3445, %v3669
    %v3671 = vpop.f32.mrf.mxu0
    %v3672 = vpop.f32.mrf.mxu0
    %v3673 = vadd.f32 %v3448, %v3672
    %v3674 = vpop.f32.mrf.mxu0
    %3675 = vmatprep.mubr.bf16.mxu0 %v2568
    %3676 = vmatmul.mubr.bf16.gmra.mxu0 %v2567
    %v3677 = vpop.f32.mrf.mxu0
    %v3678 = vadd.f32 %v3453, %v3677
    %v3679 = vpop.f32.mrf.mxu0
    %v3680 = vpop.f32.mrf.mxu0
    %v3681 = vadd.f32 %v3456, %v3680
    %v3682 = vpop.f32.mrf.mxu0
    %3683 = vmatprep.mubr.bf16.mxu0 %v2577
    %3684 = vmatmul.mubr.bf16.gmra.mxu0 %v2576
    %v3685 = vpop.f32.mrf.mxu0
    %v3686 = vadd.f32 %v3461, %v3685
    %v3687 = vpop.f32.mrf.mxu0
    %v3688 = vpop.f32.mrf.mxu0
    %v3689 = vadd.f32 %v3464, %v3688
    %v3690 = vpop.f32.mrf.mxu0
    %3691 = vmatprep.mubr.bf16.mxu0 %v2586
    %3692 = vmatmul.mubr.bf16.gmra.mxu0 %v2585
    %v3693 = vpop.f32.mrf.mxu0
    %v3694 = vadd.f32 %v3469, %v3693
    %v3695 = vpop.f32.mrf.mxu0
    %v3696 = vpop.f32.mrf.mxu0
    %v3697 = vadd.f32 %v3472, %v3696
    %v3698 = vpop.f32.mrf.mxu0
    %3699 = vmatprep.mubr.bf16.mxu0 %v2595
    %3700 = vmatmul.mubr.bf16.gmra.mxu0 %v2594
    %v3701 = vpop.f32.mrf.mxu0
    %v3702 = vadd.f32 %v3477, %v3701
    %v3703 = vpop.f32.mrf.mxu0
    %v3704 = vpop.f32.mrf.mxu0
    %v3705 = vadd.f32 %v3480, %v3704
    %v3706 = vpop.f32.mrf.mxu0
    %3707 = vmatprep.mubr.bf16.mxu0 %v2604
    %3708 = vmatmul.mubr.bf16.gmra.mxu0 %v2603
    %v3709 = vpop.f32.mrf.mxu0
    %v3710 = vadd.f32 %v3485, %v3709
    %v3711 = vpop.f32.mrf.mxu0
    %v3712 = vpop.f32.mrf.mxu0
    %v3713 = vadd.f32 %v3488, %v3712
    %v3714 = vpop.f32.mrf.mxu0
    %3715 = vmatprep.mubr.bf16.mxu0 %v2613
    %3716 = vmatmul.mubr.bf16.gmra.mxu0 %v2612
    %v3717 = vpop.f32.mrf.mxu0
    %v3718 = vadd.f32 %v3493, %v3717
    %v3719 = vpop.f32.mrf.mxu0
    %v3720 = vpop.f32.mrf.mxu0
    %v3721 = vadd.f32 %v3496, %v3720
    %v3722 = vpop.f32.mrf.mxu0
    %3723 = vmatprep.mubr.bf16.mxu0 %v2622
    %3724 = vmatmul.mubr.bf16.gmra.mxu0 %v2621
    %v3725 = vpop.f32.mrf.mxu0
    %v3726 = vadd.f32 %v3501, %v3725
    %v3727 = vpop.f32.mrf.mxu0
    %v3728 = vpop.f32.mrf.mxu0
    %v3729 = vadd.f32 %v3504, %v3728
    %v3730 = vpop.f32.mrf.mxu0
    %3731 = vmatprep.mubr.bf16.mxu0 %v2631
    %3732 = vmatmul.mubr.bf16.gmra.mxu0 %v2630
    %v3733 = vpop.f32.mrf.mxu0
    %v3734 = vadd.f32 %v3509, %v3733
    %v3735 = vpop.f32.mrf.mxu0
    %v3736 = vpop.f32.mrf.mxu0
    %v3737 = vadd.f32 %v3512, %v3736
    %v3738 = vpop.f32.mrf.mxu0
    %3739 = vmatprep.mubr.bf16.mxu0 %v2640
    %3740 = vmatmul.mubr.bf16.gmra.mxu0 %v2639
    %v3741 = vpop.f32.mrf.mxu0
    %v3742 = vadd.f32 %v3517, %v3741
    %v3743 = vpop.f32.mrf.mxu0
    %v3744 = vpop.f32.mrf.mxu0
    %v3745 = vadd.f32 %v3520, %v3744
    %v3746 = vpop.f32.mrf.mxu0
    %3747 = vmatprep.mubr.bf16.mxu0 %v2649
    %3748 = vmatmul.mubr.bf16.gmra.mxu0 %v2648
    %v3749 = vpop.f32.mrf.mxu0
    %v3750 = vadd.f32 %v3525, %v3749
    %v3751 = vpop.f32.mrf.mxu0
    %v3752 = vpop.f32.mrf.mxu0
    %v3753 = vadd.f32 %v3528, %v3752
    %v3754 = vpop.f32.mrf.mxu0
    %3755 = vmatprep.mubr.bf16.mxu0 %v2658
    %3756 = vmatmul.mubr.bf16.gmra.mxu0 %v2657
    %v3757 = vpop.f32.mrf.mxu0
    %v3758 = vadd.f32 %v3533, %v3757
    %v3759 = vpop.f32.mrf.mxu0
    %v3760 = vpop.f32.mrf.mxu0
    %v3761 = vadd.f32 %v3536, %v3760
    %v3762 = vpop.f32.mrf.mxu0
    %3763 = vmatprep.mubr.bf16.mxu0 %v2667
    %3764 = vmatmul.mubr.bf16.gmra.mxu0 %v2666
    %v3765 = vpop.f32.mrf.mxu0
    %v3766 = vadd.f32 %v3541, %v3765
    %v3767 = vpop.f32.mrf.mxu0
    %v3768 = vpop.f32.mrf.mxu0
    %v3769 = vadd.f32 %v3544, %v3768
    %v3770 = vpop.f32.mrf.mxu0
    %3771 = vmatprep.mubr.bf16.mxu0 %v2676
    %3772 = vmatmul.mubr.bf16.gmra.mxu0 %v2675
    %v3773 = vpop.f32.mrf.mxu0
    %v3774 = vadd.f32 %v3549, %v3773
    %v3775 = vpop.f32.mrf.mxu0
    %v3776 = vpop.f32.mrf.mxu0
    %v3777 = vadd.f32 %v3552, %v3776
    %v3778 = vpop.f32.mrf.mxu0
    %3779 = vdwg.mxu0
    %3780 = vmatprep.subr.bf16.mxu0 0
    %3781 = vmatpush1.bf16.msra.mxu0 %v3225
    %3782 = vmatprep.subr.bf16.mxu0 0
    %3783 = vmatpush1.bf16.msra.mxu0 %v3224
    %3784 = vmatprep.subr.bf16.mxu0 0
    %3785 = vmatpush1.bf16.msra.mxu0 %v3223
    %3786 = vmatprep.subr.bf16.mxu0 0
    %3787 = vmatpush1.bf16.msra.mxu0 %v3222
    %3788 = vmatprep.subr.bf16.mxu0 0
    %3789 = vmatpush1.bf16.msra.mxu0 %v3221
    %3790 = vmatprep.subr.bf16.mxu0 0
    %3791 = vmatpush1.bf16.msra.mxu0 %v3220
    %3792 = vmatprep.subr.bf16.mxu0 0
    %3793 = vmatpush1.bf16.msra.mxu0 %v3219
    %3794 = vmatprep.subr.bf16.mxu0 0
    %3795 = vmatpush1.bf16.msra.mxu0 %v3218
    %3796 = vmatprep.subr.bf16.mxu0 0
    %3797 = vmatpush2.bf16.msra.mxu0 %v3233
    %3798 = vmatprep.subr.bf16.mxu0 0
    %3799 = vmatpush2.bf16.msra.mxu0 %v3232
    %3800 = vmatprep.subr.bf16.mxu0 0
    %3801 = vmatpush2.bf16.msra.mxu0 %v3231
    %3802 = vmatprep.subr.bf16.mxu0 0
    %3803 = vmatpush2.bf16.msra.mxu0 %v3230
    %3804 = vmatprep.subr.bf16.mxu0 0
    %3805 = vmatpush2.bf16.msra.mxu0 %v3229
    %3806 = vmatprep.subr.bf16.mxu0 0
    %3807 = vmatpush2.bf16.msra.mxu0 %v3228
    %3808 = vmatprep.subr.bf16.mxu0 0
    %3809 = vmatpush2.bf16.msra.mxu0 %v3227
    %3810 = vmatprep.subr.bf16.mxu0 0
    %3811 = vmatpush2.bf16.msra.mxu0 %v3226
    %3812 = vmatprep.mubr.bf16.mxu0 %v2471
    %3813 = vmatmul.mubr.bf16.gmra.mxu0 %v2470
    %v3814 = vpop.f32.mrf.mxu0
    %v3815 = vadd.f32 %v3590, %v3814
    %v3816 = vpop.f32.mrf.mxu0
    %v3817 = vpop.f32.mrf.mxu0
    %v3818 = vadd.f32 %v3593, %v3817
    %v3819 = vpop.f32.mrf.mxu0
    %3820 = vmatprep.mubr.bf16.mxu0 %v2480
    %3821 = vmatmul.mubr.bf16.gmra.mxu0 %v2479
    %v3822 = vpop.f32.mrf.mxu0
    %v3823 = vadd.f32 %v3598, %v3822
    %v3824 = vpop.f32.mrf.mxu0
    %v3825 = vpop.f32.mrf.mxu0
    %v3826 = vadd.f32 %v3601, %v3825
    %v3827 = vpop.f32.mrf.mxu0
    %3828 = vmatprep.mubr.bf16.mxu0 %v2489
    %3829 = vmatmul.mubr.bf16.gmra.mxu0 %v2488
    %v3830 = vpop.f32.mrf.mxu0
    %v3831 = vadd.f32 %v3606, %v3830
    %v3832 = vpop.f32.mrf.mxu0
    %v3833 = vpop.f32.mrf.mxu0
    %v3834 = vadd.f32 %v3609, %v3833
    %v3835 = vpop.f32.mrf.mxu0
    %3836 = vmatprep.mubr.bf16.mxu0 %v2498
    %3837 = vmatmul.mubr.bf16.gmra.mxu0 %v2497
    %v3838 = vpop.f32.mrf.mxu0
    %v3839 = vadd.f32 %v3614, %v3838
    %v3840 = vpop.f32.mrf.mxu0
    %v3841 = vpop.f32.mrf.mxu0
    %v3842 = vadd.f32 %v3617, %v3841
    %v3843 = vpop.f32.mrf.mxu0
    %3844 = vmatprep.mubr.bf16.mxu0 %v2507
    %3845 = vmatmul.mubr.bf16.gmra.mxu0 %v2506
    %v3846 = vpop.f32.mrf.mxu0
    %v3847 = vadd.f32 %v3622, %v3846
    %v3848 = vpop.f32.mrf.mxu0
    %v3849 = vpop.f32.mrf.mxu0
    %v3850 = vadd.f32 %v3625, %v3849
    %v3851 = vpop.f32.mrf.mxu0
    %3852 = vmatprep.mubr.bf16.mxu0 %v2516
    %3853 = vmatmul.mubr.bf16.gmra.mxu0 %v2515
    %v3854 = vpop.f32.mrf.mxu0
    %v3855 = vadd.f32 %v3630, %v3854
    %v3856 = vpop.f32.mrf.mxu0
    %v3857 = vpop.f32.mrf.mxu0
    %v3858 = vadd.f32 %v3633, %v3857
    %v3859 = vpop.f32.mrf.mxu0
    %3860 = vmatprep.mubr.bf16.mxu0 %v2525
    %3861 = vmatmul.mubr.bf16.gmra.mxu0 %v2524
    %v3862 = vpop.f32.mrf.mxu0
    %v3863 = vadd.f32 %v3638, %v3862
    %v3864 = vpop.f32.mrf.mxu0
    %v3865 = vpop.f32.mrf.mxu0
    %v3866 = vadd.f32 %v3641, %v3865
    %v3867 = vpop.f32.mrf.mxu0
    %3868 = vmatprep.mubr.bf16.mxu0 %v2534
    %3869 = vmatmul.mubr.bf16.gmra.mxu0 %v2533
    %v3870 = vpop.f32.mrf.mxu0
    %v3871 = vadd.f32 %v3646, %v3870
    %v3872 = vpop.f32.mrf.mxu0
    %v3873 = vpop.f32.mrf.mxu0
    %v3874 = vadd.f32 %v3649, %v3873
    %v3875 = vpop.f32.mrf.mxu0
    %3876 = vmatprep.mubr.bf16.mxu0 %v2543
    %3877 = vmatmul.mubr.bf16.gmra.mxu0 %v2542
    %v3878 = vpop.f32.mrf.mxu0
    %v3879 = vadd.f32 %v3654, %v3878
    %v3880 = vpop.f32.mrf.mxu0
    %v3881 = vpop.f32.mrf.mxu0
    %v3882 = vadd.f32 %v3657, %v3881
    %v3883 = vpop.f32.mrf.mxu0
    %3884 = vmatprep.mubr.bf16.mxu0 %v2552
    %3885 = vmatmul.mubr.bf16.gmra.mxu0 %v2551
    %v3886 = vpop.f32.mrf.mxu0
    %v3887 = vadd.f32 %v3662, %v3886
    %v3888 = vpop.f32.mrf.mxu0
    %v3889 = vpop.f32.mrf.mxu0
    %v3890 = vadd.f32 %v3665, %v3889
    %v3891 = vpop.f32.mrf.mxu0
    %3892 = vmatprep.mubr.bf16.mxu0 %v2561
    %3893 = vmatmul.mubr.bf16.gmra.mxu0 %v2560
    %v3894 = vpop.f32.mrf.mxu0
    %v3895 = vadd.f32 %v3670, %v3894
    %v3896 = vpop.f32.mrf.mxu0
    %v3897 = vpop.f32.mrf.mxu0
    %v3898 = vadd.f32 %v3673, %v3897
    %v3899 = vpop.f32.mrf.mxu0
    %3900 = vmatprep.mubr.bf16.mxu0 %v2570
    %3901 = vmatmul.mubr.bf16.gmra.mxu0 %v2569
    %v3902 = vpop.f32.mrf.mxu0
    %v3903 = vadd.f32 %v3678, %v3902
    %v3904 = vpop.f32.mrf.mxu0
    %v3905 = vpop.f32.mrf.mxu0
    %v3906 = vadd.f32 %v3681, %v3905
    %v3907 = vpop.f32.mrf.mxu0
    %3908 = vmatprep.mubr.bf16.mxu0 %v2579
    %3909 = vmatmul.mubr.bf16.gmra.mxu0 %v2578
    %v3910 = vpop.f32.mrf.mxu0
    %v3911 = vadd.f32 %v3686, %v3910
    %v3912 = vpop.f32.mrf.mxu0
    %v3913 = vpop.f32.mrf.mxu0
    %v3914 = vadd.f32 %v3689, %v3913
    %v3915 = vpop.f32.mrf.mxu0
    %3916 = vmatprep.mubr.bf16.mxu0 %v2588
    %3917 = vmatmul.mubr.bf16.gmra.mxu0 %v2587
    %v3918 = vpop.f32.mrf.mxu0
    %v3919 = vadd.f32 %v3694, %v3918
    %v3920 = vpop.f32.mrf.mxu0
    %v3921 = vpop.f32.mrf.mxu0
    %v3922 = vadd.f32 %v3697, %v3921
    %v3923 = vpop.f32.mrf.mxu0
    %3924 = vmatprep.mubr.bf16.mxu0 %v2597
    %3925 = vmatmul.mubr.bf16.gmra.mxu0 %v2596
    %v3926 = vpop.f32.mrf.mxu0
    %v3927 = vadd.f32 %v3702, %v3926
    %v3928 = vpop.f32.mrf.mxu0
    %v3929 = vpop.f32.mrf.mxu0
    %v3930 = vadd.f32 %v3705, %v3929
    %v3931 = vpop.f32.mrf.mxu0
    %3932 = vmatprep.mubr.bf16.mxu0 %v2606
    %3933 = vmatmul.mubr.bf16.gmra.mxu0 %v2605
    %v3934 = vpop.f32.mrf.mxu0
    %v3935 = vadd.f32 %v3710, %v3934
    %v3936 = vpop.f32.mrf.mxu0
    %v3937 = vpop.f32.mrf.mxu0
    %v3938 = vadd.f32 %v3713, %v3937
    %v3939 = vpop.f32.mrf.mxu0
    %3940 = vmatprep.mubr.bf16.mxu0 %v2615
    %3941 = vmatmul.mubr.bf16.gmra.mxu0 %v2614
    %v3942 = vpop.f32.mrf.mxu0
    %v3943 = vadd.f32 %v3718, %v3942
    %v3944 = vpop.f32.mrf.mxu0
    %v3945 = vpop.f32.mrf.mxu0
    %v3946 = vadd.f32 %v3721, %v3945
    %v3947 = vpop.f32.mrf.mxu0
    %3948 = vmatprep.mubr.bf16.mxu0 %v2624
    %3949 = vmatmul.mubr.bf16.gmra.mxu0 %v2623
    %v3950 = vpop.f32.mrf.mxu0
    %v3951 = vadd.f32 %v3726, %v3950
    %v3952 = vpop.f32.mrf.mxu0
    %v3953 = vpop.f32.mrf.mxu0
    %v3954 = vadd.f32 %v3729, %v3953
    %v3955 = vpop.f32.mrf.mxu0
    %3956 = vmatprep.mubr.bf16.mxu0 %v2633
    %3957 = vmatmul.mubr.bf16.gmra.mxu0 %v2632
    %v3958 = vpop.f32.mrf.mxu0
    %v3959 = vadd.f32 %v3734, %v3958
    %v3960 = vpop.f32.mrf.mxu0
    %v3961 = vpop.f32.mrf.mxu0
    %v3962 = vadd.f32 %v3737, %v3961
    %v3963 = vpop.f32.mrf.mxu0
    %3964 = vmatprep.mubr.bf16.mxu0 %v2642
    %3965 = vmatmul.mubr.bf16.gmra.mxu0 %v2641
    %v3966 = vpop.f32.mrf.mxu0
    %v3967 = vadd.f32 %v3742, %v3966
    %v3968 = vpop.f32.mrf.mxu0
    %v3969 = vpop.f32.mrf.mxu0
    %v3970 = vadd.f32 %v3745, %v3969
    %v3971 = vpop.f32.mrf.mxu0
    %3972 = vmatprep.mubr.bf16.mxu0 %v2651
    %3973 = vmatmul.mubr.bf16.gmra.mxu0 %v2650
    %v3974 = vpop.f32.mrf.mxu0
    %v3975 = vadd.f32 %v3750, %v3974
    %v3976 = vpop.f32.mrf.mxu0
    %v3977 = vpop.f32.mrf.mxu0
    %v3978 = vadd.f32 %v3753, %v3977
    %v3979 = vpop.f32.mrf.mxu0
    %3980 = vmatprep.mubr.bf16.mxu0 %v2660
    %3981 = vmatmul.mubr.bf16.gmra.mxu0 %v2659
    %v3982 = vpop.f32.mrf.mxu0
    %v3983 = vadd.f32 %v3758, %v3982
    %v3984 = vpop.f32.mrf.mxu0
    %v3985 = vpop.f32.mrf.mxu0
    %v3986 = vadd.f32 %v3761, %v3985
    %v3987 = vpop.f32.mrf.mxu0
    %3988 = vmatprep.mubr.bf16.mxu0 %v2669
    %3989 = vmatmul.mubr.bf16.gmra.mxu0 %v2668
    %v3990 = vpop.f32.mrf.mxu0
    %v3991 = vadd.f32 %v3766, %v3990
    %v3992 = vpop.f32.mrf.mxu0
    %v3993 = vpop.f32.mrf.mxu0
    %v3994 = vadd.f32 %v3769, %v3993
    %v3995 = vpop.f32.mrf.mxu0
    %3996 = vmatprep.mubr.bf16.mxu0 %v2678
    %3997 = vmatmul.mubr.bf16.gmra.mxu0 %v2677
    %v3998 = vpop.f32.mrf.mxu0
    %v3999 = vadd.f32 %v3774, %v3998
    %v4000 = vpop.f32.mrf.mxu0
    %v4001 = vpop.f32.mrf.mxu0
    %v4002 = vadd.f32 %v3777, %v4001
    %v4003 = vpop.f32.mrf.mxu0
    %4004 = vdwg.mxu0
    %4005 = vmatprep.subr.bf16.mxu0 0
    %4006 = vmatpush1.bf16.msra.mxu0 %v3241
    %4007 = vmatprep.subr.bf16.mxu0 0
    %4008 = vmatpush1.bf16.msra.mxu0 %v3240
    %4009 = vmatprep.subr.bf16.mxu0 0
    %4010 = vmatpush1.bf16.msra.mxu0 %v3239
    %4011 = vmatprep.subr.bf16.mxu0 0
    %4012 = vmatpush1.bf16.msra.mxu0 %v3238
    %4013 = vmatprep.subr.bf16.mxu0 0
    %4014 = vmatpush1.bf16.msra.mxu0 %v3237
    %4015 = vmatprep.subr.bf16.mxu0 0
    %4016 = vmatpush1.bf16.msra.mxu0 %v3236
    %4017 = vmatprep.subr.bf16.mxu0 0
    %4018 = vmatpush1.bf16.msra.mxu0 %v3235
    %4019 = vmatprep.subr.bf16.mxu0 0
    %4020 = vmatpush1.bf16.msra.mxu0 %v3234
    %4021 = vmatprep.subr.bf16.mxu0 0
    %4022 = vmatpush2.bf16.msra.mxu0 %v3249
    %4023 = vmatprep.subr.bf16.mxu0 0
    %4024 = vmatpush2.bf16.msra.mxu0 %v3248
    %4025 = vmatprep.subr.bf16.mxu0 0
    %4026 = vmatpush2.bf16.msra.mxu0 %v3247
    %4027 = vmatprep.subr.bf16.mxu0 0
    %4028 = vmatpush2.bf16.msra.mxu0 %v3246
    %4029 = vmatprep.subr.bf16.mxu0 0
    %4030 = vmatpush2.bf16.msra.mxu0 %v3245
    %4031 = vmatprep.subr.bf16.mxu0 0
    %4032 = vmatpush2.bf16.msra.mxu0 %v3244
    %4033 = vmatprep.subr.bf16.mxu0 0
    %4034 = vmatpush2.bf16.msra.mxu0 %v3243
    %4035 = vmatprep.subr.bf16.mxu0 0
    %4036 = vmatpush2.bf16.msra.mxu0 %v3242
    %4037 = vmatprep.mubr.bf16.mxu0 %v2473
    %4038 = vmatmul.mubr.bf16.gmra.mxu0 %v2472
    %v4039 = vpop.f32.mrf.mxu0
    %v4040 = vadd.f32 %v3815, %v4039
    %v4041 = vpop.f32.mrf.mxu0
    %v4042 = vpop.f32.mrf.mxu0
    %v4043 = vadd.f32 %v3818, %v4042
    %v4044 = vpop.f32.mrf.mxu0
    %4045 = vmatprep.mubr.bf16.mxu0 %v2482
    %4046 = vmatmul.mubr.bf16.gmra.mxu0 %v2481
    %v4047 = vpop.f32.mrf.mxu0
    %v4048 = vadd.f32 %v3823, %v4047
    %v4049 = vpop.f32.mrf.mxu0
    %v4050 = vpop.f32.mrf.mxu0
    %v4051 = vadd.f32 %v3826, %v4050
    %v4052 = vpop.f32.mrf.mxu0
    %4053 = vmatprep.mubr.bf16.mxu0 %v2491
    %4054 = vmatmul.mubr.bf16.gmra.mxu0 %v2490
    %v4055 = vpop.f32.mrf.mxu0
    %v4056 = vadd.f32 %v3831, %v4055
    %v4057 = vpop.f32.mrf.mxu0
    %v4058 = vpop.f32.mrf.mxu0
    %v4059 = vadd.f32 %v3834, %v4058
    %v4060 = vpop.f32.mrf.mxu0
    %4061 = vmatprep.mubr.bf16.mxu0 %v2500
    %4062 = vmatmul.mubr.bf16.gmra.mxu0 %v2499
    %v4063 = vpop.f32.mrf.mxu0
    %v4064 = vadd.f32 %v3839, %v4063
    %v4065 = vpop.f32.mrf.mxu0
    %v4066 = vpop.f32.mrf.mxu0
    %v4067 = vadd.f32 %v3842, %v4066
    %v4068 = vpop.f32.mrf.mxu0
    %4069 = vmatprep.mubr.bf16.mxu0 %v2509
    %4070 = vmatmul.mubr.bf16.gmra.mxu0 %v2508
    %v4071 = vpop.f32.mrf.mxu0
    %v4072 = vadd.f32 %v3847, %v4071
    %v4073 = vpop.f32.mrf.mxu0
    %v4074 = vpop.f32.mrf.mxu0
    %v4075 = vadd.f32 %v3850, %v4074
    %v4076 = vpop.f32.mrf.mxu0
    %4077 = vmatprep.mubr.bf16.mxu0 %v2518
    %4078 = vmatmul.mubr.bf16.gmra.mxu0 %v2517
    %v4079 = vpop.f32.mrf.mxu0
    %v4080 = vadd.f32 %v3855, %v4079
    %v4081 = vpop.f32.mrf.mxu0
    %v4082 = vpop.f32.mrf.mxu0
    %v4083 = vadd.f32 %v3858, %v4082
    %v4084 = vpop.f32.mrf.mxu0
    %4085 = vmatprep.mubr.bf16.mxu0 %v2527
    %4086 = vmatmul.mubr.bf16.gmra.mxu0 %v2526
    %v4087 = vpop.f32.mrf.mxu0
    %v4088 = vadd.f32 %v3863, %v4087
    %v4089 = vpop.f32.mrf.mxu0
    %v4090 = vpop.f32.mrf.mxu0
    %v4091 = vadd.f32 %v3866, %v4090
    %v4092 = vpop.f32.mrf.mxu0
    %4093 = vmatprep.mubr.bf16.mxu0 %v2536
    %4094 = vmatmul.mubr.bf16.gmra.mxu0 %v2535
    %v4095 = vpop.f32.mrf.mxu0
    %v4096 = vadd.f32 %v3871, %v4095
    %v4097 = vpop.f32.mrf.mxu0
    %v4098 = vpop.f32.mrf.mxu0
    %v4099 = vadd.f32 %v3874, %v4098
    %v4100 = vpop.f32.mrf.mxu0
    %4101 = vmatprep.mubr.bf16.mxu0 %v2545
    %4102 = vmatmul.mubr.bf16.gmra.mxu0 %v2544
    %v4103 = vpop.f32.mrf.mxu0
    %v4104 = vadd.f32 %v3879, %v4103
    %v4105 = vpop.f32.mrf.mxu0
    %v4106 = vpop.f32.mrf.mxu0
    %v4107 = vadd.f32 %v3882, %v4106
    %v4108 = vpop.f32.mrf.mxu0
    %4109 = vmatprep.mubr.bf16.mxu0 %v2554
    %4110 = vmatmul.mubr.bf16.gmra.mxu0 %v2553
    %v4111 = vpop.f32.mrf.mxu0
    %v4112 = vadd.f32 %v3887, %v4111
    %v4113 = vpop.f32.mrf.mxu0
    %v4114 = vpop.f32.mrf.mxu0
    %v4115 = vadd.f32 %v3890, %v4114
    %v4116 = vpop.f32.mrf.mxu0
    %4117 = vmatprep.mubr.bf16.mxu0 %v2563
    %4118 = vmatmul.mubr.bf16.gmra.mxu0 %v2562
    %v4119 = vpop.f32.mrf.mxu0
    %v4120 = vadd.f32 %v3895, %v4119
    %v4121 = vpop.f32.mrf.mxu0
    %v4122 = vpop.f32.mrf.mxu0
    %v4123 = vadd.f32 %v3898, %v4122
    %v4124 = vpop.f32.mrf.mxu0
    %4125 = vmatprep.mubr.bf16.mxu0 %v2572
    %4126 = vmatmul.mubr.bf16.gmra.mxu0 %v2571
    %v4127 = vpop.f32.mrf.mxu0
    %v4128 = vadd.f32 %v3903, %v4127
    %v4129 = vpop.f32.mrf.mxu0
    %v4130 = vpop.f32.mrf.mxu0
    %v4131 = vadd.f32 %v3906, %v4130
    %v4132 = vpop.f32.mrf.mxu0
    %4133 = vmatprep.mubr.bf16.mxu0 %v2581
    %4134 = vmatmul.mubr.bf16.gmra.mxu0 %v2580
    %v4135 = vpop.f32.mrf.mxu0
    %v4136 = vadd.f32 %v3911, %v4135
    %v4137 = vpop.f32.mrf.mxu0
    %v4138 = vpop.f32.mrf.mxu0
    %v4139 = vadd.f32 %v3914, %v4138
    %v4140 = vpop.f32.mrf.mxu0
    %4141 = vmatprep.mubr.bf16.mxu0 %v2590
    %4142 = vmatmul.mubr.bf16.gmra.mxu0 %v2589
    %v4143 = vpop.f32.mrf.mxu0
    %v4144 = vadd.f32 %v3919, %v4143
    %v4145 = vpop.f32.mrf.mxu0
    %v4146 = vpop.f32.mrf.mxu0
    %v4147 = vadd.f32 %v3922, %v4146
    %v4148 = vpop.f32.mrf.mxu0
    %4149 = vmatprep.mubr.bf16.mxu0 %v2599
    %4150 = vmatmul.mubr.bf16.gmra.mxu0 %v2598
    %v4151 = vpop.f32.mrf.mxu0
    %v4152 = vadd.f32 %v3927, %v4151
    %v4153 = vpop.f32.mrf.mxu0
    %v4154 = vpop.f32.mrf.mxu0
    %v4155 = vadd.f32 %v3930, %v4154
    %v4156 = vpop.f32.mrf.mxu0
    %4157 = vmatprep.mubr.bf16.mxu0 %v2608
    %4158 = vmatmul.mubr.bf16.gmra.mxu0 %v2607
    %v4159 = vpop.f32.mrf.mxu0
    %v4160 = vadd.f32 %v3935, %v4159
    %v4161 = vpop.f32.mrf.mxu0
    %v4162 = vpop.f32.mrf.mxu0
    %v4163 = vadd.f32 %v3938, %v4162
    %v4164 = vpop.f32.mrf.mxu0
    %4165 = vmatprep.mubr.bf16.mxu0 %v2617
    %4166 = vmatmul.mubr.bf16.gmra.mxu0 %v2616
    %v4167 = vpop.f32.mrf.mxu0
    %v4168 = vadd.f32 %v3943, %v4167
    %v4169 = vpop.f32.mrf.mxu0
    %v4170 = vpop.f32.mrf.mxu0
    %v4171 = vadd.f32 %v3946, %v4170
    %v4172 = vpop.f32.mrf.mxu0
    %4173 = vmatprep.mubr.bf16.mxu0 %v2626
    %4174 = vmatmul.mubr.bf16.gmra.mxu0 %v2625
    %v4175 = vpop.f32.mrf.mxu0
    %v4176 = vadd.f32 %v3951, %v4175
    %v4177 = vpop.f32.mrf.mxu0
    %v4178 = vpop.f32.mrf.mxu0
    %v4179 = vadd.f32 %v3954, %v4178
    %v4180 = vpop.f32.mrf.mxu0
    %4181 = vmatprep.mubr.bf16.mxu0 %v2635
    %4182 = vmatmul.mubr.bf16.gmra.mxu0 %v2634
    %v4183 = vpop.f32.mrf.mxu0
    %v4184 = vadd.f32 %v3959, %v4183
    %v4185 = vpop.f32.mrf.mxu0
    %v4186 = vpop.f32.mrf.mxu0
    %v4187 = vadd.f32 %v3962, %v4186
    %v4188 = vpop.f32.mrf.mxu0
    %4189 = vmatprep.mubr.bf16.mxu0 %v2644
    %4190 = vmatmul.mubr.bf16.gmra.mxu0 %v2643
    %v4191 = vpop.f32.mrf.mxu0
    %v4192 = vadd.f32 %v3967, %v4191
    %v4193 = vpop.f32.mrf.mxu0
    %v4194 = vpop.f32.mrf.mxu0
    %v4195 = vadd.f32 %v3970, %v4194
    %v4196 = vpop.f32.mrf.mxu0
    %4197 = vmatprep.mubr.bf16.mxu0 %v2653
    %4198 = vmatmul.mubr.bf16.gmra.mxu0 %v2652
    %v4199 = vpop.f32.mrf.mxu0
    %v4200 = vadd.f32 %v3975, %v4199
    %v4201 = vpop.f32.mrf.mxu0
    %v4202 = vpop.f32.mrf.mxu0
    %v4203 = vadd.f32 %v3978, %v4202
    %v4204 = vpop.f32.mrf.mxu0
    %4205 = vmatprep.mubr.bf16.mxu0 %v2662
    %4206 = vmatmul.mubr.bf16.gmra.mxu0 %v2661
    %v4207 = vpop.f32.mrf.mxu0
    %v4208 = vadd.f32 %v3983, %v4207
    %v4209 = vpop.f32.mrf.mxu0
    %v4210 = vpop.f32.mrf.mxu0
    %v4211 = vadd.f32 %v3986, %v4210
    %v4212 = vpop.f32.mrf.mxu0
    %4213 = vmatprep.mubr.bf16.mxu0 %v2671
    %4214 = vmatmul.mubr.bf16.gmra.mxu0 %v2670
    %v4215 = vpop.f32.mrf.mxu0
    %v4216 = vadd.f32 %v3991, %v4215
    %v4217 = vpop.f32.mrf.mxu0
    %v4218 = vpop.f32.mrf.mxu0
    %v4219 = vadd.f32 %v3994, %v4218
    %v4220 = vpop.f32.mrf.mxu0
    %4221 = vmatprep.mubr.bf16.mxu0 %v2680
    %4222 = vmatmul.mubr.bf16.gmra.mxu0 %v2679
    %v4223 = vpop.f32.mrf.mxu0
    %v4224 = vadd.f32 %v3999, %v4223
    %v4225 = vpop.f32.mrf.mxu0
    %v4226 = vpop.f32.mrf.mxu0
    %v4227 = vadd.f32 %v4002, %v4226
    %v4228 = vpop.f32.mrf.mxu0
    %4229 = vdwg.mxu0
    %4230 = vmatprep.subr.bf16.mxu0 0
    %4231 = vmatpush1.bf16.msra.mxu0 %v3257
    %4232 = vmatprep.subr.bf16.mxu0 0
    %4233 = vmatpush1.bf16.msra.mxu0 %v3256
    %4234 = vmatprep.subr.bf16.mxu0 0
    %4235 = vmatpush1.bf16.msra.mxu0 %v3255
    %4236 = vmatprep.subr.bf16.mxu0 0
    %4237 = vmatpush1.bf16.msra.mxu0 %v3254
    %4238 = vmatprep.subr.bf16.mxu0 0
    %4239 = vmatpush1.bf16.msra.mxu0 %v3253
    %4240 = vmatprep.subr.bf16.mxu0 0
    %4241 = vmatpush1.bf16.msra.mxu0 %v3252
    %4242 = vmatprep.subr.bf16.mxu0 0
    %4243 = vmatpush1.bf16.msra.mxu0 %v3251
    %4244 = vmatprep.subr.bf16.mxu0 0
    %4245 = vmatpush1.bf16.msra.mxu0 %v3250
    %4246 = vmatprep.subr.bf16.mxu0 0
    %4247 = vmatpush2.bf16.msra.mxu0 0
    %4248 = vmatprep.subr.bf16.mxu0 0
    %4249 = vmatpush2.bf16.msra.mxu0 0
    %4250 = vmatprep.subr.bf16.mxu0 0
    %4251 = vmatpush2.bf16.msra.mxu0 0
    %4252 = vmatprep.subr.bf16.mxu0 0
    %4253 = vmatpush2.bf16.msra.mxu0 0
    %4254 = vmatprep.subr.bf16.mxu0 0
    %4255 = vmatpush2.bf16.msra.mxu0 0
    %4256 = vmatprep.subr.bf16.mxu0 0
    %4257 = vmatpush2.bf16.msra.mxu0 0
    %4258 = vmatprep.subr.bf16.mxu0 0
    %4259 = vmatpush2.bf16.msra.mxu0 0
    %4260 = vmatprep.subr.bf16.mxu0 0
    %4261 = vmatpush2.bf16.msra.mxu0 0
    %4262 = vmatprep.mubr.bf16.mxu0 0
    %4263 = vmatmul.mubr.bf16.gmra.mxu0 %v2474
    %v4264 = vpop.f32.mrf.mxu0
    %v4265 = vadd.f32 %v4040, %v4264
    %v4266 = vpop.f32.mrf.mxu0
    %v4267 = vpop.f32.mrf.mxu0
    %v4268 = vadd.f32 %v4043, %v4267
    %v4269 = vpop.f32.mrf.mxu0
    %4270 = vmatprep.mubr.bf16.mxu0 0
    %4271 = vmatmul.mubr.bf16.gmra.mxu0 %v2483
    %v4272 = vpop.f32.mrf.mxu0
    %v4273 = vadd.f32 %v4048, %v4272
    %v4274 = vpop.f32.mrf.mxu0
    %v4275 = vpop.f32.mrf.mxu0
    %v4276 = vadd.f32 %v4051, %v4275
    %v4277 = vpop.f32.mrf.mxu0
    %4278 = vmatprep.mubr.bf16.mxu0 0
    %4279 = vmatmul.mubr.bf16.gmra.mxu0 %v2492
    %v4280 = vpop.f32.mrf.mxu0
    %v4281 = vadd.f32 %v4056, %v4280
    %v4282 = vpop.f32.mrf.mxu0
    %v4283 = vpop.f32.mrf.mxu0
    %v4284 = vadd.f32 %v4059, %v4283
    %v4285 = vpop.f32.mrf.mxu0
    %4286 = vmatprep.mubr.bf16.mxu0 0
    %4287 = vmatmul.mubr.bf16.gmra.mxu0 %v2501
    %v4288 = vpop.f32.mrf.mxu0
    %v4289 = vadd.f32 %v4064, %v4288
    %v4290 = vpop.f32.mrf.mxu0
    %v4291 = vpop.f32.mrf.mxu0
    %v4292 = vadd.f32 %v4067, %v4291
    %v4293 = vpop.f32.mrf.mxu0
    %4294 = vmatprep.mubr.bf16.mxu0 0
    %4295 = vmatmul.mubr.bf16.gmra.mxu0 %v2510
    %v4296 = vpop.f32.mrf.mxu0
    %v4297 = vadd.f32 %v4072, %v4296
    %v4298 = vpop.f32.mrf.mxu0
    %v4299 = vpop.f32.mrf.mxu0
    %v4300 = vadd.f32 %v4075, %v4299
    %v4301 = vpop.f32.mrf.mxu0
    %4302 = vmatprep.mubr.bf16.mxu0 0
    %4303 = vmatmul.mubr.bf16.gmra.mxu0 %v2519
    %v4304 = vpop.f32.mrf.mxu0
    %v4305 = vadd.f32 %v4080, %v4304
    %v4306 = vpop.f32.mrf.mxu0
    %v4307 = vpop.f32.mrf.mxu0
    %v4308 = vadd.f32 %v4083, %v4307
    %v4309 = vpop.f32.mrf.mxu0
    %4310 = vmatprep.mubr.bf16.mxu0 0
    %4311 = vmatmul.mubr.bf16.gmra.mxu0 %v2528
    %v4312 = vpop.f32.mrf.mxu0
    %v4313 = vadd.f32 %v4088, %v4312
    %v4314 = vpop.f32.mrf.mxu0
    %v4315 = vpop.f32.mrf.mxu0
    %v4316 = vadd.f32 %v4091, %v4315
    %v4317 = vpop.f32.mrf.mxu0
    %4318 = vmatprep.mubr.bf16.mxu0 0
    %4319 = vmatmul.mubr.bf16.gmra.mxu0 %v2537
    %v4320 = vpop.f32.mrf.mxu0
    %v4321 = vadd.f32 %v4096, %v4320
    %v4322 = vpop.f32.mrf.mxu0
    %v4323 = vpop.f32.mrf.mxu0
    %v4324 = vadd.f32 %v4099, %v4323
    %v4325 = vpop.f32.mrf.mxu0
    %4326 = vmatprep.mubr.bf16.mxu0 0
    %4327 = vmatmul.mubr.bf16.gmra.mxu0 %v2546
    %v4328 = vpop.f32.mrf.mxu0
    %v4329 = vadd.f32 %v4104, %v4328
    %v4330 = vpop.f32.mrf.mxu0
    %v4331 = vpop.f32.mrf.mxu0
    %v4332 = vadd.f32 %v4107, %v4331
    %v4333 = vpop.f32.mrf.mxu0
    %4334 = vmatprep.mubr.bf16.mxu0 0
    %4335 = vmatmul.mubr.bf16.gmra.mxu0 %v2555
    %v4336 = vpop.f32.mrf.mxu0
    %v4337 = vadd.f32 %v4112, %v4336
    %v4338 = vpop.f32.mrf.mxu0
    %v4339 = vpop.f32.mrf.mxu0
    %v4340 = vadd.f32 %v4115, %v4339
    %v4341 = vpop.f32.mrf.mxu0
    %4342 = vmatprep.mubr.bf16.mxu0 0
    %4343 = vmatmul.mubr.bf16.gmra.mxu0 %v2564
    %v4344 = vpop.f32.mrf.mxu0
    %v4345 = vadd.f32 %v4120, %v4344
    %v4346 = vpop.f32.mrf.mxu0
    %v4347 = vpop.f32.mrf.mxu0
    %v4348 = vadd.f32 %v4123, %v4347
    %v4349 = vpop.f32.mrf.mxu0
    %4350 = vmatprep.mubr.bf16.mxu0 0
    %4351 = vmatmul.mubr.bf16.gmra.mxu0 %v2573
    %v4352 = vpop.f32.mrf.mxu0
    %v4353 = vadd.f32 %v4128, %v4352
    %v4354 = vpop.f32.mrf.mxu0
    %v4355 = vpop.f32.mrf.mxu0
    %v4356 = vadd.f32 %v4131, %v4355
    %v4357 = vpop.f32.mrf.mxu0
    %4358 = vmatprep.mubr.bf16.mxu0 0
    %4359 = vmatmul.mubr.bf16.gmra.mxu0 %v2582
    %v4360 = vpop.f32.mrf.mxu0
    %v4361 = vadd.f32 %v4136, %v4360
    %v4362 = vpop.f32.mrf.mxu0
    %v4363 = vpop.f32.mrf.mxu0
    %v4364 = vadd.f32 %v4139, %v4363
    %v4365 = vpop.f32.mrf.mxu0
    %4366 = vmatprep.mubr.bf16.mxu0 0
    %4367 = vmatmul.mubr.bf16.gmra.mxu0 %v2591
    %v4368 = vpop.f32.mrf.mxu0
    %v4369 = vadd.f32 %v4144, %v4368
    %v4370 = vpop.f32.mrf.mxu0
    %v4371 = vpop.f32.mrf.mxu0
    %v4372 = vadd.f32 %v4147, %v4371
    %v4373 = vpop.f32.mrf.mxu0
    %4374 = vmatprep.mubr.bf16.mxu0 0
    %4375 = vmatmul.mubr.bf16.gmra.mxu0 %v2600
    %v4376 = vpop.f32.mrf.mxu0
    %v4377 = vadd.f32 %v4152, %v4376
    %v4378 = vpop.f32.mrf.mxu0
    %v4379 = vpop.f32.mrf.mxu0
    %v4380 = vadd.f32 %v4155, %v4379
    %v4381 = vpop.f32.mrf.mxu0
    %4382 = vmatprep.mubr.bf16.mxu0 0
    %4383 = vmatmul.mubr.bf16.gmra.mxu0 %v2609
    %v4384 = vpop.f32.mrf.mxu0
    %v4385 = vadd.f32 %v4160, %v4384
    %v4386 = vpop.f32.mrf.mxu0
    %v4387 = vpop.f32.mrf.mxu0
    %v4388 = vadd.f32 %v4163, %v4387
    %v4389 = vpop.f32.mrf.mxu0
    %4390 = vmatprep.mubr.bf16.mxu0 0
    %4391 = vmatmul.mubr.bf16.gmra.mxu0 %v2618
    %v4392 = vpop.f32.mrf.mxu0
    %v4393 = vadd.f32 %v4168, %v4392
    %v4394 = vpop.f32.mrf.mxu0
    %v4395 = vpop.f32.mrf.mxu0
    %v4396 = vadd.f32 %v4171, %v4395
    %v4397 = vpop.f32.mrf.mxu0
    %4398 = vmatprep.mubr.bf16.mxu0 0
    %4399 = vmatmul.mubr.bf16.gmra.mxu0 %v2627
    %v4400 = vpop.f32.mrf.mxu0
    %v4401 = vadd.f32 %v4176, %v4400
    %v4402 = vpop.f32.mrf.mxu0
    %v4403 = vpop.f32.mrf.mxu0
    %v4404 = vadd.f32 %v4179, %v4403
    %v4405 = vpop.f32.mrf.mxu0
    %4406 = vmatprep.mubr.bf16.mxu0 0
    %4407 = vmatmul.mubr.bf16.gmra.mxu0 %v2636
    %v4408 = vpop.f32.mrf.mxu0
    %v4409 = vadd.f32 %v4184, %v4408
    %v4410 = vpop.f32.mrf.mxu0
    %v4411 = vpop.f32.mrf.mxu0
    %v4412 = vadd.f32 %v4187, %v4411
    %v4413 = vpop.f32.mrf.mxu0
    %4414 = vmatprep.mubr.bf16.mxu0 0
    %4415 = vmatmul.mubr.bf16.gmra.mxu0 %v2645
    %v4416 = vpop.f32.mrf.mxu0
    %v4417 = vadd.f32 %v4192, %v4416
    %v4418 = vpop.f32.mrf.mxu0
    %v4419 = vpop.f32.mrf.mxu0
    %v4420 = vadd.f32 %v4195, %v4419
    %v4421 = vpop.f32.mrf.mxu0
    %4422 = vmatprep.mubr.bf16.mxu0 0
    %4423 = vmatmul.mubr.bf16.gmra.mxu0 %v2654
    %v4424 = vpop.f32.mrf.mxu0
    %v4425 = vadd.f32 %v4200, %v4424
    %v4426 = vpop.f32.mrf.mxu0
    %v4427 = vpop.f32.mrf.mxu0
    %v4428 = vadd.f32 %v4203, %v4427
    %v4429 = vpop.f32.mrf.mxu0
    %4430 = vmatprep.mubr.bf16.mxu0 0
    %4431 = vmatmul.mubr.bf16.gmra.mxu0 %v2663
    %v4432 = vpop.f32.mrf.mxu0
    %v4433 = vadd.f32 %v4208, %v4432
    %v4434 = vpop.f32.mrf.mxu0
    %v4435 = vpop.f32.mrf.mxu0
    %v4436 = vadd.f32 %v4211, %v4435
    %v4437 = vpop.f32.mrf.mxu0
    %4438 = vmatprep.mubr.bf16.mxu0 0
    %4439 = vmatmul.mubr.bf16.gmra.mxu0 %v2672
    %v4440 = vpop.f32.mrf.mxu0
    %v4441 = vadd.f32 %v4216, %v4440
    %v4442 = vpop.f32.mrf.mxu0
    %v4443 = vpop.f32.mrf.mxu0
    %v4444 = vadd.f32 %v4219, %v4443
    %v4445 = vpop.f32.mrf.mxu0
    %4446 = vmatprep.mubr.bf16.mxu0 0
    %4447 = vmatmul.mubr.bf16.gmra.mxu0 %v2681
    %v4448 = vpop.f32.mrf.mxu0
    %v4449 = vadd.f32 %v4224, %v4448
    %v4450 = vpop.f32.mrf.mxu0
    %v4451 = vpop.f32.mrf.mxu0
    %v4452 = vadd.f32 %v4227, %v4451
    %v4453 = vpop.f32.mrf.mxu0
    %4454 = vdwg.mxu0
    %4455 = vst.msk [vmem:[%s3] sm:$0xff] %vm164, %v4265
    %4456 = vst.msk [vmem:[%s3 + $0x8] sm:$0xff] %vm164, %v4268
    %4457 = vst.msk [vmem:[%s3 + $0x10] sm:$0xff] %vm164, %v4273
    %4458 = vst.msk [vmem:[%s3 + $0x18] sm:$0xff] %vm164, %v4276
    %4459 = vst.msk [vmem:[%s3 + $0x20] sm:$0xff] %vm164, %v4281
    %4460 = vst.msk [vmem:[%s3 + $0x28] sm:$0xff] %vm164, %v4284
    %4461 = vst.msk [vmem:[%s3 + $0x30] sm:$0xff] %vm164, %v4289
    %4462 = vst.msk [vmem:[%s3 + $0x38] sm:$0xff] %vm164, %v4292
    %4463 = vst.msk [vmem:[%s3 + $0x40] sm:$0xff] %vm164, %v4297
    %4464 = vst.msk [vmem:[%s3 + $0x48] sm:$0xff] %vm164, %v4300
    %4465 = vst.msk [vmem:[%s3 + $0x50] sm:$0xff] %vm164, %v4305
    %4466 = vst.msk [vmem:[%s3 + $0x58] sm:$0xff] %vm164, %v4308
    %4467 = vst.msk [vmem:[%s3 + $0x60] sm:$0xff] %vm164, %v4313
    %4468 = vst.msk [vmem:[%s3 + $0x68] sm:$0xff] %vm164, %v4316
    %4469 = vst.msk [vmem:[%s3 + $0x70] sm:$0xff] %vm164, %v4321
    %4470 = vst.msk [vmem:[%s3 + $0x78] sm:$0xff] %vm164, %v4324
    %4471 = vst.msk [vmem:[%s3 + $0x80] sm:$0xff] %vm164, %v4329
    %4472 = vst.msk [vmem:[%s3 + $0x88] sm:$0xff] %vm164, %v4332
    %4473 = vst.msk [vmem:[%s3 + $0x90] sm:$0xff] %vm164, %v4337
    %4474 = vst.msk [vmem:[%s3 + $0x98] sm:$0xff] %vm164, %v4340
    %4475 = vst.msk [vmem:[%s3 + $0xa0] sm:$0xff] %vm164, %v4345
    %4476 = vst.msk [vmem:[%s3 + $0xa8] sm:$0xff] %vm164, %v4348
    %4477 = vst.msk [vmem:[%s3 + $0xb0] sm:$0xff] %vm164, %v4353
    %4478 = vst.msk [vmem:[%s3 + $0xb8] sm:$0xff] %vm164, %v4356
    %4479 = vst.msk [vmem:[%s3 + $0xc0] sm:$0xff] %vm164, %v4361
    %4480 = vst.msk [vmem:[%s3 + $0xc8] sm:$0xff] %vm164, %v4364
    %4481 = vst.msk [vmem:[%s3 + $0xd0] sm:$0xff] %vm164, %v4369
    %4482 = vst.msk [vmem:[%s3 + $0xd8] sm:$0xff] %vm164, %v4372
    %4483 = vst.msk [vmem:[%s3 + $0xe0] sm:$0xff] %vm164, %v4377
    %4484 = vst.msk [vmem:[%s3 + $0xe8] sm:$0xff] %vm164, %v4380
    %4485 = vst.msk [vmem:[%s3 + $0xf0] sm:$0xff] %vm164, %v4385
    %4486 = vst.msk [vmem:[%s3 + $0xf8] sm:$0xff] %vm164, %v4388
    %4487 = vst.msk [vmem:[%s3 + $0x100] sm:$0xff] %vm164, %v4393
    %4488 = vst.msk [vmem:[%s3 + $0x108] sm:$0xff] %vm164, %v4396
    %4489 = vst.msk [vmem:[%s3 + $0x110] sm:$0xff] %vm164, %v4401
    %4490 = vst.msk [vmem:[%s3 + $0x118] sm:$0xff] %vm164, %v4404
    %4491 = vst.msk [vmem:[%s3 + $0x120] sm:$0xff] %vm164, %v4409
    %4492 = vst.msk [vmem:[%s3 + $0x128] sm:$0xff] %vm164, %v4412
    %4493 = vst.msk [vmem:[%s3 + $0x130] sm:$0xff] %vm164, %v4417
    %4494 = vst.msk [vmem:[%s3 + $0x138] sm:$0xff] %vm164, %v4420
    %4495 = vst.msk [vmem:[%s3 + $0x140] sm:$0xff] %vm164, %v4425
    %4496 = vst.msk [vmem:[%s3 + $0x148] sm:$0xff] %vm164, %v4428
    %4497 = vst.msk [vmem:[%s3 + $0x150] sm:$0xff] %vm164, %v4433
    %4498 = vst.msk [vmem:[%s3 + $0x158] sm:$0xff] %vm164, %v4436
    %4499 = vst.msk [vmem:[%s3 + $0x160] sm:$0xff] %vm164, %v4441
    %4500 = vst.msk [vmem:[%s3 + $0x168] sm:$0xff] %vm164, %v4444
    %4501 = vst.msk [vmem:[%s3 + $0x170] sm:$0xff] %vm164, %v4449
    %4502 = vst.msk [vmem:[%s3 + $0x178] sm:$0xff] %vm164, %v4452
    // Predicated region
    $region18: #{relu_conv2d_1x3.1} parent=1 // pred_check
      _
    $region19: #{relu_conv2d_1x3.1} parent=1 // pred_check_branch
      %4504 = sbr.rel (0) target = $region21
    $region20: #{relu_conv2d_1x3.1} parent=1 // pred_region
      _
    $region21: #{relu_conv2d_1x3.1} parent=1 // pred_fallthru
      _
    // Predicated region
    $region22: #{relu_conv2d_1x3.1} parent=1 // pred_check
      _
    $region23: #{relu_conv2d_1x3.1} parent=1 // pred_check_branch
      %4506 = sbr.rel (0) target = $region25
    $region24: #{relu_conv2d_1x3.1} parent=1 // pred_region
      _
    $region25: #{relu_conv2d_1x3.1} parent=1 // pred_fallthru
      _
    %4507 = vsyncpa [#allocation4], 1

</llo_original>
